<compile_context>
chip_gen: v6e
topology: v6e:2x2x1
jax: 0.10.0
libtpu: 0.0.40
codegen_flags: <defaults>
</compile_context>

<pallas_src>
import functools

import jax
import jax.numpy as jnp
from jax.experimental import pallas as pl
from jax.experimental.pallas import tpu as pltpu

_FRAME_OFF = 128  # left/right margin in the scratch (>= max tap shift, lane-aligned)


# ---------------------------------------------------------------------------
# Fused RG kernel
# ---------------------------------------------------------------------------
def _rg_kernel(x_ref, mask_ref, w1s_ref, b1s_ref, w2s_ref, b2s_ref,
               caw1_ref, cab1_ref, caw2_ref, cab2_ref, wl_ref, bl_ref,
               o_ref, scr_ref, *, H, W):
    C = x_ref.shape[1]
    R = w1s_ref.shape[0]
    Wp = W + 2
    PF = (H + 2) * Wp
    OFF = _FRAME_OFF
    inv_hw = 1.0 / float(H * W)

    mask = mask_ref[...].astype(jnp.float32)               # (1, PF) interior mask

    def conv3x3(a, w_mat, b_col):
        """a: (C, PF) padded-flat frame with zero halo -> masked conv out (C, PF)."""
        scr_ref[:, OFF:OFF + PF] = a
        taps = []
        for dy in range(3):
            for dx in range(3):
                s = (dy - 1) * Wp + (dx - 1)
                taps.append(scr_ref[:, OFF + s:OFF + s + PF])   # shifted window read
        patches = jnp.concatenate(taps, axis=0)             # (9*C, PF): im2col, K=9C
        out = jnp.dot(w_mat, patches, preferred_element_type=jnp.float32)
        return (out + b_col) * mask                          # re-zero the halo

    # Halo + margins must be zero; margins are never written afterwards.
    scr_ref[...] = jnp.zeros_like(scr_ref)

    # Scatter the lane-dense (C, H*W) input into the interior of the padded frame.
    x2 = x_ref[0].astype(jnp.float32)
    for hr in range(H):
        dst = OFF + (hr + 1) * Wp + 1
        scr_ref[:, dst:dst + W] = x2[:, hr * W:(hr + 1) * W]
    x_frame = scr_ref[:, OFF:OFF + PF]                       # (C, PF), zero halo

    h = x_frame
    for r in range(R):                                       # RCAB chain (unrolled)
        t = conv3x3(h, w1s_ref[r].astype(jnp.float32), b1s_ref[r].astype(jnp.float32))
        t = jnp.maximum(t, 0.0)
        t = conv3x3(t, w2s_ref[r].astype(jnp.float32), b2s_ref[r].astype(jnp.float32))
        # Channel attention epilogue (halo is zero -> full-lane sum == interior sum).
        pooled = jnp.sum(t, axis=1, keepdims=True) * inv_hw                 # (C, 1)
        y = jnp.dot(caw1_ref[r].astype(jnp.float32), pooled,
                    preferred_element_type=jnp.float32) + cab1_ref[r].astype(jnp.float32)
        y = jnp.maximum(y, 0.0)                                             # (Cr, 1)
        z = jnp.dot(caw2_ref[r].astype(jnp.float32), y,
                    preferred_element_type=jnp.float32) + cab2_ref[r].astype(jnp.float32)
        s = jax.nn.sigmoid(z)                                               # (C, 1)
        h = h + t * s                                                       # RCAB residual

    t = conv3x3(h, wl_ref[...].astype(jnp.float32), bl_ref[...].astype(jnp.float32))
    y_out = x_frame + t                                                     # RG residual

    # Gather the interior back into the lane-dense (C, H*W) output block.
    for hr in range(H):
        src = (hr + 1) * Wp + 1
        o_ref[0, :, hr * W:(hr + 1) * W] = y_out[:, src:src + W].astype(o_ref.dtype)


# ---------------------------------------------------------------------------
# Wrapper
# ---------------------------------------------------------------------------
def _pack_conv3x3_weight(w):
    """(Cout, Cin, 3, 3) torch layout -> (Cout, 9*Cin), K ordered (ky, kx, cin)."""
    co, ci = w.shape[0], w.shape[1]
    return jnp.transpose(w, (0, 2, 3, 1)).reshape(co, 9 * ci)


def rg_forward(x, params):
    """x: (N, C, H, W) float32 (PyTorch NCHW layout)."""
    N, C, H, W = x.shape
    rcabs = params["rcabs"]
    R = len(rcabs)
    Cr = rcabs[0]["ca_w1"].shape[0]
    PF = (H + 2) * (W + 2)

    # Pack / stack weights once (tiny XLA ops on ~80 KB of weights).
    w1s = jnp.stack([_pack_conv3x3_weight(p["w1"]) for p in rcabs])       # (R, C, 9C)
    b1s = jnp.stack([p["b1"].reshape(C, 1) for p in rcabs])               # (R, C, 1)
    w2s = jnp.stack([_pack_conv3x3_weight(p["w2"]) for p in rcabs])
    b2s = jnp.stack([p["b2"].reshape(C, 1) for p in rcabs])
    caw1s = jnp.stack([p["ca_w1"].reshape(Cr, C) for p in rcabs])         # (R, Cr, C)
    cab1s = jnp.stack([p["ca_b1"].reshape(Cr, 1) for p in rcabs])
    caw2s = jnp.stack([p["ca_w2"].reshape(C, Cr) for p in rcabs])         # (R, C, Cr)
    cab2s = jnp.stack([p["ca_b2"].reshape(C, 1) for p in rcabs])
    wl = _pack_conv3x3_weight(params["w_last"])                           # (C, 9C)
    bl = params["b_last"].reshape(C, 1)

    # Interior mask of the padded-flat frame.
    idx = jnp.arange(PF)
    rr, cc = idx // (W + 2), idx % (W + 2)
    mask = (((rr >= 1) & (rr <= H) & (cc >= 1) & (cc <= W))
            .astype(x.dtype).reshape(1, PF))

    x2 = x.reshape(N, C, H * W)        # free: NCHW is already contiguous this way

    def full(shape):
        return pl.BlockSpec(shape, lambda n: (0,) * len(shape))

    out = pl.pallas_call(
        functools.partial(_rg_kernel, H=H, W=W),
        out_shape=jax.ShapeDtypeStruct((N, C, H * W), x.dtype),
        grid=(N,),
        in_specs=[
            pl.BlockSpec((1, C, H * W), lambda n: (n, 0, 0)),   # x (lane-dense)
            full((1, PF)),                                      # interior mask
            full((R, C, 9 * C)), full((R, C, 1)),               # conv1 w/b
            full((R, C, 9 * C)), full((R, C, 1)),               # conv2 w/b
            full((R, Cr, C)), full((R, Cr, 1)),                 # CA fc1 w/b
            full((R, C, Cr)), full((R, C, 1)),                  # CA fc2 w/b
            full((C, 9 * C)), full((C, 1)),                     # last conv w/b
        ],
        out_specs=pl.BlockSpec((1, C, H * W), lambda n: (n, 0, 0)),
        scratch_shapes=[pltpu.VMEM((C, 2 * _FRAME_OFF + PF), jnp.float32)],
        compiler_params=pltpu.CompilerParams(dimension_semantics=("parallel",)),
    )(x2, mask, w1s, b1s, w2s, b2s, caw1s, cab1s, caw2s, cab2s, wl, bl)
    return out.reshape(N, C, H, W)


# ---------------------------------------------------------------------------
# Parameters (torch-style layouts) and a pure-JAX reference
# ---------------------------------------------------------------------------
def init_rg_params(key, num_features, num_rcab, reduction, dtype=jnp.float32):
    c = num_features
    cr = max(1, num_features // reduction)
    scale = 0.1
    params = {"rcabs": []}
    for _ in range(num_rcab):
        key, *ks = jax.random.split(key, 9)
        params["rcabs"].append({
            "w1": scale * jax.random.normal(ks[0], (c, c, 3, 3), dtype),
            "b1": scale * jax.random.normal(ks[1], (c,), dtype),
            "w2": scale * jax.random.normal(ks[2], (c, c, 3, 3), dtype),
            "b2": scale * jax.random.normal(ks[3], (c,), dtype),
            "ca_w1": scale * jax.random.normal(ks[4], (cr, c, 1, 1), dtype),
            "ca_b1": scale * jax.random.normal(ks[5], (cr,), dtype),
            "ca_w2": scale * jax.random.normal(ks[6], (c, cr, 1, 1), dtype),
            "ca_b2": scale * jax.random.normal(ks[7], (c,), dtype),
        })
    key, k1, k2 = jax.random.split(key, 3)
    params["w_last"] = scale * jax.random.normal(k1, (c, c, 3, 3), dtype)
    params["b_last"] = scale * jax.random.normal(k2, (c,), dtype)
    return params


def _conv_ref(x, w, b, padding):
    out = jax.lax.conv_general_dilated(
        x, w, window_strides=(1, 1), padding=padding,
        dimension_numbers=("NCHW", "OIHW", "NCHW"),
        precision=jax.lax.Precision.HIGHEST)
    return out + b.reshape(1, -1, 1, 1)


def rg_reference(x, params):
    h = x
    for p in params["rcabs"]:
        t = jax.nn.relu(_conv_ref(h, p["w1"], p["b1"], ((1, 1), (1, 1))))
        t = _conv_ref(t, p["w2"], p["b2"], ((1, 1), (1, 1)))
        pooled = jnp.mean(t, axis=(2, 3), keepdims=True)
        y = jax.nn.relu(_conv_ref(pooled, p["ca_w1"], p["ca_b1"], "VALID"))
        s = jax.nn.sigmoid(_conv_ref(y, p["ca_w2"], p["ca_b2"], "VALID"))
        h = h + t * s
    t = _conv_ref(h, params["w_last"], params["b_last"], ((1, 1), (1, 1)))
    return x + t


if __name__ == "__main__":
    num_features, num_rcab, reduction = 16, 2, 4
    N, H, W = 2, 16, 16

    key = jax.random.PRNGKey(0)
    key, kx = jax.random.split(key)
    x = jax.random.normal(kx, (N, num_features, H, W), jnp.float32)   # NCHW like PyTorch
    params = init_rg_params(key, num_features, num_rcab, reduction)

    out = jax.jit(rg_forward)(x, params)
    jax.block_until_ready(out)
    assert out.shape == x.shape
    assert bool(jnp.all(jnp.isfinite(out)))

    # Numerical sanity check vs a pure-JAX NCHW reference (f32 HIGHEST-precision convs).
    # Loose tolerance only to absorb MXU f32 pass differences; layout bugs would be O(1).
    ref = rg_reference(x, params)
    max_err = float(jnp.max(jnp.abs(out - ref)))
    assert max_err < 5e-2, f"kernel/reference mismatch: max abs err = {max_err}"
    print("KERNEL_OK")
</pallas_src>

<mosaic_0001>
module attributes {stable_mosaic.version = 11 : i64} {
  func.func @_rg_kernel(%arg0: i32, %arg1: memref<1x16x256xf32, #tpu.memory_space<vmem>>, %arg2: memref<1x324xf32, #tpu.memory_space<vmem>>, %arg3: memref<2x16x144xf32, #tpu.memory_space<vmem>>, %arg4: memref<2x16x1xf32, #tpu.memory_space<vmem>>, %arg5: memref<2x16x144xf32, #tpu.memory_space<vmem>>, %arg6: memref<2x16x1xf32, #tpu.memory_space<vmem>>, %arg7: memref<2x4x16xf32, #tpu.memory_space<vmem>>, %arg8: memref<2x4x1xf32, #tpu.memory_space<vmem>>, %arg9: memref<2x16x4xf32, #tpu.memory_space<vmem>>, %arg10: memref<2x16x1xf32, #tpu.memory_space<vmem>>, %arg11: memref<16x144xf32, #tpu.memory_space<vmem>>, %arg12: memref<16x1xf32, #tpu.memory_space<vmem>>, %arg13: memref<1x16x256xf32, #tpu.memory_space<vmem>>, %arg14: memref<16x580xf32, #tpu.memory_space<vmem>>) attributes {dimension_semantics = [#tpu.dimension_semantics<parallel>], iteration_bounds = array<i64: 2>, scalar_prefetch = 0 : i64, scratch_operands = 1 : i64, tpu.core_type = #tpu.core_type<tc>, window_params = [{transform_indices = @transform_0, window_bounds = array<i64: 1, 16, 256>}, {pipeline_mode = #tpu.pipeline_mode<synchronous>, transform_indices = @transform_1, window_bounds = array<i64: 1, 324>}, {pipeline_mode = #tpu.pipeline_mode<synchronous>, transform_indices = @transform_2, window_bounds = array<i64: 2, 16, 144>}, {pipeline_mode = #tpu.pipeline_mode<synchronous>, transform_indices = @transform_3, window_bounds = array<i64: 2, 16, 1>}, {pipeline_mode = #tpu.pipeline_mode<synchronous>, transform_indices = @transform_4, window_bounds = array<i64: 2, 16, 144>}, {pipeline_mode = #tpu.pipeline_mode<synchronous>, transform_indices = @transform_5, window_bounds = array<i64: 2, 16, 1>}, {pipeline_mode = #tpu.pipeline_mode<synchronous>, transform_indices = @transform_6, window_bounds = array<i64: 2, 4, 16>}, {pipeline_mode = #tpu.pipeline_mode<synchronous>, transform_indices = @transform_7, window_bounds = array<i64: 2, 4, 1>}, {pipeline_mode = #tpu.pipeline_mode<synchronous>, transform_indices = @transform_8, window_bounds = array<i64: 2, 16, 4>}, {pipeline_mode = #tpu.pipeline_mode<synchronous>, transform_indices = @transform_9, window_bounds = array<i64: 2, 16, 1>}, {pipeline_mode = #tpu.pipeline_mode<synchronous>, transform_indices = @transform_10, window_bounds = array<i64: 16, 144>}, {pipeline_mode = #tpu.pipeline_mode<synchronous>, transform_indices = @transform_11, window_bounds = array<i64: 16, 1>}, {transform_indices = @transform_12, window_bounds = array<i64: 1, 16, 256>}]} {
    %c0 = arith.constant 0 : index
    %c0_0 = arith.constant 0 : index
    %0 = vector.load %arg2[%c0, %c0_0] : memref<1x324xf32, #tpu.memory_space<vmem>>, vector<1x324xf32>
    %cst = arith.constant 0.000000e+00 : f32
    %1 = vector.broadcast %cst : f32 to vector<16x580xf32>
    %c0_1 = arith.constant 0 : index
    %c0_2 = arith.constant 0 : index
    %2 = vector.load %arg14[%c0_1, %c0_2] : memref<16x580xf32, #tpu.memory_space<vmem>>, vector<16x580xf32>
    tpu.vector_store %arg14[%c0_1, %c0_2], %1 {strides = array<i32>} : memref<16x580xf32, #tpu.memory_space<vmem>>, vector<16x580xf32>,
    %c0_3 = arith.constant 0 : index
    %c0_4 = arith.constant 0 : index
    %c0_5 = arith.constant 0 : index
    %3 = vector.load %arg1[%c0_3, %c0_4, %c0_5] : memref<1x16x256xf32, #tpu.memory_space<vmem>>, vector<1x16x256xf32>
    %4 = vector.shape_cast %3 : vector<1x16x256xf32> to vector<16x256xf32>
    %5 = vector.extract_strided_slice %4 {offsets = [0, 0], sizes = [16, 16], strides = [1, 1]} : vector<16x256xf32> to vector<16x16xf32>
    %c0_6 = arith.constant 0 : index
    %c147 = arith.constant 147 : index
    %6 = vector.load %arg14[%c0_6, %c147] : memref<16x580xf32, #tpu.memory_space<vmem>>, vector<16x16xf32>
    tpu.vector_store %arg14[%c0_6, %c147], %5 {strides = array<i32>} : memref<16x580xf32, #tpu.memory_space<vmem>>, vector<16x16xf32>,
    %7 = vector.extract_strided_slice %4 {offsets = [0, 16], sizes = [16, 16], strides = [1, 1]} : vector<16x256xf32> to vector<16x16xf32>
    %c0_7 = arith.constant 0 : index
    %c165 = arith.constant 165 : index
    %8 = vector.load %arg14[%c0_7, %c165] : memref<16x580xf32, #tpu.memory_space<vmem>>, vector<16x16xf32>
    tpu.vector_store %arg14[%c0_7, %c165], %7 {strides = array<i32>} : memref<16x580xf32, #tpu.memory_space<vmem>>, vector<16x16xf32>,
    %9 = vector.extract_strided_slice %4 {offsets = [0, 32], sizes = [16, 16], strides = [1, 1]} : vector<16x256xf32> to vector<16x16xf32>
    %c0_8 = arith.constant 0 : index
    %c183 = arith.constant 183 : index
    %10 = vector.load %arg14[%c0_8, %c183] : memref<16x580xf32, #tpu.memory_space<vmem>>, vector<16x16xf32>
    tpu.vector_store %arg14[%c0_8, %c183], %9 {strides = array<i32>} : memref<16x580xf32, #tpu.memory_space<vmem>>, vector<16x16xf32>,
    %11 = vector.extract_strided_slice %4 {offsets = [0, 48], sizes = [16, 16], strides = [1, 1]} : vector<16x256xf32> to vector<16x16xf32>
    %c0_9 = arith.constant 0 : index
    %c201 = arith.constant 201 : index
    %12 = vector.load %arg14[%c0_9, %c201] : memref<16x580xf32, #tpu.memory_space<vmem>>, vector<16x16xf32>
    tpu.vector_store %arg14[%c0_9, %c201], %11 {strides = array<i32>} : memref<16x580xf32, #tpu.memory_space<vmem>>, vector<16x16xf32>,
    %13 = vector.extract_strided_slice %4 {offsets = [0, 64], sizes = [16, 16], strides = [1, 1]} : vector<16x256xf32> to vector<16x16xf32>
    %c0_10 = arith.constant 0 : index
    %c219 = arith.constant 219 : index
    %14 = vector.load %arg14[%c0_10, %c219] : memref<16x580xf32, #tpu.memory_space<vmem>>, vector<16x16xf32>
    tpu.vector_store %arg14[%c0_10, %c219], %13 {strides = array<i32>} : memref<16x580xf32, #tpu.memory_space<vmem>>, vector<16x16xf32>,
    %15 = vector.extract_strided_slice %4 {offsets = [0, 80], sizes = [16, 16], strides = [1, 1]} : vector<16x256xf32> to vector<16x16xf32>
    %c0_11 = arith.constant 0 : index
    %c237 = arith.constant 237 : index
    %16 = vector.load %arg14[%c0_11, %c237] : memref<16x580xf32, #tpu.memory_space<vmem>>, vector<16x16xf32>
    tpu.vector_store %arg14[%c0_11, %c237], %15 {strides = array<i32>} : memref<16x580xf32, #tpu.memory_space<vmem>>, vector<16x16xf32>,
    %17 = vector.extract_strided_slice %4 {offsets = [0, 96], sizes = [16, 16], strides = [1, 1]} : vector<16x256xf32> to vector<16x16xf32>
    %c0_12 = arith.constant 0 : index
    %c255 = arith.constant 255 : index
    %18 = vector.load %arg14[%c0_12, %c255] : memref<16x580xf32, #tpu.memory_space<vmem>>, vector<16x16xf32>
    tpu.vector_store %arg14[%c0_12, %c255], %17 {strides = array<i32>} : memref<16x580xf32, #tpu.memory_space<vmem>>, vector<16x16xf32>,
    %19 = vector.extract_strided_slice %4 {offsets = [0, 112], sizes = [16, 16], strides = [1, 1]} : vector<16x256xf32> to vector<16x16xf32>
    %c0_13 = arith.constant 0 : index
    %c273 = arith.constant 273 : index
    %20 = vector.load %arg14[%c0_13, %c273] : memref<16x580xf32, #tpu.memory_space<vmem>>, vector<16x16xf32>
    tpu.vector_store %arg14[%c0_13, %c273], %19 {strides = array<i32>} : memref<16x580xf32, #tpu.memory_space<vmem>>, vector<16x16xf32>,
    %21 = vector.extract_strided_slice %4 {offsets = [0, 128], sizes = [16, 16], strides = [1, 1]} : vector<16x256xf32> to vector<16x16xf32>
    %c0_14 = arith.constant 0 : index
    %c291 = arith.constant 291 : index
    %22 = vector.load %arg14[%c0_14, %c291] : memref<16x580xf32, #tpu.memory_space<vmem>>, vector<16x16xf32>
    tpu.vector_store %arg14[%c0_14, %c291], %21 {strides = array<i32>} : memref<16x580xf32, #tpu.memory_space<vmem>>, vector<16x16xf32>,
    %23 = vector.extract_strided_slice %4 {offsets = [0, 144], sizes = [16, 16], strides = [1, 1]} : vector<16x256xf32> to vector<16x16xf32>
    %c0_15 = arith.constant 0 : index
    %c309 = arith.constant 309 : index
    %24 = vector.load %arg14[%c0_15, %c309] : memref<16x580xf32, #tpu.memory_space<vmem>>, vector<16x16xf32>
    tpu.vector_store %arg14[%c0_15, %c309], %23 {strides = array<i32>} : memref<16x580xf32, #tpu.memory_space<vmem>>, vector<16x16xf32>,
    %25 = vector.extract_strided_slice %4 {offsets = [0, 160], sizes = [16, 16], strides = [1, 1]} : vector<16x256xf32> to vector<16x16xf32>
    %c0_16 = arith.constant 0 : index
    %c327 = arith.constant 327 : index
    %26 = vector.load %arg14[%c0_16, %c327] : memref<16x580xf32, #tpu.memory_space<vmem>>, vector<16x16xf32>
    tpu.vector_store %arg14[%c0_16, %c327], %25 {strides = array<i32>} : memref<16x580xf32, #tpu.memory_space<vmem>>, vector<16x16xf32>,
    %27 = vector.extract_strided_slice %4 {offsets = [0, 176], sizes = [16, 16], strides = [1, 1]} : vector<16x256xf32> to vector<16x16xf32>
    %c0_17 = arith.constant 0 : index
    %c345 = arith.constant 345 : index
    %28 = vector.load %arg14[%c0_17, %c345] : memref<16x580xf32, #tpu.memory_space<vmem>>, vector<16x16xf32>
    tpu.vector_store %arg14[%c0_17, %c345], %27 {strides = array<i32>} : memref<16x580xf32, #tpu.memory_space<vmem>>, vector<16x16xf32>,
    %29 = vector.extract_strided_slice %4 {offsets = [0, 192], sizes = [16, 16], strides = [1, 1]} : vector<16x256xf32> to vector<16x16xf32>
    %c0_18 = arith.constant 0 : index
    %c363 = arith.constant 363 : index
    %30 = vector.load %arg14[%c0_18, %c363] : memref<16x580xf32, #tpu.memory_space<vmem>>, vector<16x16xf32>
    tpu.vector_store %arg14[%c0_18, %c363], %29 {strides = array<i32>} : memref<16x580xf32, #tpu.memory_space<vmem>>, vector<16x16xf32>,
    %31 = vector.extract_strided_slice %4 {offsets = [0, 208], sizes = [16, 16], strides = [1, 1]} : vector<16x256xf32> to vector<16x16xf32>
    %c0_19 = arith.constant 0 : index
    %c381 = arith.constant 381 : index
    %32 = vector.load %arg14[%c0_19, %c381] : memref<16x580xf32, #tpu.memory_space<vmem>>, vector<16x16xf32>
    tpu.vector_store %arg14[%c0_19, %c381], %31 {strides = array<i32>} : memref<16x580xf32, #tpu.memory_space<vmem>>, vector<16x16xf32>,
    %33 = vector.extract_strided_slice %4 {offsets = [0, 224], sizes = [16, 16], strides = [1, 1]} : vector<16x256xf32> to vector<16x16xf32>
    %c0_20 = arith.constant 0 : index
    %c399 = arith.constant 399 : index
    %34 = vector.load %arg14[%c0_20, %c399] : memref<16x580xf32, #tpu.memory_space<vmem>>, vector<16x16xf32>
    tpu.vector_store %arg14[%c0_20, %c399], %33 {strides = array<i32>} : memref<16x580xf32, #tpu.memory_space<vmem>>, vector<16x16xf32>,
    %35 = vector.extract_strided_slice %4 {offsets = [0, 240], sizes = [16, 16], strides = [1, 1]} : vector<16x256xf32> to vector<16x16xf32>
    %c0_21 = arith.constant 0 : index
    %c417 = arith.constant 417 : index
    %36 = vector.load %arg14[%c0_21, %c417] : memref<16x580xf32, #tpu.memory_space<vmem>>, vector<16x16xf32>
    tpu.vector_store %arg14[%c0_21, %c417], %35 {strides = array<i32>} : memref<16x580xf32, #tpu.memory_space<vmem>>, vector<16x16xf32>,
    %c0_22 = arith.constant 0 : index
    %c128 = arith.constant 128 : index
    %37 = vector.load %arg14[%c0_22, %c128] : memref<16x580xf32, #tpu.memory_space<vmem>>, vector<16x324xf32>
    %c0_23 = arith.constant 0 : index
    %c0_24 = arith.constant 0 : index
    %c0_25 = arith.constant 0 : index
    %38 = vector.load %arg3[%c0_23, %c0_24, %c0_25] : memref<2x16x144xf32, #tpu.memory_space<vmem>>, vector<1x16x144xf32>
    %39 = vector.shape_cast %38 : vector<1x16x144xf32> to vector<16x144xf32>
    %c0_26 = arith.constant 0 : index
    %c0_27 = arith.constant 0 : index
    %c0_28 = arith.constant 0 : index
    %40 = vector.load %arg4[%c0_26, %c0_27, %c0_28] : memref<2x16x1xf32, #tpu.memory_space<vmem>>, vector<1x16x1xf32>
    %41 = vector.shape_cast %40 : vector<1x16x1xf32> to vector<16x1xf32>
    %c0_29 = arith.constant 0 : index
    %c128_30 = arith.constant 128 : index
    %42 = vector.load %arg14[%c0_29, %c128_30] : memref<16x580xf32, #tpu.memory_space<vmem>>, vector<16x324xf32>
    tpu.vector_store %arg14[%c0_29, %c128_30], %37 {strides = array<i32>} : memref<16x580xf32, #tpu.memory_space<vmem>>, vector<16x324xf32>,
    %c0_31 = arith.constant 0 : index
    %c109 = arith.constant 109 : index
    %43 = vector.load %arg14[%c0_31, %c109] : memref<16x580xf32, #tpu.memory_space<vmem>>, vector<16x324xf32>
    %c0_32 = arith.constant 0 : index
    %c110 = arith.constant 110 : index
    %44 = vector.load %arg14[%c0_32, %c110] : memref<16x580xf32, #tpu.memory_space<vmem>>, vector<16x324xf32>
    %c0_33 = arith.constant 0 : index
    %c111 = arith.constant 111 : index
    %45 = vector.load %arg14[%c0_33, %c111] : memref<16x580xf32, #tpu.memory_space<vmem>>, vector<16x324xf32>
    %c0_34 = arith.constant 0 : index
    %c127 = arith.constant 127 : index
    %46 = vector.load %arg14[%c0_34, %c127] : memref<16x580xf32, #tpu.memory_space<vmem>>, vector<16x324xf32>
    %c0_35 = arith.constant 0 : index
    %c128_36 = arith.constant 128 : index
    %47 = vector.load %arg14[%c0_35, %c128_36] : memref<16x580xf32, #tpu.memory_space<vmem>>, vector<16x324xf32>
    %c0_37 = arith.constant 0 : index
    %c129 = arith.constant 129 : index
    %48 = vector.load %arg14[%c0_37, %c129] : memref<16x580xf32, #tpu.memory_space<vmem>>, vector<16x324xf32>
    %c0_38 = arith.constant 0 : index
    %c145 = arith.constant 145 : index
    %49 = vector.load %arg14[%c0_38, %c145] : memref<16x580xf32, #tpu.memory_space<vmem>>, vector<16x324xf32>
    %c0_39 = arith.constant 0 : index
    %c146 = arith.constant 146 : index
    %50 = vector.load %arg14[%c0_39, %c146] : memref<16x580xf32, #tpu.memory_space<vmem>>, vector<16x324xf32>
    %c0_40 = arith.constant 0 : index
    %c147_41 = arith.constant 147 : index
    %51 = vector.load %arg14[%c0_40, %c147_41] : memref<16x580xf32, #tpu.memory_space<vmem>>, vector<16x324xf32>
    %52 = tpu.concatenate %43, %44, %45, %46, %47, %48, %49, %50, %51 in 0 : vector<16x324xf32>, vector<16x324xf32>, vector<16x324xf32>, vector<16x324xf32>, vector<16x324xf32>, vector<16x324xf32>, vector<16x324xf32>, vector<16x324xf32>, vector<16x324xf32> -> vector<144x324xf32>
    %cst_42 = arith.constant dense<0.000000e+00> : vector<16x324xf32>
    %53 = tpu.matmul %39, %52, %cst_42 {dimension_numbers = #tpu.dot_dimension_numbers<[1], [0], [0], [1], [0, 0, 1, 1], [], []>} : vector<16x144xf32>, vector<144x324xf32>, vector<16x324xf32> -> vector<16x324xf32>
    %54 = vector.broadcast %41 : vector<16x1xf32> to vector<16x324xf32>
    %55 = arith.addf %53, %54 : vector<16x324xf32>
    %56 = vector.broadcast %0 : vector<1x324xf32> to vector<16x324xf32>
    %57 = arith.mulf %55, %56 : vector<16x324xf32>
    %cst_43 = arith.constant 0.000000e+00 : f32
    %58 = vector.broadcast %cst_43 : f32 to vector<16x324xf32>
    %59 = arith.maximumf %57, %58 : vector<16x324xf32>
    %c0_44 = arith.constant 0 : index
    %c0_45 = arith.constant 0 : index
    %c0_46 = arith.constant 0 : index
    %60 = vector.load %arg5[%c0_44, %c0_45, %c0_46] : memref<2x16x144xf32, #tpu.memory_space<vmem>>, vector<1x16x144xf32>
    %61 = vector.shape_cast %60 : vector<1x16x144xf32> to vector<16x144xf32>
    %c0_47 = arith.constant 0 : index
    %c0_48 = arith.constant 0 : index
    %c0_49 = arith.constant 0 : index
    %62 = vector.load %arg6[%c0_47, %c0_48, %c0_49] : memref<2x16x1xf32, #tpu.memory_space<vmem>>, vector<1x16x1xf32>
    %63 = vector.shape_cast %62 : vector<1x16x1xf32> to vector<16x1xf32>
    %c0_50 = arith.constant 0 : index
    %c128_51 = arith.constant 128 : index
    %64 = vector.load %arg14[%c0_50, %c128_51] : memref<16x580xf32, #tpu.memory_space<vmem>>, vector<16x324xf32>
    tpu.vector_store %arg14[%c0_50, %c128_51], %59 {strides = array<i32>} : memref<16x580xf32, #tpu.memory_space<vmem>>, vector<16x324xf32>,
    %c0_52 = arith.constant 0 : index
    %c109_53 = arith.constant 109 : index
    %65 = vector.load %arg14[%c0_52, %c109_53] : memref<16x580xf32, #tpu.memory_space<vmem>>, vector<16x324xf32>
    %c0_54 = arith.constant 0 : index
    %c110_55 = arith.constant 110 : index
    %66 = vector.load %arg14[%c0_54, %c110_55] : memref<16x580xf32, #tpu.memory_space<vmem>>, vector<16x324xf32>
    %c0_56 = arith.constant 0 : index
    %c111_57 = arith.constant 111 : index
    %67 = vector.load %arg14[%c0_56, %c111_57] : memref<16x580xf32, #tpu.memory_space<vmem>>, vector<16x324xf32>
    %c0_58 = arith.constant 0 : index
    %c127_59 = arith.constant 127 : index
    %68 = vector.load %arg14[%c0_58, %c127_59] : memref<16x580xf32, #tpu.memory_space<vmem>>, vector<16x324xf32>
    %c0_60 = arith.constant 0 : index
    %c128_61 = arith.constant 128 : index
    %69 = vector.load %arg14[%c0_60, %c128_61] : memref<16x580xf32, #tpu.memory_space<vmem>>, vector<16x324xf32>
    %c0_62 = arith.constant 0 : index
    %c129_63 = arith.constant 129 : index
    %70 = vector.load %arg14[%c0_62, %c129_63] : memref<16x580xf32, #tpu.memory_space<vmem>>, vector<16x324xf32>
    %c0_64 = arith.constant 0 : index
    %c145_65 = arith.constant 145 : index
    %71 = vector.load %arg14[%c0_64, %c145_65] : memref<16x580xf32, #tpu.memory_space<vmem>>, vector<16x324xf32>
    %c0_66 = arith.constant 0 : index
    %c146_67 = arith.constant 146 : index
    %72 = vector.load %arg14[%c0_66, %c146_67] : memref<16x580xf32, #tpu.memory_space<vmem>>, vector<16x324xf32>
    %c0_68 = arith.constant 0 : index
    %c147_69 = arith.constant 147 : index
    %73 = vector.load %arg14[%c0_68, %c147_69] : memref<16x580xf32, #tpu.memory_space<vmem>>, vector<16x324xf32>
    %74 = tpu.concatenate %65, %66, %67, %68, %69, %70, %71, %72, %73 in 0 : vector<16x324xf32>, vector<16x324xf32>, vector<16x324xf32>, vector<16x324xf32>, vector<16x324xf32>, vector<16x324xf32>, vector<16x324xf32>, vector<16x324xf32>, vector<16x324xf32> -> vector<144x324xf32>
    %cst_70 = arith.constant dense<0.000000e+00> : vector<16x324xf32>
    %75 = tpu.matmul %61, %74, %cst_70 {dimension_numbers = #tpu.dot_dimension_numbers<[1], [0], [0], [1], [0, 0, 1, 1], [], []>} : vector<16x144xf32>, vector<144x324xf32>, vector<16x324xf32> -> vector<16x324xf32>
    %76 = vector.broadcast %63 : vector<16x1xf32> to vector<16x324xf32>
    %77 = arith.addf %75, %76 : vector<16x324xf32>
    %78 = vector.broadcast %0 : vector<1x324xf32> to vector<16x324xf32>
    %79 = arith.mulf %77, %78 : vector<16x324xf32>
    %cst_71 = arith.constant dense<0.000000e+00> : vector<16xf32>
    %80 = vector.multi_reduction <add>, %79, %cst_71 [1] : vector<16x324xf32> to vector<16xf32>
    %81 = vector.shape_cast %80 : vector<16xf32> to vector<16x1xf32>
    %cst_72 = arith.constant 3.906250e-03 : f32
    %82 = vector.broadcast %cst_72 : f32 to vector<16x1xf32>
    %83 = arith.mulf %81, %82 : vector<16x1xf32>
    %c0_73 = arith.constant 0 : index
    %c0_74 = arith.constant 0 : index
    %c0_75 = arith.constant 0 : index
    %84 = vector.load %arg7[%c0_73, %c0_74, %c0_75] : memref<2x4x16xf32, #tpu.memory_space<vmem>>, vector<1x4x16xf32>
    %85 = vector.shape_cast %84 : vector<1x4x16xf32> to vector<4x16xf32>
    %cst_76 = arith.constant dense<0.000000e+00> : vector<4x1xf32>
    %86 = tpu.matmul %85, %83, %cst_76 {dimension_numbers = #tpu.dot_dimension_numbers<[1], [0], [0], [1], [0, 0, 1, 1], [], []>} : vector<4x16xf32>, vector<16x1xf32>, vector<4x1xf32> -> vector<4x1xf32>
    %c0_77 = arith.constant 0 : index
    %c0_78 = arith.constant 0 : index
    %c0_79 = arith.constant 0 : index
    %87 = vector.load %arg8[%c0_77, %c0_78, %c0_79] : memref<2x4x1xf32, #tpu.memory_space<vmem>>, vector<1x4x1xf32>
    %88 = vector.shape_cast %87 : vector<1x4x1xf32> to vector<4x1xf32>
    %89 = arith.addf %86, %88 : vector<4x1xf32>
    %cst_80 = arith.constant 0.000000e+00 : f32
    %90 = vector.broadcast %cst_80 : f32 to vector<4x1xf32>
    %91 = arith.maximumf %89, %90 : vector<4x1xf32>
    %c0_81 = arith.constant 0 : index
    %c0_82 = arith.constant 0 : index
    %c0_83 = arith.constant 0 : index
    %92 = vector.load %arg9[%c0_81, %c0_82, %c0_83] : memref<2x16x4xf32, #tpu.memory_space<vmem>>, vector<1x16x4xf32>
    %93 = vector.shape_cast %92 : vector<1x16x4xf32> to vector<16x4xf32>
    %cst_84 = arith.constant dense<0.000000e+00> : vector<16x1xf32>
    %94 = tpu.matmul %93, %91, %cst_84 {dimension_numbers = #tpu.dot_dimension_numbers<[1], [0], [0], [1], [0, 0, 1, 1], [], []>} : vector<16x4xf32>, vector<4x1xf32>, vector<16x1xf32> -> vector<16x1xf32>
    %c0_85 = arith.constant 0 : index
    %c0_86 = arith.constant 0 : index
    %c0_87 = arith.constant 0 : index
    %95 = vector.load %arg10[%c0_85, %c0_86, %c0_87] : memref<2x16x1xf32, #tpu.memory_space<vmem>>, vector<1x16x1xf32>
    %96 = vector.shape_cast %95 : vector<1x16x1xf32> to vector<16x1xf32>
    %97 = arith.addf %94, %96 : vector<16x1xf32>
    %98 = arith.negf %97 : vector<16x1xf32>
    %99 = math.exp %98 : vector<16x1xf32>
    %cst_88 = arith.constant 1.000000e+00 : f32
    %100 = vector.broadcast %cst_88 : f32 to vector<16x1xf32>
    %101 = arith.addf %100, %99 : vector<16x1xf32>
    %102 = arith.divf %100, %101 : vector<16x1xf32>
    %103 = vector.broadcast %102 : vector<16x1xf32> to vector<16x324xf32>
    %104 = arith.mulf %79, %103 : vector<16x324xf32>
    %105 = arith.addf %37, %104 : vector<16x324xf32>
    %c1 = arith.constant 1 : index
    %c0_89 = arith.constant 0 : index
    %c0_90 = arith.constant 0 : index
    %106 = vector.load %arg3[%c1, %c0_89, %c0_90] : memref<2x16x144xf32, #tpu.memory_space<vmem>>, vector<1x16x144xf32>
    %107 = vector.shape_cast %106 : vector<1x16x144xf32> to vector<16x144xf32>
    %c1_91 = arith.constant 1 : index
    %c0_92 = arith.constant 0 : index
    %c0_93 = arith.constant 0 : index
    %108 = vector.load %arg4[%c1_91, %c0_92, %c0_93] : memref<2x16x1xf32, #tpu.memory_space<vmem>>, vector<1x16x1xf32>
    %109 = vector.shape_cast %108 : vector<1x16x1xf32> to vector<16x1xf32>
    %c0_94 = arith.constant 0 : index
    %c128_95 = arith.constant 128 : index
    %110 = vector.load %arg14[%c0_94, %c128_95] : memref<16x580xf32, #tpu.memory_space<vmem>>, vector<16x324xf32>
    tpu.vector_store %arg14[%c0_94, %c128_95], %105 {strides = array<i32>} : memref<16x580xf32, #tpu.memory_space<vmem>>, vector<16x324xf32>,
    %c0_96 = arith.constant 0 : index
    %c109_97 = arith.constant 109 : index
    %111 = vector.load %arg14[%c0_96, %c109_97] : memref<16x580xf32, #tpu.memory_space<vmem>>, vector<16x324xf32>
    %c0_98 = arith.constant 0 : index
    %c110_99 = arith.constant 110 : index
    %112 = vector.load %arg14[%c0_98, %c110_99] : memref<16x580xf32, #tpu.memory_space<vmem>>, vector<16x324xf32>
    %c0_100 = arith.constant 0 : index
    %c111_101 = arith.constant 111 : index
    %113 = vector.load %arg14[%c0_100, %c111_101] : memref<16x580xf32, #tpu.memory_space<vmem>>, vector<16x324xf32>
    %c0_102 = arith.constant 0 : index
    %c127_103 = arith.constant 127 : index
    %114 = vector.load %arg14[%c0_102, %c127_103] : memref<16x580xf32, #tpu.memory_space<vmem>>, vector<16x324xf32>
    %c0_104 = arith.constant 0 : index
    %c128_105 = arith.constant 128 : index
    %115 = vector.load %arg14[%c0_104, %c128_105] : memref<16x580xf32, #tpu.memory_space<vmem>>, vector<16x324xf32>
    %c0_106 = arith.constant 0 : index
    %c129_107 = arith.constant 129 : index
    %116 = vector.load %arg14[%c0_106, %c129_107] : memref<16x580xf32, #tpu.memory_space<vmem>>, vector<16x324xf32>
    %c0_108 = arith.constant 0 : index
    %c145_109 = arith.constant 145 : index
    %117 = vector.load %arg14[%c0_108, %c145_109] : memref<16x580xf32, #tpu.memory_space<vmem>>, vector<16x324xf32>
    %c0_110 = arith.constant 0 : index
    %c146_111 = arith.constant 146 : index
    %118 = vector.load %arg14[%c0_110, %c146_111] : memref<16x580xf32, #tpu.memory_space<vmem>>, vector<16x324xf32>
    %c0_112 = arith.constant 0 : index
    %c147_113 = arith.constant 147 : index
    %119 = vector.load %arg14[%c0_112, %c147_113] : memref<16x580xf32, #tpu.memory_space<vmem>>, vector<16x324xf32>
    %120 = tpu.concatenate %111, %112, %113, %114, %115, %116, %117, %118, %119 in 0 : vector<16x324xf32>, vector<16x324xf32>, vector<16x324xf32>, vector<16x324xf32>, vector<16x324xf32>, vector<16x324xf32>, vector<16x324xf32>, vector<16x324xf32>, vector<16x324xf32> -> vector<144x324xf32>
    %cst_114 = arith.constant dense<0.000000e+00> : vector<16x324xf32>
    %121 = tpu.matmul %107, %120, %cst_114 {dimension_numbers = #tpu.dot_dimension_numbers<[1], [0], [0], [1], [0, 0, 1, 1], [], []>} : vector<16x144xf32>, vector<144x324xf32>, vector<16x324xf32> -> vector<16x324xf32>
    %122 = vector.broadcast %109 : vector<16x1xf32> to vector<16x324xf32>
    %123 = arith.addf %121, %122 : vector<16x324xf32>
    %124 = vector.broadcast %0 : vector<1x324xf32> to vector<16x324xf32>
    %125 = arith.mulf %123, %124 : vector<16x324xf32>
    %cst_115 = arith.constant 0.000000e+00 : f32
    %126 = vector.broadcast %cst_115 : f32 to vector<16x324xf32>
    %127 = arith.maximumf %125, %126 : vector<16x324xf32>
    %c1_116 = arith.constant 1 : index
    %c0_117 = arith.constant 0 : index
    %c0_118 = arith.constant 0 : index
    %128 = vector.load %arg5[%c1_116, %c0_117, %c0_118] : memref<2x16x144xf32, #tpu.memory_space<vmem>>, vector<1x16x144xf32>
    %129 = vector.shape_cast %128 : vector<1x16x144xf32> to vector<16x144xf32>
    %c1_119 = arith.constant 1 : index
    %c0_120 = arith.constant 0 : index
    %c0_121 = arith.constant 0 : index
    %130 = vector.load %arg6[%c1_119, %c0_120, %c0_121] : memref<2x16x1xf32, #tpu.memory_space<vmem>>, vector<1x16x1xf32>
    %131 = vector.shape_cast %130 : vector<1x16x1xf32> to vector<16x1xf32>
    %c0_122 = arith.constant 0 : index
    %c128_123 = arith.constant 128 : index
    %132 = vector.load %arg14[%c0_122, %c128_123] : memref<16x580xf32, #tpu.memory_space<vmem>>, vector<16x324xf32>
    tpu.vector_store %arg14[%c0_122, %c128_123], %127 {strides = array<i32>} : memref<16x580xf32, #tpu.memory_space<vmem>>, vector<16x324xf32>,
    %c0_124 = arith.constant 0 : index
    %c109_125 = arith.constant 109 : index
    %133 = vector.load %arg14[%c0_124, %c109_125] : memref<16x580xf32, #tpu.memory_space<vmem>>, vector<16x324xf32>
    %c0_126 = arith.constant 0 : index
    %c110_127 = arith.constant 110 : index
    %134 = vector.load %arg14[%c0_126, %c110_127] : memref<16x580xf32, #tpu.memory_space<vmem>>, vector<16x324xf32>
    %c0_128 = arith.constant 0 : index
    %c111_129 = arith.constant 111 : index
    %135 = vector.load %arg14[%c0_128, %c111_129] : memref<16x580xf32, #tpu.memory_space<vmem>>, vector<16x324xf32>
    %c0_130 = arith.constant 0 : index
    %c127_131 = arith.constant 127 : index
    %136 = vector.load %arg14[%c0_130, %c127_131] : memref<16x580xf32, #tpu.memory_space<vmem>>, vector<16x324xf32>
    %c0_132 = arith.constant 0 : index
    %c128_133 = arith.constant 128 : index
    %137 = vector.load %arg14[%c0_132, %c128_133] : memref<16x580xf32, #tpu.memory_space<vmem>>, vector<16x324xf32>
    %c0_134 = arith.constant 0 : index
    %c129_135 = arith.constant 129 : index
    %138 = vector.load %arg14[%c0_134, %c129_135] : memref<16x580xf32, #tpu.memory_space<vmem>>, vector<16x324xf32>
    %c0_136 = arith.constant 0 : index
    %c145_137 = arith.constant 145 : index
    %139 = vector.load %arg14[%c0_136, %c145_137] : memref<16x580xf32, #tpu.memory_space<vmem>>, vector<16x324xf32>
    %c0_138 = arith.constant 0 : index
    %c146_139 = arith.constant 146 : index
    %140 = vector.load %arg14[%c0_138, %c146_139] : memref<16x580xf32, #tpu.memory_space<vmem>>, vector<16x324xf32>
    %c0_140 = arith.constant 0 : index
    %c147_141 = arith.constant 147 : index
    %141 = vector.load %arg14[%c0_140, %c147_141] : memref<16x580xf32, #tpu.memory_space<vmem>>, vector<16x324xf32>
    %142 = tpu.concatenate %133, %134, %135, %136, %137, %138, %139, %140, %141 in 0 : vector<16x324xf32>, vector<16x324xf32>, vector<16x324xf32>, vector<16x324xf32>, vector<16x324xf32>, vector<16x324xf32>, vector<16x324xf32>, vector<16x324xf32>, vector<16x324xf32> -> vector<144x324xf32>
    %cst_142 = arith.constant dense<0.000000e+00> : vector<16x324xf32>
    %143 = tpu.matmul %129, %142, %cst_142 {dimension_numbers = #tpu.dot_dimension_numbers<[1], [0], [0], [1], [0, 0, 1, 1], [], []>} : vector<16x144xf32>, vector<144x324xf32>, vector<16x324xf32> -> vector<16x324xf32>
    %144 = vector.broadcast %131 : vector<16x1xf32> to vector<16x324xf32>
    %145 = arith.addf %143, %144 : vector<16x324xf32>
    %146 = vector.broadcast %0 : vector<1x324xf32> to vector<16x324xf32>
    %147 = arith.mulf %145, %146 : vector<16x324xf32>
    %cst_143 = arith.constant dense<0.000000e+00> : vector<16xf32>
    %148 = vector.multi_reduction <add>, %147, %cst_143 [1] : vector<16x324xf32> to vector<16xf32>
    %149 = vector.shape_cast %148 : vector<16xf32> to vector<16x1xf32>
    %cst_144 = arith.constant 3.906250e-03 : f32
    %150 = vector.broadcast %cst_144 : f32 to vector<16x1xf32>
    %151 = arith.mulf %149, %150 : vector<16x1xf32>
    %c1_145 = arith.constant 1 : index
    %c0_146 = arith.constant 0 : index
    %c0_147 = arith.constant 0 : index
    %152 = vector.load %arg7[%c1_145, %c0_146, %c0_147] : memref<2x4x16xf32, #tpu.memory_space<vmem>>, vector<1x4x16xf32>
    %153 = vector.shape_cast %152 : vector<1x4x16xf32> to vector<4x16xf32>
    %cst_148 = arith.constant dense<0.000000e+00> : vector<4x1xf32>
    %154 = tpu.matmul %153, %151, %cst_148 {dimension_numbers = #tpu.dot_dimension_numbers<[1], [0], [0], [1], [0, 0, 1, 1], [], []>} : vector<4x16xf32>, vector<16x1xf32>, vector<4x1xf32> -> vector<4x1xf32>
    %c1_149 = arith.constant 1 : index
    %c0_150 = arith.constant 0 : index
    %c0_151 = arith.constant 0 : index
    %155 = vector.load %arg8[%c1_149, %c0_150, %c0_151] : memref<2x4x1xf32, #tpu.memory_space<vmem>>, vector<1x4x1xf32>
    %156 = vector.shape_cast %155 : vector<1x4x1xf32> to vector<4x1xf32>
    %157 = arith.addf %154, %156 : vector<4x1xf32>
    %cst_152 = arith.constant 0.000000e+00 : f32
    %158 = vector.broadcast %cst_152 : f32 to vector<4x1xf32>
    %159 = arith.maximumf %157, %158 : vector<4x1xf32>
    %c1_153 = arith.constant 1 : index
    %c0_154 = arith.constant 0 : index
    %c0_155 = arith.constant 0 : index
    %160 = vector.load %arg9[%c1_153, %c0_154, %c0_155] : memref<2x16x4xf32, #tpu.memory_space<vmem>>, vector<1x16x4xf32>
    %161 = vector.shape_cast %160 : vector<1x16x4xf32> to vector<16x4xf32>
    %cst_156 = arith.constant dense<0.000000e+00> : vector<16x1xf32>
    %162 = tpu.matmul %161, %159, %cst_156 {dimension_numbers = #tpu.dot_dimension_numbers<[1], [0], [0], [1], [0, 0, 1, 1], [], []>} : vector<16x4xf32>, vector<4x1xf32>, vector<16x1xf32> -> vector<16x1xf32>
    %c1_157 = arith.constant 1 : index
    %c0_158 = arith.constant 0 : index
    %c0_159 = arith.constant 0 : index
    %163 = vector.load %arg10[%c1_157, %c0_158, %c0_159] : memref<2x16x1xf32, #tpu.memory_space<vmem>>, vector<1x16x1xf32>
    %164 = vector.shape_cast %163 : vector<1x16x1xf32> to vector<16x1xf32>
    %165 = arith.addf %162, %164 : vector<16x1xf32>
    %166 = arith.negf %165 : vector<16x1xf32>
    %167 = math.exp %166 : vector<16x1xf32>
    %cst_160 = arith.constant 1.000000e+00 : f32
    %168 = vector.broadcast %cst_160 : f32 to vector<16x1xf32>
    %169 = arith.addf %168, %167 : vector<16x1xf32>
    %170 = arith.divf %168, %169 : vector<16x1xf32>
    %171 = vector.broadcast %170 : vector<16x1xf32> to vector<16x324xf32>
    %172 = arith.mulf %147, %171 : vector<16x324xf32>
    %173 = arith.addf %105, %172 : vector<16x324xf32>
    %c0_161 = arith.constant 0 : index
    %c0_162 = arith.constant 0 : index
    %174 = vector.load %arg11[%c0_161, %c0_162] : memref<16x144xf32, #tpu.memory_space<vmem>>, vector<16x144xf32>
    %c0_163 = arith.constant 0 : index
    %c0_164 = arith.constant 0 : index
    %175 = vector.load %arg12[%c0_163, %c0_164] : memref<16x1xf32, #tpu.memory_space<vmem>>, vector<16x1xf32>
    %c0_165 = arith.constant 0 : index
    %c128_166 = arith.constant 128 : index
    %176 = vector.load %arg14[%c0_165, %c128_166] : memref<16x580xf32, #tpu.memory_space<vmem>>, vector<16x324xf32>
    tpu.vector_store %arg14[%c0_165, %c128_166], %173 {strides = array<i32>} : memref<16x580xf32, #tpu.memory_space<vmem>>, vector<16x324xf32>,
    %c0_167 = arith.constant 0 : index
    %c109_168 = arith.constant 109 : index
    %177 = vector.load %arg14[%c0_167, %c109_168] : memref<16x580xf32, #tpu.memory_space<vmem>>, vector<16x324xf32>
    %c0_169 = arith.constant 0 : index
    %c110_170 = arith.constant 110 : index
    %178 = vector.load %arg14[%c0_169, %c110_170] : memref<16x580xf32, #tpu.memory_space<vmem>>, vector<16x324xf32>
    %c0_171 = arith.constant 0 : index
    %c111_172 = arith.constant 111 : index
    %179 = vector.load %arg14[%c0_171, %c111_172] : memref<16x580xf32, #tpu.memory_space<vmem>>, vector<16x324xf32>
    %c0_173 = arith.constant 0 : index
    %c127_174 = arith.constant 127 : index
    %180 = vector.load %arg14[%c0_173, %c127_174] : memref<16x580xf32, #tpu.memory_space<vmem>>, vector<16x324xf32>
    %c0_175 = arith.constant 0 : index
    %c128_176 = arith.constant 128 : index
    %181 = vector.load %arg14[%c0_175, %c128_176] : memref<16x580xf32, #tpu.memory_space<vmem>>, vector<16x324xf32>
    %c0_177 = arith.constant 0 : index
    %c129_178 = arith.constant 129 : index
    %182 = vector.load %arg14[%c0_177, %c129_178] : memref<16x580xf32, #tpu.memory_space<vmem>>, vector<16x324xf32>
    %c0_179 = arith.constant 0 : index
    %c145_180 = arith.constant 145 : index
    %183 = vector.load %arg14[%c0_179, %c145_180] : memref<16x580xf32, #tpu.memory_space<vmem>>, vector<16x324xf32>
    %c0_181 = arith.constant 0 : index
    %c146_182 = arith.constant 146 : index
    %184 = vector.load %arg14[%c0_181, %c146_182] : memref<16x580xf32, #tpu.memory_space<vmem>>, vector<16x324xf32>
    %c0_183 = arith.constant 0 : index
    %c147_184 = arith.constant 147 : index
    %185 = vector.load %arg14[%c0_183, %c147_184] : memref<16x580xf32, #tpu.memory_space<vmem>>, vector<16x324xf32>
    %186 = tpu.concatenate %177, %178, %179, %180, %181, %182, %183, %184, %185 in 0 : vector<16x324xf32>, vector<16x324xf32>, vector<16x324xf32>, vector<16x324xf32>, vector<16x324xf32>, vector<16x324xf32>, vector<16x324xf32>, vector<16x324xf32>, vector<16x324xf32> -> vector<144x324xf32>
    %cst_185 = arith.constant dense<0.000000e+00> : vector<16x324xf32>
    %187 = tpu.matmul %174, %186, %cst_185 {dimension_numbers = #tpu.dot_dimension_numbers<[1], [0], [0], [1], [0, 0, 1, 1], [], []>} : vector<16x144xf32>, vector<144x324xf32>, vector<16x324xf32> -> vector<16x324xf32>
    %188 = vector.broadcast %175 : vector<16x1xf32> to vector<16x324xf32>
    %189 = arith.addf %187, %188 : vector<16x324xf32>
    %190 = vector.broadcast %0 : vector<1x324xf32> to vector<16x324xf32>
    %191 = arith.mulf %189, %190 : vector<16x324xf32>
    %192 = arith.addf %37, %191 : vector<16x324xf32>
    %193 = vector.extract_strided_slice %192 {offsets = [0, 19], sizes = [16, 16], strides = [1, 1]} : vector<16x324xf32> to vector<16x16xf32>
    %c0_186 = arith.constant 0 : index
    %c0_187 = arith.constant 0 : index
    %c0_188 = arith.constant 0 : index
    %194 = vector.load %arg13[%c0_186, %c0_187, %c0_188] : memref<1x16x256xf32, #tpu.memory_space<vmem>>, vector<1x16x16xf32>
    %195 = vector.shape_cast %194 : vector<1x16x16xf32> to vector<16x16xf32>
    %196 = vector.shape_cast %193 : vector<16x16xf32> to vector<1x16x16xf32>
    tpu.vector_store %arg13[%c0_186, %c0_187, %c0_188], %196 {strides = array<i32>} : memref<1x16x256xf32, #tpu.memory_space<vmem>>, vector<1x16x16xf32>,
    %197 = vector.extract_strided_slice %192 {offsets = [0, 37], sizes = [16, 16], strides = [1, 1]} : vector<16x324xf32> to vector<16x16xf32>
    %c0_189 = arith.constant 0 : index
    %c0_190 = arith.constant 0 : index
    %c16 = arith.constant 16 : index
    %198 = vector.load %arg13[%c0_189, %c0_190, %c16] : memref<1x16x256xf32, #tpu.memory_space<vmem>>, vector<1x16x16xf32>
    %199 = vector.shape_cast %198 : vector<1x16x16xf32> to vector<16x16xf32>
    %200 = vector.shape_cast %197 : vector<16x16xf32> to vector<1x16x16xf32>
    tpu.vector_store %arg13[%c0_189, %c0_190, %c16], %200 {strides = array<i32>} : memref<1x16x256xf32, #tpu.memory_space<vmem>>, vector<1x16x16xf32>,
    %201 = vector.extract_strided_slice %192 {offsets = [0, 55], sizes = [16, 16], strides = [1, 1]} : vector<16x324xf32> to vector<16x16xf32>
    %c0_191 = arith.constant 0 : index
    %c0_192 = arith.constant 0 : index
    %c32 = arith.constant 32 : index
    %202 = vector.load %arg13[%c0_191, %c0_192, %c32] : memref<1x16x256xf32, #tpu.memory_space<vmem>>, vector<1x16x16xf32>
    %203 = vector.shape_cast %202 : vector<1x16x16xf32> to vector<16x16xf32>
    %204 = vector.shape_cast %201 : vector<16x16xf32> to vector<1x16x16xf32>
    tpu.vector_store %arg13[%c0_191, %c0_192, %c32], %204 {strides = array<i32>} : memref<1x16x256xf32, #tpu.memory_space<vmem>>, vector<1x16x16xf32>,
    %205 = vector.extract_strided_slice %192 {offsets = [0, 73], sizes = [16, 16], strides = [1, 1]} : vector<16x324xf32> to vector<16x16xf32>
    %c0_193 = arith.constant 0 : index
    %c0_194 = arith.constant 0 : index
    %c48 = arith.constant 48 : index
    %206 = vector.load %arg13[%c0_193, %c0_194, %c48] : memref<1x16x256xf32, #tpu.memory_space<vmem>>, vector<1x16x16xf32>
    %207 = vector.shape_cast %206 : vector<1x16x16xf32> to vector<16x16xf32>
    %208 = vector.shape_cast %205 : vector<16x16xf32> to vector<1x16x16xf32>
    tpu.vector_store %arg13[%c0_193, %c0_194, %c48], %208 {strides = array<i32>} : memref<1x16x256xf32, #tpu.memory_space<vmem>>, vector<1x16x16xf32>,
    %209 = vector.extract_strided_slice %192 {offsets = [0, 91], sizes = [16, 16], strides = [1, 1]} : vector<16x324xf32> to vector<16x16xf32>
    %c0_195 = arith.constant 0 : index
    %c0_196 = arith.constant 0 : index
    %c64 = arith.constant 64 : index
    %210 = vector.load %arg13[%c0_195, %c0_196, %c64] : memref<1x16x256xf32, #tpu.memory_space<vmem>>, vector<1x16x16xf32>
    %211 = vector.shape_cast %210 : vector<1x16x16xf32> to vector<16x16xf32>
    %212 = vector.shape_cast %209 : vector<16x16xf32> to vector<1x16x16xf32>
    tpu.vector_store %arg13[%c0_195, %c0_196, %c64], %212 {strides = array<i32>} : memref<1x16x256xf32, #tpu.memory_space<vmem>>, vector<1x16x16xf32>,
    %213 = vector.extract_strided_slice %192 {offsets = [0, 109], sizes = [16, 16], strides = [1, 1]} : vector<16x324xf32> to vector<16x16xf32>
    %c0_197 = arith.constant 0 : index
    %c0_198 = arith.constant 0 : index
    %c80 = arith.constant 80 : index
    %214 = vector.load %arg13[%c0_197, %c0_198, %c80] : memref<1x16x256xf32, #tpu.memory_space<vmem>>, vector<1x16x16xf32>
    %215 = vector.shape_cast %214 : vector<1x16x16xf32> to vector<16x16xf32>
    %216 = vector.shape_cast %213 : vector<16x16xf32> to vector<1x16x16xf32>
    tpu.vector_store %arg13[%c0_197, %c0_198, %c80], %216 {strides = array<i32>} : memref<1x16x256xf32, #tpu.memory_space<vmem>>, vector<1x16x16xf32>,
    %217 = vector.extract_strided_slice %192 {offsets = [0, 127], sizes = [16, 16], strides = [1, 1]} : vector<16x324xf32> to vector<16x16xf32>
    %c0_199 = arith.constant 0 : index
    %c0_200 = arith.constant 0 : index
    %c96 = arith.constant 96 : index
    %218 = vector.load %arg13[%c0_199, %c0_200, %c96] : memref<1x16x256xf32, #tpu.memory_space<vmem>>, vector<1x16x16xf32>
    %219 = vector.shape_cast %218 : vector<1x16x16xf32> to vector<16x16xf32>
    %220 = vector.shape_cast %217 : vector<16x16xf32> to vector<1x16x16xf32>
    tpu.vector_store %arg13[%c0_199, %c0_200, %c96], %220 {strides = array<i32>} : memref<1x16x256xf32, #tpu.memory_space<vmem>>, vector<1x16x16xf32>,
    %221 = vector.extract_strided_slice %192 {offsets = [0, 145], sizes = [16, 16], strides = [1, 1]} : vector<16x324xf32> to vector<16x16xf32>
    %c0_201 = arith.constant 0 : index
    %c0_202 = arith.constant 0 : index
    %c112 = arith.constant 112 : index
    %222 = vector.load %arg13[%c0_201, %c0_202, %c112] : memref<1x16x256xf32, #tpu.memory_space<vmem>>, vector<1x16x16xf32>
    %223 = vector.shape_cast %222 : vector<1x16x16xf32> to vector<16x16xf32>
    %224 = vector.shape_cast %221 : vector<16x16xf32> to vector<1x16x16xf32>
    tpu.vector_store %arg13[%c0_201, %c0_202, %c112], %224 {strides = array<i32>} : memref<1x16x256xf32, #tpu.memory_space<vmem>>, vector<1x16x16xf32>,
    %225 = vector.extract_strided_slice %192 {offsets = [0, 163], sizes = [16, 16], strides = [1, 1]} : vector<16x324xf32> to vector<16x16xf32>
    %c0_203 = arith.constant 0 : index
    %c0_204 = arith.constant 0 : index
    %c128_205 = arith.constant 128 : index
    %226 = vector.load %arg13[%c0_203, %c0_204, %c128_205] : memref<1x16x256xf32, #tpu.memory_space<vmem>>, vector<1x16x16xf32>
    %227 = vector.shape_cast %226 : vector<1x16x16xf32> to vector<16x16xf32>
    %228 = vector.shape_cast %225 : vector<16x16xf32> to vector<1x16x16xf32>
    tpu.vector_store %arg13[%c0_203, %c0_204, %c128_205], %228 {strides = array<i32>} : memref<1x16x256xf32, #tpu.memory_space<vmem>>, vector<1x16x16xf32>,
    %229 = vector.extract_strided_slice %192 {offsets = [0, 181], sizes = [16, 16], strides = [1, 1]} : vector<16x324xf32> to vector<16x16xf32>
    %c0_206 = arith.constant 0 : index
    %c0_207 = arith.constant 0 : index
    %c144 = arith.constant 144 : index
    %230 = vector.load %arg13[%c0_206, %c0_207, %c144] : memref<1x16x256xf32, #tpu.memory_space<vmem>>, vector<1x16x16xf32>
    %231 = vector.shape_cast %230 : vector<1x16x16xf32> to vector<16x16xf32>
    %232 = vector.shape_cast %229 : vector<16x16xf32> to vector<1x16x16xf32>
    tpu.vector_store %arg13[%c0_206, %c0_207, %c144], %232 {strides = array<i32>} : memref<1x16x256xf32, #tpu.memory_space<vmem>>, vector<1x16x16xf32>,
    %233 = vector.extract_strided_slice %192 {offsets = [0, 199], sizes = [16, 16], strides = [1, 1]} : vector<16x324xf32> to vector<16x16xf32>
    %c0_208 = arith.constant 0 : index
    %c0_209 = arith.constant 0 : index
    %c160 = arith.constant 160 : index
    %234 = vector.load %arg13[%c0_208, %c0_209, %c160] : memref<1x16x256xf32, #tpu.memory_space<vmem>>, vector<1x16x16xf32>
    %235 = vector.shape_cast %234 : vector<1x16x16xf32> to vector<16x16xf32>
    %236 = vector.shape_cast %233 : vector<16x16xf32> to vector<1x16x16xf32>
    tpu.vector_store %arg13[%c0_208, %c0_209, %c160], %236 {strides = array<i32>} : memref<1x16x256xf32, #tpu.memory_space<vmem>>, vector<1x16x16xf32>,
    %237 = vector.extract_strided_slice %192 {offsets = [0, 217], sizes = [16, 16], strides = [1, 1]} : vector<16x324xf32> to vector<16x16xf32>
    %c0_210 = arith.constant 0 : index
    %c0_211 = arith.constant 0 : index
    %c176 = arith.constant 176 : index
    %238 = vector.load %arg13[%c0_210, %c0_211, %c176] : memref<1x16x256xf32, #tpu.memory_space<vmem>>, vector<1x16x16xf32>
    %239 = vector.shape_cast %238 : vector<1x16x16xf32> to vector<16x16xf32>
    %240 = vector.shape_cast %237 : vector<16x16xf32> to vector<1x16x16xf32>
    tpu.vector_store %arg13[%c0_210, %c0_211, %c176], %240 {strides = array<i32>} : memref<1x16x256xf32, #tpu.memory_space<vmem>>, vector<1x16x16xf32>,
    %241 = vector.extract_strided_slice %192 {offsets = [0, 235], sizes = [16, 16], strides = [1, 1]} : vector<16x324xf32> to vector<16x16xf32>
    %c0_212 = arith.constant 0 : index
    %c0_213 = arith.constant 0 : index
    %c192 = arith.constant 192 : index
    %242 = vector.load %arg13[%c0_212, %c0_213, %c192] : memref<1x16x256xf32, #tpu.memory_space<vmem>>, vector<1x16x16xf32>
    %243 = vector.shape_cast %242 : vector<1x16x16xf32> to vector<16x16xf32>
    %244 = vector.shape_cast %241 : vector<16x16xf32> to vector<1x16x16xf32>
    tpu.vector_store %arg13[%c0_212, %c0_213, %c192], %244 {strides = array<i32>} : memref<1x16x256xf32, #tpu.memory_space<vmem>>, vector<1x16x16xf32>,
    %245 = vector.extract_strided_slice %192 {offsets = [0, 253], sizes = [16, 16], strides = [1, 1]} : vector<16x324xf32> to vector<16x16xf32>
    %c0_214 = arith.constant 0 : index
    %c0_215 = arith.constant 0 : index
    %c208 = arith.constant 208 : index
    %246 = vector.load %arg13[%c0_214, %c0_215, %c208] : memref<1x16x256xf32, #tpu.memory_space<vmem>>, vector<1x16x16xf32>
    %247 = vector.shape_cast %246 : vector<1x16x16xf32> to vector<16x16xf32>
    %248 = vector.shape_cast %245 : vector<16x16xf32> to vector<1x16x16xf32>
    tpu.vector_store %arg13[%c0_214, %c0_215, %c208], %248 {strides = array<i32>} : memref<1x16x256xf32, #tpu.memory_space<vmem>>, vector<1x16x16xf32>,
    %249 = vector.extract_strided_slice %192 {offsets = [0, 271], sizes = [16, 16], strides = [1, 1]} : vector<16x324xf32> to vector<16x16xf32>
    %c0_216 = arith.constant 0 : index
    %c0_217 = arith.constant 0 : index
    %c224 = arith.constant 224 : index
    %250 = vector.load %arg13[%c0_216, %c0_217, %c224] : memref<1x16x256xf32, #tpu.memory_space<vmem>>, vector<1x16x16xf32>
    %251 = vector.shape_cast %250 : vector<1x16x16xf32> to vector<16x16xf32>
    %252 = vector.shape_cast %249 : vector<16x16xf32> to vector<1x16x16xf32>
    tpu.vector_store %arg13[%c0_216, %c0_217, %c224], %252 {strides = array<i32>} : memref<1x16x256xf32, #tpu.memory_space<vmem>>, vector<1x16x16xf32>,
    %253 = vector.extract_strided_slice %192 {offsets = [0, 289], sizes = [16, 16], strides = [1, 1]} : vector<16x324xf32> to vector<16x16xf32>
    %c0_218 = arith.constant 0 : index
    %c0_219 = arith.constant 0 : index
    %c240 = arith.constant 240 : index
    %254 = vector.load %arg13[%c0_218, %c0_219, %c240] : memref<1x16x256xf32, #tpu.memory_space<vmem>>, vector<1x16x16xf32>
    %255 = vector.shape_cast %254 : vector<1x16x16xf32> to vector<16x16xf32>
    %256 = vector.shape_cast %253 : vector<16x16xf32> to vector<1x16x16xf32>
    tpu.vector_store %arg13[%c0_218, %c0_219, %c240], %256 {strides = array<i32>} : memref<1x16x256xf32, #tpu.memory_space<vmem>>, vector<1x16x16xf32>,
    return
  }
  func.func @transform_0(%arg0: i32) -> (i32, i32, i32) {
    %c0_i32 = arith.constant 0 : i32
    %c0_i32_0 = arith.constant 0 : i32
    %c0_i32_1 = arith.constant 0 : i32
    return %arg0, %c0_i32, %c0_i32_0 : i32, i32, i32
  }
  func.func @transform_1(%arg0: i32) -> (i32, i32) {
    %c0_i32 = arith.constant 0 : i32
    %c0_i32_0 = arith.constant 0 : i32
    %c0_i32_1 = arith.constant 0 : i32
    return %c0_i32, %c0_i32_0 : i32, i32
  }
  func.func @transform_2(%arg0: i32) -> (i32, i32, i32) {
    %c0_i32 = arith.constant 0 : i32
    %c0_i32_0 = arith.constant 0 : i32
    %c0_i32_1 = arith.constant 0 : i32
    %c0_i32_2 = arith.constant 0 : i32
    return %c0_i32, %c0_i32_0, %c0_i32_1 : i32, i32, i32
  }
  func.func @transform_3(%arg0: i32) -> (i32, i32, i32) {
    %c0_i32 = arith.constant 0 : i32
    %c0_i32_0 = arith.constant 0 : i32
    %c0_i32_1 = arith.constant 0 : i32
    %c0_i32_2 = arith.constant 0 : i32
    return %c0_i32, %c0_i32_0, %c0_i32_1 : i32, i32, i32
  }
  func.func @transform_4(%arg0: i32) -> (i32, i32, i32) {
    %c0_i32 = arith.constant 0 : i32
    %c0_i32_0 = arith.constant 0 : i32
    %c0_i32_1 = arith.constant 0 : i32
    %c0_i32_2 = arith.constant 0 : i32
    return %c0_i32, %c0_i32_0, %c0_i32_1 : i32, i32, i32
  }
  func.func @transform_5(%arg0: i32) -> (i32, i32, i32) {
    %c0_i32 = arith.constant 0 : i32
    %c0_i32_0 = arith.constant 0 : i32
    %c0_i32_1 = arith.constant 0 : i32
    %c0_i32_2 = arith.constant 0 : i32
    return %c0_i32, %c0_i32_0, %c0_i32_1 : i32, i32, i32
  }
  func.func @transform_6(%arg0: i32) -> (i32, i32, i32) {
    %c0_i32 = arith.constant 0 : i32
    %c0_i32_0 = arith.constant 0 : i32
    %c0_i32_1 = arith.constant 0 : i32
    %c0_i32_2 = arith.constant 0 : i32
    return %c0_i32, %c0_i32_0, %c0_i32_1 : i32, i32, i32
  }
  func.func @transform_7(%arg0: i32) -> (i32, i32, i32) {
    %c0_i32 = arith.constant 0 : i32
    %c0_i32_0 = arith.constant 0 : i32
    %c0_i32_1 = arith.constant 0 : i32
    %c0_i32_2 = arith.constant 0 : i32
    return %c0_i32, %c0_i32_0, %c0_i32_1 : i32, i32, i32
  }
  func.func @transform_8(%arg0: i32) -> (i32, i32, i32) {
    %c0_i32 = arith.constant 0 : i32
    %c0_i32_0 = arith.constant 0 : i32
    %c0_i32_1 = arith.constant 0 : i32
    %c0_i32_2 = arith.constant 0 : i32
    return %c0_i32, %c0_i32_0, %c0_i32_1 : i32, i32, i32
  }
  func.func @transform_9(%arg0: i32) -> (i32, i32, i32) {
    %c0_i32 = arith.constant 0 : i32
    %c0_i32_0 = arith.constant 0 : i32
    %c0_i32_1 = arith.constant 0 : i32
    %c0_i32_2 = arith.constant 0 : i32
    return %c0_i32, %c0_i32_0, %c0_i32_1 : i32, i32, i32
  }
  func.func @transform_10(%arg0: i32) -> (i32, i32) {
    %c0_i32 = arith.constant 0 : i32
    %c0_i32_0 = arith.constant 0 : i32
    %c0_i32_1 = arith.constant 0 : i32
    return %c0_i32, %c0_i32_0 : i32, i32
  }
  func.func @transform_11(%arg0: i32) -> (i32, i32) {
    %c0_i32 = arith.constant 0 : i32
    %c0_i32_0 = arith.constant 0 : i32
    %c0_i32_1 = arith.constant 0 : i32
    return %c0_i32, %c0_i32_0 : i32, i32
  }
  func.func @transform_12(%arg0: i32) -> (i32, i32, i32) {
    %c0_i32 = arith.constant 0 : i32
    %c0_i32_0 = arith.constant 0 : i32
    %c0_i32_1 = arith.constant 0 : i32
    return %arg0, %c0_i32, %c0_i32_0 : i32, i32, i32
  }
}

</mosaic_0001>

<llo_original>
// kernel: rg_forward.1
$region0: #{rg_forward.1}
  #allocation0 [shape = 'u32[]', space=smem, size = 0x4, offset = 0x4, fixed_abs, tag = 'smem constant byte address 0x4 - core index']
  #allocation1 [shape = 'u32[144,128]{1,0:T(1,128)}', space=vmem, size = 0x12000, scoped, tag = 'internal scratch']
  #allocation2 [shape = 'f32[16,580]{1,0:T(8,128)}', space=vmem, size = 0xa000, scoped, tag = 'scratch operand']
  %s0 = inlined_call_operand.vmem [shape: f32[2,16,256], index: 0, kind: input, shape index: {}]
  %s1 = inlined_call_operand.vmem [shape: f32[1,324], index: 1, kind: input, shape index: {}]
  %s2 = inlined_call_operand.vmem [shape: f32[2,16,144], index: 2, kind: input, shape index: {}]
  %s3 = inlined_call_operand.vmem [shape: f32[2,16,1], index: 3, kind: input, shape index: {}]
  %s4 = inlined_call_operand.vmem [shape: f32[2,16,144], index: 4, kind: input, shape index: {}]
  %s5 = inlined_call_operand.vmem [shape: f32[2,16,1], index: 5, kind: input, shape index: {}]
  %s6 = inlined_call_operand.vmem [shape: f32[2,4,16], index: 6, kind: input, shape index: {}]
  %s7 = inlined_call_operand.vmem [shape: f32[2,4,1], index: 7, kind: input, shape index: {}]
  %s8 = inlined_call_operand.vmem [shape: f32[2,16,4], index: 8, kind: input, shape index: {}]
  %s9 = inlined_call_operand.vmem [shape: f32[2,16,1], index: 9, kind: input, shape index: {}]
  %s10 = inlined_call_operand.vmem [shape: f32[16,144], index: 10, kind: input, shape index: {}]
  %s11 = inlined_call_operand.vmem [shape: f32[16,1], index: 11, kind: input, shape index: {}]
  %s12 = inlined_call_operand.vmem [shape: f32[2,16,256], index: 12, kind: output, shape index: {}]
  %s13 = sld [smem:[#allocation0]]
  $region81: #{rg_forward.1} parent=0
    _
  %s15 = ssub.s32 1, %s13
  %s16 = scalar_select 0, %s15, %s13
  loop: start=0, step=1, limit=4
  $region2: #{rg_forward.1} parent=0 // loop_pre_header
    _
  $region3: #{rg_forward.1} parent=0 // loop_header
    %s18 = sphi 0, %s22
    %p19 = scmp.ge.s32.totalorder %s18, 4
    %s28 = sphi 0, %s30
    %s31 = sphi 0, %s28
    %s32 = sphi 0, %s31
    %s48 = sphi 0, %s32
    %s52 = sphi 0, %s52
    %s54 = sphi 0, %s52
    %s55 = sphi 0, %s54
    %s69 = sphi 0, %s55
    %s73 = sphi 0, %s73
    %s75 = sphi 0, %s73
    %s76 = sphi 0, %s75
    %s90 = sphi 0, %s76
    %s94 = sphi 0, %s94
    %s96 = sphi 0, %s94
    %s97 = sphi 0, %s96
    %s111 = sphi 0, %s97
    %s115 = sphi 0, %s115
    %s117 = sphi 0, %s115
    %s118 = sphi 0, %s117
    %s132 = sphi 0, %s118
    %s136 = sphi 0, %s136
    %s138 = sphi 0, %s136
    %s139 = sphi 0, %s138
    %s153 = sphi 0, %s139
    %s157 = sphi 0, %s157
    %s159 = sphi 0, %s157
    %s160 = sphi 0, %s159
    %s174 = sphi 0, %s160
    %s178 = sphi 0, %s178
    %s180 = sphi 0, %s178
    %s181 = sphi 0, %s180
    %s195 = sphi 0, %s181
    %s199 = sphi 0, %s199
    %s201 = sphi 0, %s199
    %s202 = sphi 0, %s201
    %s216 = sphi 0, %s202
    %s220 = sphi 0, %s220
    %s222 = sphi 0, %s220
    %s223 = sphi 0, %s222
    %s237 = sphi 0, %s223
    %s241 = sphi 0, %s241
    %s243 = sphi 0, %s241
    %s244 = sphi 0, %s243
    %s258 = sphi 0, %s244
    %s262 = sphi 0, %s262
    %s264 = sphi 0, %s262
    %s265 = sphi 0, %s264
    %s279 = sphi 0, %s265
    %s285 = sphi 0, %s287
    %s288 = sphi 0, %s285
    %s289 = sphi 0, %s288
    %s305 = sphi 0, %s289
  $region4: #{rg_forward.1} parent=0 // loop_header_branch
    %21 = sbr.rel (%p19) target = $region8
  $region5: #{rg_forward.1} parent=0 // loop_body
    %s23 = ssub.s32 %s18, 1
    %s24 = ssub.s32 %s18, 2
    %s25 = sadd.s32 %s18, 1
    %s26 = ssub.s32 %s18, %s25
    %p27 = scmp.eq.s32.totalorder %s26, 0
    %s29 = sadd.s32 %s28, 1
    %s30 = scalar_select %p27, %s28, %s29
    %p33 = pneg %p27
    %p34 = scmp.eq.s32.totalorder %s18, 1
    %p35 = por %p33, %p34
    %p36 = scmp.ne.s32.totalorder %s28, %s31
    %p37 = scmp.eq.s32.totalorder %s18, 0
    %p38 = por %p36, %p37
    %p39 = scmp.ne.s32.totalorder %s28, %s31
    %p40 = scmp.eq.s32.totalorder %s23, 1
    %p41 = por %p39, %p40
    %p42 = scmp.ne.s32.totalorder %s31, %s32
    %p43 = scmp.eq.s32.totalorder %s23, 0
    %p44 = por %p42, %p43
    %p45 = scmp.ne.s32.totalorder %s31, %s32
    %p46 = scmp.eq.s32.totalorder %s24, 1
    %p47 = por %p45, %p46
    %p49 = scmp.ne.s32.totalorder %s32, %s48
    %p50 = scmp.eq.s32.totalorder %s24, 0
    %p51 = por %p49, %p50
    %s53 = sadd.s32 %s52, 1
    %p56 = scmp.eq.s32.totalorder %s18, 1
    %p57 = scmp.ne.s32.totalorder %s52, %s54
    %p58 = scmp.eq.s32.totalorder %s18, 0
    %p59 = por %p57, %p58
    %p60 = scmp.ne.s32.totalorder %s52, %s54
    %p61 = scmp.eq.s32.totalorder %s23, 1
    %p62 = por %p60, %p61
    %p63 = scmp.ne.s32.totalorder %s54, %s55
    %p64 = scmp.eq.s32.totalorder %s23, 0
    %p65 = por %p63, %p64
    %p66 = scmp.ne.s32.totalorder %s54, %s55
    %p67 = scmp.eq.s32.totalorder %s24, 1
    %p68 = por %p66, %p67
    %p70 = scmp.ne.s32.totalorder %s55, %s69
    %p71 = scmp.eq.s32.totalorder %s24, 0
    %p72 = por %p70, %p71
    %s74 = sadd.s32 %s73, 1
    %p77 = scmp.eq.s32.totalorder %s18, 1
    %p78 = scmp.ne.s32.totalorder %s73, %s75
    %p79 = scmp.eq.s32.totalorder %s18, 0
    %p80 = por %p78, %p79
    %p81 = scmp.ne.s32.totalorder %s73, %s75
    %p82 = scmp.eq.s32.totalorder %s23, 1
    %p83 = por %p81, %p82
    %p84 = scmp.ne.s32.totalorder %s75, %s76
    %p85 = scmp.eq.s32.totalorder %s23, 0
    %p86 = por %p84, %p85
    %p87 = scmp.ne.s32.totalorder %s75, %s76
    %p88 = scmp.eq.s32.totalorder %s24, 1
    %p89 = por %p87, %p88
    %p91 = scmp.ne.s32.totalorder %s76, %s90
    %p92 = scmp.eq.s32.totalorder %s24, 0
    %p93 = por %p91, %p92
    %s95 = sadd.s32 %s94, 1
    %p98 = scmp.eq.s32.totalorder %s18, 1
    %p99 = scmp.ne.s32.totalorder %s94, %s96
    %p100 = scmp.eq.s32.totalorder %s18, 0
    %p101 = por %p99, %p100
    %p102 = scmp.ne.s32.totalorder %s94, %s96
    %p103 = scmp.eq.s32.totalorder %s23, 1
    %p104 = por %p102, %p103
    %p105 = scmp.ne.s32.totalorder %s96, %s97
    %p106 = scmp.eq.s32.totalorder %s23, 0
    %p107 = por %p105, %p106
    %p108 = scmp.ne.s32.totalorder %s96, %s97
    %p109 = scmp.eq.s32.totalorder %s24, 1
    %p110 = por %p108, %p109
    %p112 = scmp.ne.s32.totalorder %s97, %s111
    %p113 = scmp.eq.s32.totalorder %s24, 0
    %p114 = por %p112, %p113
    %s116 = sadd.s32 %s115, 1
    %p119 = scmp.eq.s32.totalorder %s18, 1
    %p120 = scmp.ne.s32.totalorder %s115, %s117
    %p121 = scmp.eq.s32.totalorder %s18, 0
    %p122 = por %p120, %p121
    %p123 = scmp.ne.s32.totalorder %s115, %s117
    %p124 = scmp.eq.s32.totalorder %s23, 1
    %p125 = por %p123, %p124
    %p126 = scmp.ne.s32.totalorder %s117, %s118
    %p127 = scmp.eq.s32.totalorder %s23, 0
    %p128 = por %p126, %p127
    %p129 = scmp.ne.s32.totalorder %s117, %s118
    %p130 = scmp.eq.s32.totalorder %s24, 1
    %p131 = por %p129, %p130
    %p133 = scmp.ne.s32.totalorder %s118, %s132
    %p134 = scmp.eq.s32.totalorder %s24, 0
    %p135 = por %p133, %p134
    %s137 = sadd.s32 %s136, 1
    %p140 = scmp.eq.s32.totalorder %s18, 1
    %p141 = scmp.ne.s32.totalorder %s136, %s138
    %p142 = scmp.eq.s32.totalorder %s18, 0
    %p143 = por %p141, %p142
    %p144 = scmp.ne.s32.totalorder %s136, %s138
    %p145 = scmp.eq.s32.totalorder %s23, 1
    %p146 = por %p144, %p145
    %p147 = scmp.ne.s32.totalorder %s138, %s139
    %p148 = scmp.eq.s32.totalorder %s23, 0
    %p149 = por %p147, %p148
    %p150 = scmp.ne.s32.totalorder %s138, %s139
    %p151 = scmp.eq.s32.totalorder %s24, 1
    %p152 = por %p150, %p151
    %p154 = scmp.ne.s32.totalorder %s139, %s153
    %p155 = scmp.eq.s32.totalorder %s24, 0
    %p156 = por %p154, %p155
    %s158 = sadd.s32 %s157, 1
    %p161 = scmp.eq.s32.totalorder %s18, 1
    %p162 = scmp.ne.s32.totalorder %s157, %s159
    %p163 = scmp.eq.s32.totalorder %s18, 0
    %p164 = por %p162, %p163
    %p165 = scmp.ne.s32.totalorder %s157, %s159
    %p166 = scmp.eq.s32.totalorder %s23, 1
    %p167 = por %p165, %p166
    %p168 = scmp.ne.s32.totalorder %s159, %s160
    %p169 = scmp.eq.s32.totalorder %s23, 0
    %p170 = por %p168, %p169
    %p171 = scmp.ne.s32.totalorder %s159, %s160
    %p172 = scmp.eq.s32.totalorder %s24, 1
    %p173 = por %p171, %p172
    %p175 = scmp.ne.s32.totalorder %s160, %s174
    %p176 = scmp.eq.s32.totalorder %s24, 0
    %p177 = por %p175, %p176
    %s179 = sadd.s32 %s178, 1
    %p182 = scmp.eq.s32.totalorder %s18, 1
    %p183 = scmp.ne.s32.totalorder %s178, %s180
    %p184 = scmp.eq.s32.totalorder %s18, 0
    %p185 = por %p183, %p184
    %p186 = scmp.ne.s32.totalorder %s178, %s180
    %p187 = scmp.eq.s32.totalorder %s23, 1
    %p188 = por %p186, %p187
    %p189 = scmp.ne.s32.totalorder %s180, %s181
    %p190 = scmp.eq.s32.totalorder %s23, 0
    %p191 = por %p189, %p190
    %p192 = scmp.ne.s32.totalorder %s180, %s181
    %p193 = scmp.eq.s32.totalorder %s24, 1
    %p194 = por %p192, %p193
    %p196 = scmp.ne.s32.totalorder %s181, %s195
    %p197 = scmp.eq.s32.totalorder %s24, 0
    %p198 = por %p196, %p197
    %s200 = sadd.s32 %s199, 1
    %p203 = scmp.eq.s32.totalorder %s18, 1
    %p204 = scmp.ne.s32.totalorder %s199, %s201
    %p205 = scmp.eq.s32.totalorder %s18, 0
    %p206 = por %p204, %p205
    %p207 = scmp.ne.s32.totalorder %s199, %s201
    %p208 = scmp.eq.s32.totalorder %s23, 1
    %p209 = por %p207, %p208
    %p210 = scmp.ne.s32.totalorder %s201, %s202
    %p211 = scmp.eq.s32.totalorder %s23, 0
    %p212 = por %p210, %p211
    %p213 = scmp.ne.s32.totalorder %s201, %s202
    %p214 = scmp.eq.s32.totalorder %s24, 1
    %p215 = por %p213, %p214
    %p217 = scmp.ne.s32.totalorder %s202, %s216
    %p218 = scmp.eq.s32.totalorder %s24, 0
    %p219 = por %p217, %p218
    %s221 = sadd.s32 %s220, 1
    %p224 = scmp.eq.s32.totalorder %s18, 1
    %p225 = scmp.ne.s32.totalorder %s220, %s222
    %p226 = scmp.eq.s32.totalorder %s18, 0
    %p227 = por %p225, %p226
    %p228 = scmp.ne.s32.totalorder %s220, %s222
    %p229 = scmp.eq.s32.totalorder %s23, 1
    %p230 = por %p228, %p229
    %p231 = scmp.ne.s32.totalorder %s222, %s223
    %p232 = scmp.eq.s32.totalorder %s23, 0
    %p233 = por %p231, %p232
    %p234 = scmp.ne.s32.totalorder %s222, %s223
    %p235 = scmp.eq.s32.totalorder %s24, 1
    %p236 = por %p234, %p235
    %p238 = scmp.ne.s32.totalorder %s223, %s237
    %p239 = scmp.eq.s32.totalorder %s24, 0
    %p240 = por %p238, %p239
    %s242 = sadd.s32 %s241, 1
    %p245 = scmp.eq.s32.totalorder %s18, 1
    %p246 = scmp.ne.s32.totalorder %s241, %s243
    %p247 = scmp.eq.s32.totalorder %s18, 0
    %p248 = por %p246, %p247
    %p249 = scmp.ne.s32.totalorder %s241, %s243
    %p250 = scmp.eq.s32.totalorder %s23, 1
    %p251 = por %p249, %p250
    %p252 = scmp.ne.s32.totalorder %s243, %s244
    %p253 = scmp.eq.s32.totalorder %s23, 0
    %p254 = por %p252, %p253
    %p255 = scmp.ne.s32.totalorder %s243, %s244
    %p256 = scmp.eq.s32.totalorder %s24, 1
    %p257 = por %p255, %p256
    %p259 = scmp.ne.s32.totalorder %s244, %s258
    %p260 = scmp.eq.s32.totalorder %s24, 0
    %p261 = por %p259, %p260
    %s263 = sadd.s32 %s262, 1
    %p266 = scmp.eq.s32.totalorder %s18, 1
    %p267 = scmp.ne.s32.totalorder %s262, %s264
    %p268 = scmp.eq.s32.totalorder %s18, 0
    %p269 = por %p267, %p268
    %p270 = scmp.ne.s32.totalorder %s262, %s264
    %p271 = scmp.eq.s32.totalorder %s23, 1
    %p272 = por %p270, %p271
    %p273 = scmp.ne.s32.totalorder %s264, %s265
    %p274 = scmp.eq.s32.totalorder %s23, 0
    %p275 = por %p273, %p274
    %p276 = scmp.ne.s32.totalorder %s264, %s265
    %p277 = scmp.eq.s32.totalorder %s24, 1
    %p278 = por %p276, %p277
    %p280 = scmp.ne.s32.totalorder %s265, %s279
    %p281 = scmp.eq.s32.totalorder %s24, 0
    %p282 = por %p280, %p281
    %s283 = ssub.s32 %s18, %s25
    %p284 = scmp.eq.s32.totalorder %s283, 0
    %s286 = sadd.s32 %s285, 1
    %s287 = scalar_select %p284, %s285, %s286
    %p290 = pneg %p284
    %p291 = scmp.eq.s32.totalorder %s18, 1
    %p292 = por %p290, %p291
    %p293 = scmp.ne.s32.totalorder %s285, %s288
    %p294 = scmp.eq.s32.totalorder %s18, 0
    %p295 = por %p293, %p294
    %p296 = scmp.ne.s32.totalorder %s285, %s288
    %p297 = scmp.eq.s32.totalorder %s23, 1
    %p298 = por %p296, %p297
    %p299 = scmp.ne.s32.totalorder %s288, %s289
    %p300 = scmp.eq.s32.totalorder %s23, 0
    %p301 = por %p299, %p300
    %p302 = scmp.ne.s32.totalorder %s288, %s289
    %p303 = scmp.eq.s32.totalorder %s24, 1
    %p304 = por %p302, %p303
    %p306 = scmp.ne.s32.totalorder %s289, %s305
    %p307 = scmp.eq.s32.totalorder %s24, 0
    %p308 = por %p306, %p307
    %p309 = scmp.le.s32.totalorder 1, %s18
    %p310 = scmp.lt.s32.totalorder %s18, 3
    %p311 = pnand %p309, %p310
    %p312 = pneg %p311
    // Predicated region
    $region9: #{rg_forward.1} parent=5 // pred_check
      _
    $region10: #{rg_forward.1} parent=5 // pred_check_branch
      %314 = sbr.rel (%p311) target = $region12
    $region11: #{rg_forward.1} parent=5 // pred_region
      %s315 = ssub.s32 %s18, 1
      // Predicated region
      $region13: #{rg_forward.1} parent=11 // pred_check
        %p316 = pneg %p65
      $region14: #{rg_forward.1} parent=11 // pred_check_branch
        %318 = sbr.rel (%p316) target = $region16
      $region15: #{rg_forward.1} parent=11 // pred_region
        _
      $region16: #{rg_forward.1} parent=11 // pred_fallthru
        _
      // Predicated region
      $region17: #{rg_forward.1} parent=11 // pred_check
        %p319 = pneg %p86
      $region18: #{rg_forward.1} parent=11 // pred_check_branch
        %321 = sbr.rel (%p319) target = $region20
      $region19: #{rg_forward.1} parent=11 // pred_region
        _
      $region20: #{rg_forward.1} parent=11 // pred_fallthru
        _
      // Predicated region
      $region21: #{rg_forward.1} parent=11 // pred_check
        %p322 = pneg %p107
      $region22: #{rg_forward.1} parent=11 // pred_check_branch
        %324 = sbr.rel (%p322) target = $region24
      $region23: #{rg_forward.1} parent=11 // pred_region
        _
      $region24: #{rg_forward.1} parent=11 // pred_fallthru
        _
      // Predicated region
      $region25: #{rg_forward.1} parent=11 // pred_check
        %p325 = pneg %p128
      $region26: #{rg_forward.1} parent=11 // pred_check_branch
        %327 = sbr.rel (%p325) target = $region28
      $region27: #{rg_forward.1} parent=11 // pred_region
        _
      $region28: #{rg_forward.1} parent=11 // pred_fallthru
        _
      // Predicated region
      $region29: #{rg_forward.1} parent=11 // pred_check
        %p328 = pneg %p149
      $region30: #{rg_forward.1} parent=11 // pred_check_branch
        %330 = sbr.rel (%p328) target = $region32
      $region31: #{rg_forward.1} parent=11 // pred_region
        _
      $region32: #{rg_forward.1} parent=11 // pred_fallthru
        _
      // Predicated region
      $region33: #{rg_forward.1} parent=11 // pred_check
        %p331 = pneg %p170
      $region34: #{rg_forward.1} parent=11 // pred_check_branch
        %333 = sbr.rel (%p331) target = $region36
      $region35: #{rg_forward.1} parent=11 // pred_region
        _
      $region36: #{rg_forward.1} parent=11 // pred_fallthru
        _
      // Predicated region
      $region37: #{rg_forward.1} parent=11 // pred_check
        %p334 = pneg %p191
      $region38: #{rg_forward.1} parent=11 // pred_check_branch
        %336 = sbr.rel (%p334) target = $region40
      $region39: #{rg_forward.1} parent=11 // pred_region
        _
      $region40: #{rg_forward.1} parent=11 // pred_fallthru
        _
      // Predicated region
      $region41: #{rg_forward.1} parent=11 // pred_check
        %p337 = pneg %p212
      $region42: #{rg_forward.1} parent=11 // pred_check_branch
        %339 = sbr.rel (%p337) target = $region44
      $region43: #{rg_forward.1} parent=11 // pred_region
        _
      $region44: #{rg_forward.1} parent=11 // pred_fallthru
        _
      // Predicated region
      $region45: #{rg_forward.1} parent=11 // pred_check
        %p340 = pneg %p233
      $region46: #{rg_forward.1} parent=11 // pred_check_branch
        %342 = sbr.rel (%p340) target = $region48
      $region47: #{rg_forward.1} parent=11 // pred_region
        _
      $region48: #{rg_forward.1} parent=11 // pred_fallthru
        _
      // Predicated region
      $region49: #{rg_forward.1} parent=11 // pred_check
        %p343 = pneg %p254
      $region50: #{rg_forward.1} parent=11 // pred_check_branch
        %345 = sbr.rel (%p343) target = $region52
      $region51: #{rg_forward.1} parent=11 // pred_region
        _
      $region52: #{rg_forward.1} parent=11 // pred_fallthru
        _
      // Predicated region
      $region53: #{rg_forward.1} parent=11 // pred_check
        %p346 = pneg %p275
      $region54: #{rg_forward.1} parent=11 // pred_check_branch
        %348 = sbr.rel (%p346) target = $region56
      $region55: #{rg_forward.1} parent=11 // pred_region
        _
      $region56: #{rg_forward.1} parent=11 // pred_fallthru
        _
    $region12: #{rg_forward.1} parent=5 // pred_fallthru
      _
    %p349 = scmp.lt.s32.totalorder %s18, 2
    // Predicated region
    $region57: #{rg_forward.1} parent=5 // pred_check
      %p350 = pneg %p349
    $region58: #{rg_forward.1} parent=5 // pred_check_branch
      %352 = sbr.rel (%p350) target = $region60
    $region59: #{rg_forward.1} parent=5 // pred_region
      // Predicated region
      $region61: #{rg_forward.1} parent=59 // pred_check
        %p353 = pneg %p38
      $region62: #{rg_forward.1} parent=59 // pred_check_branch
        %355 = sbr.rel (%p353) target = $region64
      $region63: #{rg_forward.1} parent=59 // pred_region
        %p356 = scmp.lt.s32.totalorder %s18, 1
        %s357 = scalar_select %p356, %s18, 1
        %s358 = smul.addr %s357, 4
        %s359 = smul.addr %s358, 8
        %s360 = scalar_lea.vmem %s0, %s359
      $region64: #{rg_forward.1} parent=59 // pred_fallthru
        _
    $region60: #{rg_forward.1} parent=5 // pred_fallthru
      _
    %p361 = scmp.le.s32.totalorder 1, %s18
    %p362 = scmp.lt.s32.totalorder %s18, 3
    %p363 = pnand %p361, %p362
    %p364 = pneg %p363
    // Predicated region
    $region65: #{rg_forward.1} parent=5 // pred_check
      _
    $region66: #{rg_forward.1} parent=5 // pred_check_branch
      %366 = sbr.rel (%p363) target = $region68
    $region67: #{rg_forward.1} parent=5 // pred_region
      %s367 = ssub.s32 %s18, 1
      %p368 = scmp.lt.s32.totalorder %s23, 1
      %s369 = scalar_select %p368, %s23, 1
      %s370 = smul.addr %s369, 4
      %s371 = smul.addr %s370, 8
      %s372 = scalar_lea.vmem %s0, %s371
      %p373 = pneg %p44
      %p374 = pneg %p41
      %p375 = pneg %p65
      %p376 = pneg %p62
      %p377 = pneg %p86
      %p378 = pneg %p83
      %p379 = pneg %p107
      %p380 = pneg %p104
      %p381 = pneg %p128
      %p382 = pneg %p125
      %p383 = pneg %p149
      %p384 = pneg %p146
      %p385 = pneg %p170
      %p386 = pneg %p167
      %p387 = pneg %p191
      %p388 = pneg %p188
      %p389 = pneg %p212
      %p390 = pneg %p209
      %p391 = pneg %p233
      %p392 = pneg %p230
      %p393 = pneg %p254
      %p394 = pneg %p251
      %p395 = pneg %p275
      %p396 = pneg %p272
      %p397 = pneg %p301
      %p398 = pneg %p298
      %p399 = scmp.lt.s32.totalorder %s23, 1
      %s400 = scalar_select %p399, %s23, 1
      %s401 = smul.addr %s400, 4
      %s402 = smul.addr %s401, 8
      %s403 = scalar_lea.vmem %s12, %s402
      %p404 = scmp.lt.s32.totalorder %s23, 1
      %s405 = scalar_select %p404, %s23, 1
      %s406 = smul.addr %s405, 4
      %s407 = smul.addr %s406, 8
      %s408 = scalar_lea.vmem %s0, %s407
      %p409 = scmp.lt.s32.totalorder %s23, 1
      %s410 = scalar_select %p409, %s23, 1
      %s411 = smul.addr %s410, 4
      %s412 = smul.addr %s411, 8
      %s413 = scalar_lea.vmem %s12, %s412
      %v414 = vld [vmem:[%s1] sm:$0x7]
      %415 = vst [vmem:[#allocation2] sm:$0xff] 0.0
      %416 = vst [vmem:[#allocation2 + $0x8] sm:$0xff] 0.0
      %417 = vst [vmem:[#allocation2 + $0x10] sm:$0xff] 0.0
      %418 = vst [vmem:[#allocation2 + $0x18] sm:$0xff] 0.0
      %vm419 = vcmask 556032
      %420 = vst.msk [vmem:[#allocation2 + $0x20] sm:$0xff] %vm419, 0.0
      %421 = vst [vmem:[#allocation2 + $0x28] sm:$0xff] 0.0
      %422 = vst [vmem:[#allocation2 + $0x30] sm:$0xff] 0.0
      %423 = vst [vmem:[#allocation2 + $0x38] sm:$0xff] 0.0
      %424 = vst [vmem:[#allocation2 + $0x40] sm:$0xff] 0.0
      %425 = vst.msk [vmem:[#allocation2 + $0x48] sm:$0xff] %vm419, 0.0
      %v426 = vld [vmem:[%s408] sm:$0xff]
      %v427 = vld [vmem:[%s408 + $0x8] sm:$0xff]
      %v428 = vld [vmem:[%s408 + $0x10] sm:$0xff]
      %v429 = vld [vmem:[%s408 + $0x18] sm:$0xff]
      %432 = vrot.lane.b32.xlu0 %v426, 19
      %v433 = vpop.permute.xlu0 %432
      %434 = vrot.lane.b32.xlu0 %v428, 19
      %v435 = vpop.permute.xlu0 %434
      %vm438 = vcmask 285848
      %439 = vst.msk [vmem:[#allocation2 + $0x8] sm:$0xff] %vm438, %v433
      %440 = vst.msk [vmem:[#allocation2 + $0x30] sm:$0xff] %vm438, %v435
      %441 = vrot.lane.b32.xlu0 %v426, 21
      %v442 = vpop.permute.xlu0 %441
      %443 = vrot.lane.b32.xlu0 %v428, 21
      %v444 = vpop.permute.xlu0 %443
      %vm447 = vcmask 433448
      %448 = vst.msk [vmem:[#allocation2 + $0x8] sm:$0xff] %vm447, %v442
      %449 = vst.msk [vmem:[#allocation2 + $0x30] sm:$0xff] %vm447, %v444
      %450 = vrot.lane.b32.xlu0 %v426, 23
      %v451 = vpop.permute.xlu0 %450
      %452 = vrot.lane.b32.xlu0 %v428, 23
      %v453 = vpop.permute.xlu0 %452
      %vm456 = vcmask 581048
      %457 = vst.msk [vmem:[#allocation2 + $0x8] sm:$0xff] %vm456, %v451
      %458 = vst.msk [vmem:[#allocation2 + $0x30] sm:$0xff] %vm456, %v453
      %459 = vrot.lane.b32.xlu0 %v426, 25
      %v460 = vpop.permute.xlu0 %459
      %461 = vrot.lane.b32.xlu0 %v428, 25
      %v462 = vpop.permute.xlu0 %461
      %vm465 = vcmask 728648
      %466 = vst.msk [vmem:[#allocation2 + $0x8] sm:$0xff] %vm465, %v460
      %467 = vst.msk [vmem:[#allocation2 + $0x30] sm:$0xff] %vm465, %v462
      %468 = vrot.lane.b32.xlu0 %v426, 27
      %v469 = vpop.permute.xlu0 %468
      %470 = vrot.lane.b32.xlu0 %v428, 27
      %v471 = vpop.permute.xlu0 %470
      %vm474 = vcmask 876248
      %475 = vst.msk [vmem:[#allocation2 + $0x8] sm:$0xff] %vm474, %v469
      %476 = vst.msk [vmem:[#allocation2 + $0x30] sm:$0xff] %vm474, %v471
      %477 = vrot.lane.b32.xlu0 %v426, 29
      %v478 = vpop.permute.xlu0 %477
      %479 = vrot.lane.b32.xlu0 %v428, 29
      %v480 = vpop.permute.xlu0 %479
      %vm483 = vcmask 1023848
      %484 = vst.msk [vmem:[#allocation2 + $0x8] sm:$0xff] %vm483, %v478
      %485 = vst.msk [vmem:[#allocation2 + $0x30] sm:$0xff] %vm483, %v480
      %486 = vrot.lane.b32.xlu0 %v426, 31
      %v487 = vpop.permute.xlu0 %486
      %488 = vrot.lane.b32.xlu0 %v428, 31
      %v489 = vpop.permute.xlu0 %488
      %vm492 = vcmask 1048568
      %493 = vst.msk [vmem:[#allocation2 + $0x8] sm:$0xff] %vm492, %v487
      %vm494 = vcmask 121856
      %495 = vst.msk [vmem:[#allocation2 + $0x10] sm:$0xff] %vm494, %v487
      %496 = vst.msk [vmem:[#allocation2 + $0x30] sm:$0xff] %vm492, %v489
      %497 = vst.msk [vmem:[#allocation2 + $0x38] sm:$0xff] %vm494, %v489
      %498 = vrot.lane.b32.xlu0 %v426, 33
      %v499 = vpop.permute.xlu0 %498
      %500 = vrot.lane.b32.xlu0 %v428, 33
      %v501 = vpop.permute.xlu0 %500
      %vm504 = vcmask 269448
      %505 = vst.msk [vmem:[#allocation2 + $0x10] sm:$0xff] %vm504, %v499
      %506 = vst.msk [vmem:[#allocation2 + $0x38] sm:$0xff] %vm504, %v501
      %509 = vrot.lane.b32.xlu0 %v427, 35
      %v510 = vpop.permute.xlu0 %509
      %511 = vrot.lane.b32.xlu0 %v429, 35
      %v512 = vpop.permute.xlu0 %511
      %vm515 = vcmask 417048
      %516 = vst.msk [vmem:[#allocation2 + $0x10] sm:$0xff] %vm515, %v510
      %517 = vst.msk [vmem:[#allocation2 + $0x38] sm:$0xff] %vm515, %v512
      %518 = vrot.lane.b32.xlu0 %v427, 37
      %v519 = vpop.permute.xlu0 %518
      %520 = vrot.lane.b32.xlu0 %v429, 37
      %v521 = vpop.permute.xlu0 %520
      %vm524 = vcmask 564648
      %525 = vst.msk [vmem:[#allocation2 + $0x10] sm:$0xff] %vm524, %v519
      %526 = vst.msk [vmem:[#allocation2 + $0x38] sm:$0xff] %vm524, %v521
      %527 = vrot.lane.b32.xlu0 %v427, 39
      %v528 = vpop.permute.xlu0 %527
      %529 = vrot.lane.b32.xlu0 %v429, 39
      %v530 = vpop.permute.xlu0 %529
      %vm533 = vcmask 712248
      %534 = vst.msk [vmem:[#allocation2 + $0x10] sm:$0xff] %vm533, %v528
      %535 = vst.msk [vmem:[#allocation2 + $0x38] sm:$0xff] %vm533, %v530
      %536 = vrot.lane.b32.xlu0 %v427, 41
      %v537 = vpop.permute.xlu0 %536
      %538 = vrot.lane.b32.xlu0 %v429, 41
      %v539 = vpop.permute.xlu0 %538
      %vm542 = vcmask 859848
      %543 = vst.msk [vmem:[#allocation2 + $0x10] sm:$0xff] %vm542, %v537
      %544 = vst.msk [vmem:[#allocation2 + $0x38] sm:$0xff] %vm542, %v539
      %545 = vrot.lane.b32.xlu0 %v427, 43
      %v546 = vpop.permute.xlu0 %545
      %547 = vrot.lane.b32.xlu0 %v429, 43
      %v548 = vpop.permute.xlu0 %547
      %vm551 = vcmask 1007448
      %552 = vst.msk [vmem:[#allocation2 + $0x10] sm:$0xff] %vm551, %v546
      %553 = vst.msk [vmem:[#allocation2 + $0x38] sm:$0xff] %vm551, %v548
      %554 = vrot.lane.b32.xlu0 %v427, 45
      %v555 = vpop.permute.xlu0 %554
      %556 = vrot.lane.b32.xlu0 %v429, 45
      %v557 = vpop.permute.xlu0 %556
      %vm560 = vcmask 1048552
      %561 = vst.msk [vmem:[#allocation2 + $0x10] sm:$0xff] %vm560, %v555
      %vm562 = vcmask 105472
      %563 = vst.msk [vmem:[#allocation2 + $0x18] sm:$0xff] %vm562, %v555
      %564 = vst.msk [vmem:[#allocation2 + $0x38] sm:$0xff] %vm560, %v557
      %565 = vst.msk [vmem:[#allocation2 + $0x40] sm:$0xff] %vm562, %v557
      %566 = vrot.lane.b32.xlu0 %v427, 47
      %v567 = vpop.permute.xlu0 %566
      %568 = vrot.lane.b32.xlu0 %v429, 47
      %v569 = vpop.permute.xlu0 %568
      %vm572 = vcmask 253048
      %573 = vst.msk [vmem:[#allocation2 + $0x18] sm:$0xff] %vm572, %v567
      %574 = vst.msk [vmem:[#allocation2 + $0x40] sm:$0xff] %vm572, %v569
      %575 = vrot.lane.b32.xlu0 %v427, 49
      %v576 = vpop.permute.xlu0 %575
      %577 = vrot.lane.b32.xlu0 %v429, 49
      %v578 = vpop.permute.xlu0 %577
      %vm581 = vcmask 400648
      %582 = vst.msk [vmem:[#allocation2 + $0x18] sm:$0xff] %vm581, %v576
      %583 = vst.msk [vmem:[#allocation2 + $0x40] sm:$0xff] %vm581, %v578
      %v584 = vld [vmem:[#allocation2 + $0x8] sm:$0xff]
      %v585 = vld [vmem:[#allocation2 + $0x10] sm:$0xff]
      %v586 = vld [vmem:[#allocation2 + $0x18] sm:$0xff]
      %v587 = vld [vmem:[#allocation2 + $0x30] sm:$0xff]
      %v588 = vld [vmem:[#allocation2 + $0x38] sm:$0xff]
      %v589 = vld [vmem:[#allocation2 + $0x40] sm:$0xff]
      %v590 = vld [vmem:[%s2] sm:$0xff]
      %v591 = vld [vmem:[%s2 + $0x8] sm:$0xff]
      %v592 = vld [vmem:[%s2 + $0x10] sm:$0xff]
      %v593 = vld [vmem:[%s2 + $0x18] sm:$0xff]
      %v594 = vld [vmem:[%s3] sm:$0xff]
      %v595 = vld [vmem:[%s3 + $0x8] sm:$0xff]
      %596 = vst [vmem:[#allocation2 + $0x8] sm:$0xff] %v584
      %597 = vst [vmem:[#allocation2 + $0x10] sm:$0xff] %v585
      %598 = vst.msk [vmem:[#allocation2 + $0x18] sm:$0xff] %vm419, %v586
      %599 = vst [vmem:[#allocation2 + $0x30] sm:$0xff] %v587
      %600 = vst [vmem:[#allocation2 + $0x38] sm:$0xff] %v588
      %601 = vst.msk [vmem:[#allocation2 + $0x40] sm:$0xff] %vm419, %v589
      %v602 = vld [vmem:[#allocation2] sm:$0xff]
      %v603 = vld [vmem:[#allocation2 + $0x8] sm:$0xff]
      %v604 = vld [vmem:[#allocation2 + $0x10] sm:$0xff]
      %v605 = vld [vmem:[#allocation2 + $0x18] sm:$0xff]
      %v606 = vld [vmem:[#allocation2 + $0x28] sm:$0xff]
      %v607 = vld [vmem:[#allocation2 + $0x30] sm:$0xff]
      %v608 = vld [vmem:[#allocation2 + $0x38] sm:$0xff]
      %v609 = vld [vmem:[#allocation2 + $0x40] sm:$0xff]
      %618 = vrot.lane.b32.xlu0 %v602, 127
      %v619 = vpop.permute.xlu0 %618
      %620 = vrot.lane.b32.xlu0 %v603, 127
      %v621 = vpop.permute.xlu0 %620
      %622 = vrot.lane.b32.xlu0 %v604, 127
      %v623 = vpop.permute.xlu0 %622
      %624 = vrot.lane.b32.xlu0 %v605, 127
      %v625 = vpop.permute.xlu0 %624
      %626 = vrot.lane.b32.xlu0 %v606, 127
      %v627 = vpop.permute.xlu0 %626
      %628 = vrot.lane.b32.xlu0 %v607, 127
      %v629 = vpop.permute.xlu0 %628
      %630 = vrot.lane.b32.xlu0 %v608, 127
      %v631 = vpop.permute.xlu0 %630
      %632 = vrot.lane.b32.xlu0 %v609, 127
      %v633 = vpop.permute.xlu0 %632
      %vm634 = vcmask 1039360
      %v635 = vsel %vm634, %v619, %v621
      %v636 = vsel %vm634, %v621, %v623
      %v637 = vsel %vm634, %v623, %v625
      %v638 = vsel %vm634, %v627, %v629
      %v639 = vsel %vm634, %v629, %v631
      %v640 = vsel %vm634, %v631, %v633
      %641 = vrot.lane.b32.xlu0 %v602, 126
      %v642 = vpop.permute.xlu0 %641
      %643 = vrot.lane.b32.xlu0 %v603, 126
      %v644 = vpop.permute.xlu0 %643
      %645 = vrot.lane.b32.xlu0 %v604, 126
      %v646 = vpop.permute.xlu0 %645
      %647 = vrot.lane.b32.xlu0 %v605, 126
      %v648 = vpop.permute.xlu0 %647
      %649 = vrot.lane.b32.xlu0 %v606, 126
      %v650 = vpop.permute.xlu0 %649
      %651 = vrot.lane.b32.xlu0 %v607, 126
      %v652 = vpop.permute.xlu0 %651
      %653 = vrot.lane.b32.xlu0 %v608, 126
      %v654 = vpop.permute.xlu0 %653
      %655 = vrot.lane.b32.xlu0 %v609, 126
      %v656 = vpop.permute.xlu0 %655
      %vm657 = vcmask 1031168
      %v658 = vsel %vm657, %v642, %v644
      %v659 = vsel %vm657, %v644, %v646
      %v660 = vsel %vm657, %v646, %v648
      %v661 = vsel %vm657, %v650, %v652
      %v662 = vsel %vm657, %v652, %v654
      %v663 = vsel %vm657, %v654, %v656
      %664 = vrot.lane.b32.xlu0 %v602, 110
      %v665 = vpop.permute.xlu0 %664
      %666 = vrot.lane.b32.xlu0 %v603, 110
      %v667 = vpop.permute.xlu0 %666
      %668 = vrot.lane.b32.xlu0 %v604, 110
      %v669 = vpop.permute.xlu0 %668
      %670 = vrot.lane.b32.xlu0 %v605, 110
      %v671 = vpop.permute.xlu0 %670
      %672 = vrot.lane.b32.xlu0 %v606, 110
      %v673 = vpop.permute.xlu0 %672
      %674 = vrot.lane.b32.xlu0 %v607, 110
      %v675 = vpop.permute.xlu0 %674
      %676 = vrot.lane.b32.xlu0 %v608, 110
      %v677 = vpop.permute.xlu0 %676
      %678 = vrot.lane.b32.xlu0 %v609, 110
      %v679 = vpop.permute.xlu0 %678
      %vm680 = vcmask 900096
      %v681 = vsel %vm680, %v665, %v667
      %v682 = vsel %vm680, %v667, %v669
      %v683 = vsel %vm680, %v669, %v671
      %v684 = vsel %vm680, %v673, %v675
      %v685 = vsel %vm680, %v675, %v677
      %v686 = vsel %vm680, %v677, %v679
      %687 = vrot.lane.b32.xlu0 %v603, 109
      %v688 = vpop.permute.xlu0 %687
      %689 = vrot.lane.b32.xlu0 %v604, 109
      %v690 = vpop.permute.xlu0 %689
      %691 = vrot.lane.b32.xlu0 %v605, 109
      %v692 = vpop.permute.xlu0 %691
      %693 = vrot.lane.b32.xlu0 %v607, 109
      %v694 = vpop.permute.xlu0 %693
      %695 = vrot.lane.b32.xlu0 %v608, 109
      %v696 = vpop.permute.xlu0 %695
      %697 = vrot.lane.b32.xlu0 %v609, 109
      %v698 = vpop.permute.xlu0 %697
      %vm699 = vcmask 891904
      %v700 = vsel %vm699, %v688, %v690
      %v701 = vsel %vm699, %v690, %v692
      %v702 = vsel %vm699, %v694, %v696
      %v703 = vsel %vm699, %v696, %v698
      %704 = vrot.lane.b32.xlu0 %v603, 108
      %v705 = vpop.permute.xlu0 %704
      %706 = vrot.lane.b32.xlu0 %v604, 108
      %v707 = vpop.permute.xlu0 %706
      %708 = vrot.lane.b32.xlu0 %v605, 108
      %v709 = vpop.permute.xlu0 %708
      %710 = vrot.lane.b32.xlu0 %v607, 108
      %v711 = vpop.permute.xlu0 %710
      %712 = vrot.lane.b32.xlu0 %v608, 108
      %v713 = vpop.permute.xlu0 %712
      %714 = vrot.lane.b32.xlu0 %v609, 108
      %v715 = vpop.permute.xlu0 %714
      %vm716 = vcmask 883712
      %v717 = vsel %vm716, %v705, %v707
      %v718 = vsel %vm716, %v707, %v709
      %v719 = vsel %vm716, %v711, %v713
      %v720 = vsel %vm716, %v713, %v715
      %721 = vrot.lane.b32.xlu0 %v603, 92
      %v722 = vpop.permute.xlu0 %721
      %723 = vrot.lane.b32.xlu0 %v604, 92
      %v724 = vpop.permute.xlu0 %723
      %725 = vrot.lane.b32.xlu0 %v605, 92
      %v726 = vpop.permute.xlu0 %725
      %727 = vrot.lane.b32.xlu0 %v607, 92
      %v728 = vpop.permute.xlu0 %727
      %729 = vrot.lane.b32.xlu0 %v608, 92
      %v730 = vpop.permute.xlu0 %729
      %731 = vrot.lane.b32.xlu0 %v609, 92
      %v732 = vpop.permute.xlu0 %731
      %vm733 = vcmask 752640
      %v734 = vsel %vm733, %v722, %v724
      %v735 = vsel %vm733, %v724, %v726
      %v736 = vsel %vm733, %v728, %v730
      %v737 = vsel %vm733, %v730, %v732
      %738 = vrot.lane.b32.xlu0 %v603, 91
      %v739 = vpop.permute.xlu0 %738
      %740 = vrot.lane.b32.xlu0 %v604, 91
      %v741 = vpop.permute.xlu0 %740
      %742 = vrot.lane.b32.xlu0 %v605, 91
      %v743 = vpop.permute.xlu0 %742
      %744 = vrot.lane.b32.xlu0 %v607, 91
      %v745 = vpop.permute.xlu0 %744
      %746 = vrot.lane.b32.xlu0 %v608, 91
      %v747 = vpop.permute.xlu0 %746
      %748 = vrot.lane.b32.xlu0 %v609, 91
      %v749 = vpop.permute.xlu0 %748
      %vm750 = vcmask 744448
      %v751 = vsel %vm750, %v739, %v741
      %v752 = vsel %vm750, %v741, %v743
      %v753 = vsel %vm750, %v745, %v747
      %v754 = vsel %vm750, %v747, %v749
      %755 = vrot.lane.b32.xlu0 %v603, 90
      %v756 = vpop.permute.xlu0 %755
      %757 = vrot.lane.b32.xlu0 %v604, 90
      %v758 = vpop.permute.xlu0 %757
      %759 = vrot.lane.b32.xlu0 %v605, 90
      %v760 = vpop.permute.xlu0 %759
      %761 = vrot.lane.b32.xlu0 %v607, 90
      %v762 = vpop.permute.xlu0 %761
      %763 = vrot.lane.b32.xlu0 %v608, 90
      %v764 = vpop.permute.xlu0 %763
      %765 = vrot.lane.b32.xlu0 %v609, 90
      %v766 = vpop.permute.xlu0 %765
      %vm767 = vcmask 736256
      %v768 = vsel %vm767, %v756, %v758
      %v769 = vsel %vm767, %v758, %v760
      %v770 = vsel %vm767, %v762, %v764
      %v771 = vsel %vm767, %v764, %v766
      %773 = vset.pattern.permute.xlu0 0
      %774 = vperm.xlu0 %773, %v594
      %v775 = vpop.permute.xlu0 %774
      %778 = vset.pattern.permute.xlu0 0
      %779 = vperm.xlu0 %778, %v595
      %v780 = vpop.permute.xlu0 %779
      %782 = vrot.lane.b32.xlu0 %v602, 19
      %v783 = vpop.permute.xlu0 %782
      %784 = vrot.lane.b32.xlu0 %v603, 19
      %v785 = vpop.permute.xlu0 %784
      %786 = vrot.lane.b32.xlu0 %v604, 19
      %v787 = vpop.permute.xlu0 %786
      %788 = vrot.lane.b32.xlu0 %v605, 19
      %v789 = vpop.permute.xlu0 %788
      %790 = vrot.lane.b32.xlu0 %v606, 19
      %v791 = vpop.permute.xlu0 %790
      %792 = vrot.lane.b32.xlu0 %v607, 19
      %v793 = vpop.permute.xlu0 %792
      %794 = vrot.lane.b32.xlu0 %v608, 19
      %v795 = vpop.permute.xlu0 %794
      %796 = vrot.lane.b32.xlu0 %v609, 19
      %v797 = vpop.permute.xlu0 %796
      %798 = vrot.lane.b32.xlu0 %v635, 19
      %v799 = vpop.permute.xlu0 %798
      %800 = vrot.lane.b32.xlu0 %v636, 19
      %v801 = vpop.permute.xlu0 %800
      %802 = vrot.lane.b32.xlu0 %v637, 19
      %v803 = vpop.permute.xlu0 %802
      %804 = vrot.lane.b32.xlu0 %v625, 19
      %v805 = vpop.permute.xlu0 %804
      %806 = vrot.lane.b32.xlu0 %v638, 19
      %v807 = vpop.permute.xlu0 %806
      %808 = vrot.lane.b32.xlu0 %v639, 19
      %v809 = vpop.permute.xlu0 %808
      %810 = vrot.lane.b32.xlu0 %v640, 19
      %v811 = vpop.permute.xlu0 %810
      %812 = vrot.lane.b32.xlu0 %v633, 19
      %v813 = vpop.permute.xlu0 %812
      %814 = vrot.lane.b32.xlu0 %v658, 19
      %v815 = vpop.permute.xlu0 %814
      %816 = vrot.lane.b32.xlu0 %v659, 19
      %v817 = vpop.permute.xlu0 %816
      %818 = vrot.lane.b32.xlu0 %v660, 19
      %v819 = vpop.permute.xlu0 %818
      %820 = vrot.lane.b32.xlu0 %v648, 19
      %v821 = vpop.permute.xlu0 %820
      %822 = vrot.lane.b32.xlu0 %v661, 19
      %v823 = vpop.permute.xlu0 %822
      %824 = vrot.lane.b32.xlu0 %v662, 19
      %v825 = vpop.permute.xlu0 %824
      %826 = vrot.lane.b32.xlu0 %v663, 19
      %v827 = vpop.permute.xlu0 %826
      %828 = vrot.lane.b32.xlu0 %v656, 19
      %v829 = vpop.permute.xlu0 %828
      %830 = vrot.lane.b32.xlu0 %v681, 19
      %v831 = vpop.permute.xlu0 %830
      %832 = vrot.lane.b32.xlu0 %v682, 19
      %v833 = vpop.permute.xlu0 %832
      %834 = vrot.lane.b32.xlu0 %v683, 19
      %v835 = vpop.permute.xlu0 %834
      %836 = vrot.lane.b32.xlu0 %v671, 19
      %v837 = vpop.permute.xlu0 %836
      %838 = vrot.lane.b32.xlu0 %v684, 19
      %v839 = vpop.permute.xlu0 %838
      %840 = vrot.lane.b32.xlu0 %v685, 19
      %v841 = vpop.permute.xlu0 %840
      %842 = vrot.lane.b32.xlu0 %v686, 19
      %v843 = vpop.permute.xlu0 %842
      %844 = vrot.lane.b32.xlu0 %v679, 19
      %v845 = vpop.permute.xlu0 %844
      %846 = vrot.lane.b32.xlu0 %v688, 19
      %v847 = vpop.permute.xlu0 %846
      %848 = vrot.lane.b32.xlu0 %v700, 19
      %v849 = vpop.permute.xlu0 %848
      %850 = vrot.lane.b32.xlu0 %v701, 19
      %v851 = vpop.permute.xlu0 %850
      %852 = vrot.lane.b32.xlu0 %v692, 19
      %v853 = vpop.permute.xlu0 %852
      %854 = vrot.lane.b32.xlu0 %v694, 19
      %v855 = vpop.permute.xlu0 %854
      %856 = vrot.lane.b32.xlu0 %v702, 19
      %v857 = vpop.permute.xlu0 %856
      %858 = vrot.lane.b32.xlu0 %v703, 19
      %v859 = vpop.permute.xlu0 %858
      %860 = vrot.lane.b32.xlu0 %v698, 19
      %v861 = vpop.permute.xlu0 %860
      %862 = vrot.lane.b32.xlu0 %v705, 19
      %v863 = vpop.permute.xlu0 %862
      %864 = vrot.lane.b32.xlu0 %v717, 19
      %v865 = vpop.permute.xlu0 %864
      %866 = vrot.lane.b32.xlu0 %v718, 19
      %v867 = vpop.permute.xlu0 %866
      %868 = vrot.lane.b32.xlu0 %v709, 19
      %v869 = vpop.permute.xlu0 %868
      %870 = vrot.lane.b32.xlu0 %v711, 19
      %v871 = vpop.permute.xlu0 %870
      %872 = vrot.lane.b32.xlu0 %v719, 19
      %v873 = vpop.permute.xlu0 %872
      %874 = vrot.lane.b32.xlu0 %v720, 19
      %v875 = vpop.permute.xlu0 %874
      %876 = vrot.lane.b32.xlu0 %v715, 19
      %v877 = vpop.permute.xlu0 %876
      %878 = vrot.lane.b32.xlu0 %v722, 19
      %v879 = vpop.permute.xlu0 %878
      %880 = vrot.lane.b32.xlu0 %v734, 19
      %v881 = vpop.permute.xlu0 %880
      %882 = vrot.lane.b32.xlu0 %v735, 19
      %v883 = vpop.permute.xlu0 %882
      %884 = vrot.lane.b32.xlu0 %v726, 19
      %v885 = vpop.permute.xlu0 %884
      %886 = vrot.lane.b32.xlu0 %v728, 19
      %v887 = vpop.permute.xlu0 %886
      %888 = vrot.lane.b32.xlu0 %v736, 19
      %v889 = vpop.permute.xlu0 %888
      %890 = vrot.lane.b32.xlu0 %v737, 19
      %v891 = vpop.permute.xlu0 %890
      %892 = vrot.lane.b32.xlu0 %v732, 19
      %v893 = vpop.permute.xlu0 %892
      %894 = vrot.lane.b32.xlu0 %v739, 19
      %v895 = vpop.permute.xlu0 %894
      %896 = vrot.lane.b32.xlu0 %v751, 19
      %v897 = vpop.permute.xlu0 %896
      %898 = vrot.lane.b32.xlu0 %v752, 19
      %v899 = vpop.permute.xlu0 %898
      %900 = vrot.lane.b32.xlu0 %v743, 19
      %v901 = vpop.permute.xlu0 %900
      %902 = vrot.lane.b32.xlu0 %v745, 19
      %v903 = vpop.permute.xlu0 %902
      %904 = vrot.lane.b32.xlu0 %v753, 19
      %v905 = vpop.permute.xlu0 %904
      %906 = vrot.lane.b32.xlu0 %v754, 19
      %v907 = vpop.permute.xlu0 %906
      %908 = vrot.lane.b32.xlu0 %v749, 19
      %v909 = vpop.permute.xlu0 %908
      %910 = vrot.lane.b32.xlu0 %v756, 19
      %v911 = vpop.permute.xlu0 %910
      %912 = vrot.lane.b32.xlu0 %v768, 19
      %v913 = vpop.permute.xlu0 %912
      %914 = vrot.lane.b32.xlu0 %v769, 19
      %v915 = vpop.permute.xlu0 %914
      %916 = vrot.lane.b32.xlu0 %v760, 19
      %v917 = vpop.permute.xlu0 %916
      %918 = vrot.lane.b32.xlu0 %v762, 19
      %v919 = vpop.permute.xlu0 %918
      %920 = vrot.lane.b32.xlu0 %v770, 19
      %v921 = vpop.permute.xlu0 %920
      %922 = vrot.lane.b32.xlu0 %v771, 19
      %v923 = vpop.permute.xlu0 %922
      %924 = vrot.lane.b32.xlu0 %v766, 19
      %v925 = vpop.permute.xlu0 %924
      %vm926 = vcmask 154624
      %v927 = vsel %vm926, %v783, %v785
      %v928 = vsel %vm926, %v785, %v787
      %v929 = vsel %vm926, %v787, %v789
      %v930 = vsel %vm926, %v791, %v793
      %v931 = vsel %vm926, %v793, %v795
      %v932 = vsel %vm926, %v795, %v797
      %v933 = vsel %vm926, %v799, %v801
      %v934 = vsel %vm926, %v801, %v803
      %v935 = vsel %vm926, %v803, %v805
      %v936 = vsel %vm926, %v807, %v809
      %v937 = vsel %vm926, %v809, %v811
      %v938 = vsel %vm926, %v811, %v813
      %v939 = vsel %vm926, %v815, %v817
      %v940 = vsel %vm926, %v817, %v819
      %v941 = vsel %vm926, %v819, %v821
      %v942 = vsel %vm926, %v823, %v825
      %v943 = vsel %vm926, %v825, %v827
      %v944 = vsel %vm926, %v827, %v829
      %v945 = vsel %vm926, %v831, %v833
      %v946 = vsel %vm926, %v833, %v835
      %v947 = vsel %vm926, %v835, %v837
      %v948 = vsel %vm926, %v839, %v841
      %v949 = vsel %vm926, %v841, %v843
      %v950 = vsel %vm926, %v843, %v845
      %v951 = vsel %vm926, %v847, %v849
      %v952 = vsel %vm926, %v849, %v851
      %v953 = vsel %vm926, %v851, %v853
      %v954 = vsel %vm926, %v855, %v857
      %v955 = vsel %vm926, %v857, %v859
      %v956 = vsel %vm926, %v859, %v861
      %v957 = vsel %vm926, %v863, %v865
      %v958 = vsel %vm926, %v865, %v867
      %v959 = vsel %vm926, %v867, %v869
      %v960 = vsel %vm926, %v871, %v873
      %v961 = vsel %vm926, %v873, %v875
      %v962 = vsel %vm926, %v875, %v877
      %v963 = vsel %vm926, %v879, %v881
      %v964 = vsel %vm926, %v881, %v883
      %v965 = vsel %vm926, %v883, %v885
      %v966 = vsel %vm926, %v887, %v889
      %v967 = vsel %vm926, %v889, %v891
      %v968 = vsel %vm926, %v891, %v893
      %v969 = vsel %vm926, %v895, %v897
      %v970 = vsel %vm926, %v897, %v899
      %v971 = vsel %vm926, %v899, %v901
      %v972 = vsel %vm926, %v903, %v905
      %v973 = vsel %vm926, %v905, %v907
      %v974 = vsel %vm926, %v907, %v909
      %v975 = vsel %vm926, %v911, %v913
      %v976 = vsel %vm926, %v913, %v915
      %v977 = vsel %vm926, %v915, %v917
      %v978 = vsel %vm926, %v919, %v921
      %v979 = vsel %vm926, %v921, %v923
      %v980 = vsel %vm926, %v923, %v925
      %vm1035 = vcmask 130048
      %v1037 = vsel %vm1035, %v591, 0
      %v1040 = vsel %vm1035, %v593, 0
      %1042 = vmatprep.subr.mxu0 %v973
      %1043 = vmatpush1.msra.mxu0 %v972
      %1044 = vmatprep.subr.mxu0 %v970
      %1045 = vmatpush1.msra.mxu0 %v969
      %1046 = vmatprep.subr.mxu0 %v967
      %1047 = vmatpush1.msra.mxu0 %v966
      %1048 = vmatprep.subr.mxu0 %v964
      %1049 = vmatpush1.msra.mxu0 %v963
      %1050 = vmatprep.subr.mxu0 %v961
      %1051 = vmatpush1.msra.mxu0 %v960
      %1052 = vmatprep.subr.mxu0 %v958
      %1053 = vmatpush1.msra.mxu0 %v957
      %1054 = vmatprep.subr.mxu0 %v955
      %1055 = vmatpush1.msra.mxu0 %v954
      %1056 = vmatprep.subr.mxu0 %v952
      %1057 = vmatpush1.msra.mxu0 %v951
      %1058 = vmatprep.subr.mxu0 %v949
      %1059 = vmatpush1.msra.mxu0 %v948
      %1060 = vmatprep.subr.mxu0 %v946
      %1061 = vmatpush1.msra.mxu0 %v945
      %1062 = vmatprep.subr.mxu0 %v943
      %1063 = vmatpush1.msra.mxu0 %v942
      %1064 = vmatprep.subr.mxu0 %v940
      %1065 = vmatpush1.msra.mxu0 %v939
      %1066 = vmatprep.subr.mxu0 %v937
      %1067 = vmatpush1.msra.mxu0 %v936
      %1068 = vmatprep.subr.mxu0 %v934
      %1069 = vmatpush1.msra.mxu0 %v933
      %1070 = vmatprep.subr.mxu0 %v931
      %1071 = vmatpush1.msra.mxu0 %v930
      %1072 = vmatprep.subr.mxu0 %v928
      %1073 = vmatpush1.msra.mxu0 %v927
      %1074 = vmatprep.subr.mxu0 0.0
      %1075 = vmatpush2.msra.mxu0 0.0
      %1076 = vmatprep.subr.mxu0 0.0
      %1077 = vmatpush2.msra.mxu0 0.0
      %1078 = vmatprep.subr.mxu0 0.0
      %1079 = vmatpush2.msra.mxu0 0.0
      %1080 = vmatprep.subr.mxu0 0.0
      %1081 = vmatpush2.msra.mxu0 0.0
      %1082 = vmatprep.subr.mxu0 0.0
      %1083 = vmatpush2.msra.mxu0 0.0
      %1084 = vmatprep.subr.mxu0 0.0
      %1085 = vmatpush2.msra.mxu0 0.0
      %1086 = vmatprep.subr.mxu0 0.0
      %1087 = vmatpush2.msra.mxu0 0.0
      %1088 = vmatprep.subr.mxu0 0.0
      %1089 = vmatpush2.msra.mxu0 0.0
      %1090 = vmatprep.subr.mxu0 0.0
      %1091 = vmatpush2.msra.mxu0 0.0
      %1092 = vmatprep.subr.mxu0 0.0
      %1093 = vmatpush2.msra.mxu0 0.0
      %1094 = vmatprep.subr.mxu0 0.0
      %1095 = vmatpush2.msra.mxu0 0.0
      %1096 = vmatprep.subr.mxu0 0.0
      %1097 = vmatpush2.msra.mxu0 0.0
      %1098 = vmatprep.subr.mxu0 0.0
      %1099 = vmatpush2.msra.mxu0 0.0
      %1100 = vmatprep.subr.mxu0 0.0
      %1101 = vmatpush2.msra.mxu0 0.0
      %1102 = vmatprep.subr.mxu0 %v979
      %1103 = vmatpush2.msra.mxu0 %v978
      %1104 = vmatprep.subr.mxu0 %v976
      %1105 = vmatpush2.msra.mxu0 %v975
      %1106 = vmatprep.mubr.f32.mxu0 %v1037
      %1107 = vmatmul.mubr.f32.gmra.mxu0 %v590
      %v1108 = vpop.f32.mrf.mxu0
      %v1109 = vadd.f32 %v775, %v1108
      %v1110 = vpop.f32.mrf.mxu0
      %v1111 = vadd.f32 %v775, %v1110
      %1112 = vmatprep.mubr.f32.mxu0 %v1040
      %1113 = vmatmul.mubr.f32.gmra.mxu0 %v592
      %v1114 = vpop.f32.mrf.mxu0
      %v1115 = vadd.f32 %v780, %v1114
      %v1116 = vpop.f32.mrf.mxu0
      %v1117 = vadd.f32 %v780, %v1116
      %1118 = vdwg.mxu0
      %1119 = vmatprep.subr.mxu0 0.0
      %1120 = vmatpush1.msra.mxu0 %v974
      %1121 = vmatprep.subr.mxu0 0.0
      %1122 = vmatpush1.msra.mxu0 %v971
      %1123 = vmatprep.subr.mxu0 0.0
      %1124 = vmatpush1.msra.mxu0 %v968
      %1125 = vmatprep.subr.mxu0 0.0
      %1126 = vmatpush1.msra.mxu0 %v965
      %1127 = vmatprep.subr.mxu0 0.0
      %1128 = vmatpush1.msra.mxu0 %v962
      %1129 = vmatprep.subr.mxu0 0.0
      %1130 = vmatpush1.msra.mxu0 %v959
      %1131 = vmatprep.subr.mxu0 0.0
      %1132 = vmatpush1.msra.mxu0 %v956
      %1133 = vmatprep.subr.mxu0 0.0
      %1134 = vmatpush1.msra.mxu0 %v953
      %1135 = vmatprep.subr.mxu0 0.0
      %1136 = vmatpush1.msra.mxu0 %v950
      %1137 = vmatprep.subr.mxu0 0.0
      %1138 = vmatpush1.msra.mxu0 %v947
      %1139 = vmatprep.subr.mxu0 0.0
      %1140 = vmatpush1.msra.mxu0 %v944
      %1141 = vmatprep.subr.mxu0 0.0
      %1142 = vmatpush1.msra.mxu0 %v941
      %1143 = vmatprep.subr.mxu0 0.0
      %1144 = vmatpush1.msra.mxu0 %v938
      %1145 = vmatprep.subr.mxu0 0.0
      %1146 = vmatpush1.msra.mxu0 %v935
      %1147 = vmatprep.subr.mxu0 0.0
      %1148 = vmatpush1.msra.mxu0 %v932
      %1149 = vmatprep.subr.mxu0 0.0
      %1150 = vmatpush1.msra.mxu0 %v929
      %1151 = vmatprep.subr.mxu0 0.0
      %1152 = vmatpush2.msra.mxu0 0.0
      %1153 = vmatprep.subr.mxu0 0.0
      %1154 = vmatpush2.msra.mxu0 0.0
      %1155 = vmatprep.subr.mxu0 0.0
      %1156 = vmatpush2.msra.mxu0 0.0
      %1157 = vmatprep.subr.mxu0 0.0
      %1158 = vmatpush2.msra.mxu0 0.0
      %1159 = vmatprep.subr.mxu0 0.0
      %1160 = vmatpush2.msra.mxu0 0.0
      %1161 = vmatprep.subr.mxu0 0.0
      %1162 = vmatpush2.msra.mxu0 0.0
      %1163 = vmatprep.subr.mxu0 0.0
      %1164 = vmatpush2.msra.mxu0 0.0
      %1165 = vmatprep.subr.mxu0 0.0
      %1166 = vmatpush2.msra.mxu0 0.0
      %1167 = vmatprep.subr.mxu0 0.0
      %1168 = vmatpush2.msra.mxu0 0.0
      %1169 = vmatprep.subr.mxu0 0.0
      %1170 = vmatpush2.msra.mxu0 0.0
      %1171 = vmatprep.subr.mxu0 0.0
      %1172 = vmatpush2.msra.mxu0 0.0
      %1173 = vmatprep.subr.mxu0 0.0
      %1174 = vmatpush2.msra.mxu0 0.0
      %1175 = vmatprep.subr.mxu0 0.0
      %1176 = vmatpush2.msra.mxu0 0.0
      %1177 = vmatprep.subr.mxu0 0.0
      %1178 = vmatpush2.msra.mxu0 0.0
      %1179 = vmatprep.subr.mxu0 0.0
      %1180 = vmatpush2.msra.mxu0 %v980
      %1181 = vmatprep.subr.mxu0 0.0
      %1182 = vmatpush2.msra.mxu0 %v977
      %1183 = vmatprep.mubr.f32.mxu0 %v1037
      %1184 = vmatmul.mubr.f32.gmra.mxu0 %v590
      %v1185 = vpop.f32.mrf.mxu0
      %v1186 = vadd.f32 %v775, %v1185
      %v1187 = vpop.f32.mrf.mxu0
      %1188 = vmatprep.mubr.f32.mxu0 %v1040
      %1189 = vmatmul.mubr.f32.gmra.mxu0 %v592
      %v1190 = vpop.f32.mrf.mxu0
      %v1191 = vadd.f32 %v780, %v1190
      %v1192 = vpop.f32.mrf.mxu0
      %1193 = vdwg.mxu0
      %v1195 = vlaneseq
      %v1196 = vshrl.u32 %v1195, 7
      %v1197 = vsub.s32 0, %v1196
      %v1198 = vrot.slane %v414, %v1197
      %v1199 = vlaneseq
      %v1200 = vshrl.u32 %v1199, 7
      %v1201 = vsub.s32 1, %v1200
      %v1202 = vrot.slane %v414, %v1201
      %v1203 = vlaneseq
      %v1204 = vshrl.u32 %v1203, 7
      %v1205 = vsub.s32 2, %v1204
      %v1206 = vrot.slane %v414, %v1205
      %v1210 = vmul.f32 %v1109, %v1198
      %v1211 = vmul.f32 %v1111, %v1202
      %v1212 = vmul.f32 %v1186, %v1206
      %v1213 = vmul.f32 %v1115, %v1198
      %v1214 = vmul.f32 %v1117, %v1202
      %v1215 = vmul.f32 %v1191, %v1206
      %v1216 = vmax.f32 %v1210, 0.0
      %v1217 = vmax.f32 %v1211, 0.0
      %v1218 = vmax.f32 %v1212, 0.0
      %v1219 = vmax.f32 %v1213, 0.0
      %v1220 = vmax.f32 %v1214, 0.0
      %v1221 = vmax.f32 %v1215, 0.0
      %v1222 = vld [vmem:[%s4] sm:$0xff]
      %v1223 = vld [vmem:[%s4 + $0x8] sm:$0xff]
      %v1224 = vld [vmem:[%s4 + $0x10] sm:$0xff]
      %v1225 = vld [vmem:[%s4 + $0x18] sm:$0xff]
      %v1226 = vld [vmem:[%s5] sm:$0xff]
      %v1227 = vld [vmem:[%s5 + $0x8] sm:$0xff]
      %1228 = vst [vmem:[#allocation2 + $0x8] sm:$0xff] %v1216
      %1229 = vst [vmem:[#allocation2 + $0x10] sm:$0xff] %v1217
      %1230 = vst.msk [vmem:[#allocation2 + $0x18] sm:$0xff] %vm419, %v1218
      %1231 = vst [vmem:[#allocation2 + $0x30] sm:$0xff] %v1219
      %1232 = vst [vmem:[#allocation2 + $0x38] sm:$0xff] %v1220
      %1233 = vst.msk [vmem:[#allocation2 + $0x40] sm:$0xff] %vm419, %v1221
      %v1234 = vld [vmem:[#allocation2] sm:$0xff]
      %v1235 = vld [vmem:[#allocation2 + $0x8] sm:$0xff]
      %v1236 = vld [vmem:[#allocation2 + $0x10] sm:$0xff]
      %v1237 = vld [vmem:[#allocation2 + $0x18] sm:$0xff]
      %v1238 = vld [vmem:[#allocation2 + $0x28] sm:$0xff]
      %v1239 = vld [vmem:[#allocation2 + $0x30] sm:$0xff]
      %v1240 = vld [vmem:[#allocation2 + $0x38] sm:$0xff]
      %v1241 = vld [vmem:[#allocation2 + $0x40] sm:$0xff]
      %1250 = vrot.lane.b32.xlu0 %v1234, 127
      %v1251 = vpop.permute.xlu0 %1250
      %1252 = vrot.lane.b32.xlu0 %v1235, 127
      %v1253 = vpop.permute.xlu0 %1252
      %1254 = vrot.lane.b32.xlu0 %v1236, 127
      %v1255 = vpop.permute.xlu0 %1254
      %1256 = vrot.lane.b32.xlu0 %v1237, 127
      %v1257 = vpop.permute.xlu0 %1256
      %1258 = vrot.lane.b32.xlu0 %v1238, 127
      %v1259 = vpop.permute.xlu0 %1258
      %1260 = vrot.lane.b32.xlu0 %v1239, 127
      %v1261 = vpop.permute.xlu0 %1260
      %1262 = vrot.lane.b32.xlu0 %v1240, 127
      %v1263 = vpop.permute.xlu0 %1262
      %1264 = vrot.lane.b32.xlu0 %v1241, 127
      %v1265 = vpop.permute.xlu0 %1264
      %v1266 = vsel %vm634, %v1251, %v1253
      %v1267 = vsel %vm634, %v1253, %v1255
      %v1268 = vsel %vm634, %v1255, %v1257
      %v1269 = vsel %vm634, %v1259, %v1261
      %v1270 = vsel %vm634, %v1261, %v1263
      %v1271 = vsel %vm634, %v1263, %v1265
      %1272 = vrot.lane.b32.xlu0 %v1234, 126
      %v1273 = vpop.permute.xlu0 %1272
      %1274 = vrot.lane.b32.xlu0 %v1235, 126
      %v1275 = vpop.permute.xlu0 %1274
      %1276 = vrot.lane.b32.xlu0 %v1236, 126
      %v1277 = vpop.permute.xlu0 %1276
      %1278 = vrot.lane.b32.xlu0 %v1237, 126
      %v1279 = vpop.permute.xlu0 %1278
      %1280 = vrot.lane.b32.xlu0 %v1238, 126
      %v1281 = vpop.permute.xlu0 %1280
      %1282 = vrot.lane.b32.xlu0 %v1239, 126
      %v1283 = vpop.permute.xlu0 %1282
      %1284 = vrot.lane.b32.xlu0 %v1240, 126
      %v1285 = vpop.permute.xlu0 %1284
      %1286 = vrot.lane.b32.xlu0 %v1241, 126
      %v1287 = vpop.permute.xlu0 %1286
      %v1288 = vsel %vm657, %v1273, %v1275
      %v1289 = vsel %vm657, %v1275, %v1277
      %v1290 = vsel %vm657, %v1277, %v1279
      %v1291 = vsel %vm657, %v1281, %v1283
      %v1292 = vsel %vm657, %v1283, %v1285
      %v1293 = vsel %vm657, %v1285, %v1287
      %1294 = vrot.lane.b32.xlu0 %v1234, 110
      %v1295 = vpop.permute.xlu0 %1294
      %1296 = vrot.lane.b32.xlu0 %v1235, 110
      %v1297 = vpop.permute.xlu0 %1296
      %1298 = vrot.lane.b32.xlu0 %v1236, 110
      %v1299 = vpop.permute.xlu0 %1298
      %1300 = vrot.lane.b32.xlu0 %v1237, 110
      %v1301 = vpop.permute.xlu0 %1300
      %1302 = vrot.lane.b32.xlu0 %v1238, 110
      %v1303 = vpop.permute.xlu0 %1302
      %1304 = vrot.lane.b32.xlu0 %v1239, 110
      %v1305 = vpop.permute.xlu0 %1304
      %1306 = vrot.lane.b32.xlu0 %v1240, 110
      %v1307 = vpop.permute.xlu0 %1306
      %1308 = vrot.lane.b32.xlu0 %v1241, 110
      %v1309 = vpop.permute.xlu0 %1308
      %v1310 = vsel %vm680, %v1295, %v1297
      %v1311 = vsel %vm680, %v1297, %v1299
      %v1312 = vsel %vm680, %v1299, %v1301
      %v1313 = vsel %vm680, %v1303, %v1305
      %v1314 = vsel %vm680, %v1305, %v1307
      %v1315 = vsel %vm680, %v1307, %v1309
      %1316 = vrot.lane.b32.xlu0 %v1235, 109
      %v1317 = vpop.permute.xlu0 %1316
      %1318 = vrot.lane.b32.xlu0 %v1236, 109
      %v1319 = vpop.permute.xlu0 %1318
      %1320 = vrot.lane.b32.xlu0 %v1237, 109
      %v1321 = vpop.permute.xlu0 %1320
      %1322 = vrot.lane.b32.xlu0 %v1239, 109
      %v1323 = vpop.permute.xlu0 %1322
      %1324 = vrot.lane.b32.xlu0 %v1240, 109
      %v1325 = vpop.permute.xlu0 %1324
      %1326 = vrot.lane.b32.xlu0 %v1241, 109
      %v1327 = vpop.permute.xlu0 %1326
      %v1328 = vsel %vm699, %v1317, %v1319
      %v1329 = vsel %vm699, %v1319, %v1321
      %v1330 = vsel %vm699, %v1323, %v1325
      %v1331 = vsel %vm699, %v1325, %v1327
      %1332 = vrot.lane.b32.xlu0 %v1235, 108
      %v1333 = vpop.permute.xlu0 %1332
      %1334 = vrot.lane.b32.xlu0 %v1236, 108
      %v1335 = vpop.permute.xlu0 %1334
      %1336 = vrot.lane.b32.xlu0 %v1237, 108
      %v1337 = vpop.permute.xlu0 %1336
      %1338 = vrot.lane.b32.xlu0 %v1239, 108
      %v1339 = vpop.permute.xlu0 %1338
      %1340 = vrot.lane.b32.xlu0 %v1240, 108
      %v1341 = vpop.permute.xlu0 %1340
      %1342 = vrot.lane.b32.xlu0 %v1241, 108
      %v1343 = vpop.permute.xlu0 %1342
      %v1344 = vsel %vm716, %v1333, %v1335
      %v1345 = vsel %vm716, %v1335, %v1337
      %v1346 = vsel %vm716, %v1339, %v1341
      %v1347 = vsel %vm716, %v1341, %v1343
      %1348 = vrot.lane.b32.xlu0 %v1235, 92
      %v1349 = vpop.permute.xlu0 %1348
      %1350 = vrot.lane.b32.xlu0 %v1236, 92
      %v1351 = vpop.permute.xlu0 %1350
      %1352 = vrot.lane.b32.xlu0 %v1237, 92
      %v1353 = vpop.permute.xlu0 %1352
      %1354 = vrot.lane.b32.xlu0 %v1239, 92
      %v1355 = vpop.permute.xlu0 %1354
      %1356 = vrot.lane.b32.xlu0 %v1240, 92
      %v1357 = vpop.permute.xlu0 %1356
      %1358 = vrot.lane.b32.xlu0 %v1241, 92
      %v1359 = vpop.permute.xlu0 %1358
      %v1360 = vsel %vm733, %v1349, %v1351
      %v1361 = vsel %vm733, %v1351, %v1353
      %v1362 = vsel %vm733, %v1355, %v1357
      %v1363 = vsel %vm733, %v1357, %v1359
      %1364 = vrot.lane.b32.xlu0 %v1235, 91
      %v1365 = vpop.permute.xlu0 %1364
      %1366 = vrot.lane.b32.xlu0 %v1236, 91
      %v1367 = vpop.permute.xlu0 %1366
      %1368 = vrot.lane.b32.xlu0 %v1237, 91
      %v1369 = vpop.permute.xlu0 %1368
      %1370 = vrot.lane.b32.xlu0 %v1239, 91
      %v1371 = vpop.permute.xlu0 %1370
      %1372 = vrot.lane.b32.xlu0 %v1240, 91
      %v1373 = vpop.permute.xlu0 %1372
      %1374 = vrot.lane.b32.xlu0 %v1241, 91
      %v1375 = vpop.permute.xlu0 %1374
      %v1376 = vsel %vm750, %v1365, %v1367
      %v1377 = vsel %vm750, %v1367, %v1369
      %v1378 = vsel %vm750, %v1371, %v1373
      %v1379 = vsel %vm750, %v1373, %v1375
      %1380 = vrot.lane.b32.xlu0 %v1235, 90
      %v1381 = vpop.permute.xlu0 %1380
      %1382 = vrot.lane.b32.xlu0 %v1236, 90
      %v1383 = vpop.permute.xlu0 %1382
      %1384 = vrot.lane.b32.xlu0 %v1237, 90
      %v1385 = vpop.permute.xlu0 %1384
      %1386 = vrot.lane.b32.xlu0 %v1239, 90
      %v1387 = vpop.permute.xlu0 %1386
      %1388 = vrot.lane.b32.xlu0 %v1240, 90
      %v1389 = vpop.permute.xlu0 %1388
      %1390 = vrot.lane.b32.xlu0 %v1241, 90
      %v1391 = vpop.permute.xlu0 %1390
      %v1392 = vsel %vm767, %v1381, %v1383
      %v1393 = vsel %vm767, %v1383, %v1385
      %v1394 = vsel %vm767, %v1387, %v1389
      %v1395 = vsel %vm767, %v1389, %v1391
      %1397 = vset.pattern.permute.xlu0 0
      %1398 = vperm.xlu0 %1397, %v1226
      %v1399 = vpop.permute.xlu0 %1398
      %1402 = vset.pattern.permute.xlu0 0
      %1403 = vperm.xlu0 %1402, %v1227
      %v1404 = vpop.permute.xlu0 %1403
      %1406 = vrot.lane.b32.xlu0 %v1234, 19
      %v1407 = vpop.permute.xlu0 %1406
      %1408 = vrot.lane.b32.xlu0 %v1235, 19
      %v1409 = vpop.permute.xlu0 %1408
      %1410 = vrot.lane.b32.xlu0 %v1236, 19
      %v1411 = vpop.permute.xlu0 %1410
      %1412 = vrot.lane.b32.xlu0 %v1237, 19
      %v1413 = vpop.permute.xlu0 %1412
      %1414 = vrot.lane.b32.xlu0 %v1238, 19
      %v1415 = vpop.permute.xlu0 %1414
      %1416 = vrot.lane.b32.xlu0 %v1239, 19
      %v1417 = vpop.permute.xlu0 %1416
      %1418 = vrot.lane.b32.xlu0 %v1240, 19
      %v1419 = vpop.permute.xlu0 %1418
      %1420 = vrot.lane.b32.xlu0 %v1241, 19
      %v1421 = vpop.permute.xlu0 %1420
      %1422 = vrot.lane.b32.xlu0 %v1266, 19
      %v1423 = vpop.permute.xlu0 %1422
      %1424 = vrot.lane.b32.xlu0 %v1267, 19
      %v1425 = vpop.permute.xlu0 %1424
      %1426 = vrot.lane.b32.xlu0 %v1268, 19
      %v1427 = vpop.permute.xlu0 %1426
      %1428 = vrot.lane.b32.xlu0 %v1257, 19
      %v1429 = vpop.permute.xlu0 %1428
      %1430 = vrot.lane.b32.xlu0 %v1269, 19
      %v1431 = vpop.permute.xlu0 %1430
      %1432 = vrot.lane.b32.xlu0 %v1270, 19
      %v1433 = vpop.permute.xlu0 %1432
      %1434 = vrot.lane.b32.xlu0 %v1271, 19
      %v1435 = vpop.permute.xlu0 %1434
      %1436 = vrot.lane.b32.xlu0 %v1265, 19
      %v1437 = vpop.permute.xlu0 %1436
      %1438 = vrot.lane.b32.xlu0 %v1288, 19
      %v1439 = vpop.permute.xlu0 %1438
      %1440 = vrot.lane.b32.xlu0 %v1289, 19
      %v1441 = vpop.permute.xlu0 %1440
      %1442 = vrot.lane.b32.xlu0 %v1290, 19
      %v1443 = vpop.permute.xlu0 %1442
      %1444 = vrot.lane.b32.xlu0 %v1279, 19
      %v1445 = vpop.permute.xlu0 %1444
      %1446 = vrot.lane.b32.xlu0 %v1291, 19
      %v1447 = vpop.permute.xlu0 %1446
      %1448 = vrot.lane.b32.xlu0 %v1292, 19
      %v1449 = vpop.permute.xlu0 %1448
      %1450 = vrot.lane.b32.xlu0 %v1293, 19
      %v1451 = vpop.permute.xlu0 %1450
      %1452 = vrot.lane.b32.xlu0 %v1287, 19
      %v1453 = vpop.permute.xlu0 %1452
      %1454 = vrot.lane.b32.xlu0 %v1310, 19
      %v1455 = vpop.permute.xlu0 %1454
      %1456 = vrot.lane.b32.xlu0 %v1311, 19
      %v1457 = vpop.permute.xlu0 %1456
      %1458 = vrot.lane.b32.xlu0 %v1312, 19
      %v1459 = vpop.permute.xlu0 %1458
      %1460 = vrot.lane.b32.xlu0 %v1301, 19
      %v1461 = vpop.permute.xlu0 %1460
      %1462 = vrot.lane.b32.xlu0 %v1313, 19
      %v1463 = vpop.permute.xlu0 %1462
      %1464 = vrot.lane.b32.xlu0 %v1314, 19
      %v1465 = vpop.permute.xlu0 %1464
      %1466 = vrot.lane.b32.xlu0 %v1315, 19
      %v1467 = vpop.permute.xlu0 %1466
      %1468 = vrot.lane.b32.xlu0 %v1309, 19
      %v1469 = vpop.permute.xlu0 %1468
      %1470 = vrot.lane.b32.xlu0 %v1317, 19
      %v1471 = vpop.permute.xlu0 %1470
      %1472 = vrot.lane.b32.xlu0 %v1328, 19
      %v1473 = vpop.permute.xlu0 %1472
      %1474 = vrot.lane.b32.xlu0 %v1329, 19
      %v1475 = vpop.permute.xlu0 %1474
      %1476 = vrot.lane.b32.xlu0 %v1321, 19
      %v1477 = vpop.permute.xlu0 %1476
      %1478 = vrot.lane.b32.xlu0 %v1323, 19
      %v1479 = vpop.permute.xlu0 %1478
      %1480 = vrot.lane.b32.xlu0 %v1330, 19
      %v1481 = vpop.permute.xlu0 %1480
      %1482 = vrot.lane.b32.xlu0 %v1331, 19
      %v1483 = vpop.permute.xlu0 %1482
      %1484 = vrot.lane.b32.xlu0 %v1327, 19
      %v1485 = vpop.permute.xlu0 %1484
      %1486 = vrot.lane.b32.xlu0 %v1333, 19
      %v1487 = vpop.permute.xlu0 %1486
      %1488 = vrot.lane.b32.xlu0 %v1344, 19
      %v1489 = vpop.permute.xlu0 %1488
      %1490 = vrot.lane.b32.xlu0 %v1345, 19
      %v1491 = vpop.permute.xlu0 %1490
      %1492 = vrot.lane.b32.xlu0 %v1337, 19
      %v1493 = vpop.permute.xlu0 %1492
      %1494 = vrot.lane.b32.xlu0 %v1339, 19
      %v1495 = vpop.permute.xlu0 %1494
      %1496 = vrot.lane.b32.xlu0 %v1346, 19
      %v1497 = vpop.permute.xlu0 %1496
      %1498 = vrot.lane.b32.xlu0 %v1347, 19
      %v1499 = vpop.permute.xlu0 %1498
      %1500 = vrot.lane.b32.xlu0 %v1343, 19
      %v1501 = vpop.permute.xlu0 %1500
      %1502 = vrot.lane.b32.xlu0 %v1349, 19
      %v1503 = vpop.permute.xlu0 %1502
      %1504 = vrot.lane.b32.xlu0 %v1360, 19
      %v1505 = vpop.permute.xlu0 %1504
      %1506 = vrot.lane.b32.xlu0 %v1361, 19
      %v1507 = vpop.permute.xlu0 %1506
      %1508 = vrot.lane.b32.xlu0 %v1353, 19
      %v1509 = vpop.permute.xlu0 %1508
      %1510 = vrot.lane.b32.xlu0 %v1355, 19
      %v1511 = vpop.permute.xlu0 %1510
      %1512 = vrot.lane.b32.xlu0 %v1362, 19
      %v1513 = vpop.permute.xlu0 %1512
      %1514 = vrot.lane.b32.xlu0 %v1363, 19
      %v1515 = vpop.permute.xlu0 %1514
      %1516 = vrot.lane.b32.xlu0 %v1359, 19
      %v1517 = vpop.permute.xlu0 %1516
      %1518 = vrot.lane.b32.xlu0 %v1365, 19
      %v1519 = vpop.permute.xlu0 %1518
      %1520 = vrot.lane.b32.xlu0 %v1376, 19
      %v1521 = vpop.permute.xlu0 %1520
      %1522 = vrot.lane.b32.xlu0 %v1377, 19
      %v1523 = vpop.permute.xlu0 %1522
      %1524 = vrot.lane.b32.xlu0 %v1369, 19
      %v1525 = vpop.permute.xlu0 %1524
      %1526 = vrot.lane.b32.xlu0 %v1371, 19
      %v1527 = vpop.permute.xlu0 %1526
      %1528 = vrot.lane.b32.xlu0 %v1378, 19
      %v1529 = vpop.permute.xlu0 %1528
      %1530 = vrot.lane.b32.xlu0 %v1379, 19
      %v1531 = vpop.permute.xlu0 %1530
      %1532 = vrot.lane.b32.xlu0 %v1375, 19
      %v1533 = vpop.permute.xlu0 %1532
      %1534 = vrot.lane.b32.xlu0 %v1381, 19
      %v1535 = vpop.permute.xlu0 %1534
      %1536 = vrot.lane.b32.xlu0 %v1392, 19
      %v1537 = vpop.permute.xlu0 %1536
      %1538 = vrot.lane.b32.xlu0 %v1393, 19
      %v1539 = vpop.permute.xlu0 %1538
      %1540 = vrot.lane.b32.xlu0 %v1385, 19
      %v1541 = vpop.permute.xlu0 %1540
      %1542 = vrot.lane.b32.xlu0 %v1387, 19
      %v1543 = vpop.permute.xlu0 %1542
      %1544 = vrot.lane.b32.xlu0 %v1394, 19
      %v1545 = vpop.permute.xlu0 %1544
      %1546 = vrot.lane.b32.xlu0 %v1395, 19
      %v1547 = vpop.permute.xlu0 %1546
      %1548 = vrot.lane.b32.xlu0 %v1391, 19
      %v1549 = vpop.permute.xlu0 %1548
      %v1550 = vsel %vm926, %v1407, %v1409
      %v1551 = vsel %vm926, %v1409, %v1411
      %v1552 = vsel %vm926, %v1411, %v1413
      %v1553 = vsel %vm926, %v1415, %v1417
      %v1554 = vsel %vm926, %v1417, %v1419
      %v1555 = vsel %vm926, %v1419, %v1421
      %v1556 = vsel %vm926, %v1423, %v1425
      %v1557 = vsel %vm926, %v1425, %v1427
      %v1558 = vsel %vm926, %v1427, %v1429
      %v1559 = vsel %vm926, %v1431, %v1433
      %v1560 = vsel %vm926, %v1433, %v1435
      %v1561 = vsel %vm926, %v1435, %v1437
      %v1562 = vsel %vm926, %v1439, %v1441
      %v1563 = vsel %vm926, %v1441, %v1443
      %v1564 = vsel %vm926, %v1443, %v1445
      %v1565 = vsel %vm926, %v1447, %v1449
      %v1566 = vsel %vm926, %v1449, %v1451
      %v1567 = vsel %vm926, %v1451, %v1453
      %v1568 = vsel %vm926, %v1455, %v1457
      %v1569 = vsel %vm926, %v1457, %v1459
      %v1570 = vsel %vm926, %v1459, %v1461
      %v1571 = vsel %vm926, %v1463, %v1465
      %v1572 = vsel %vm926, %v1465, %v1467
      %v1573 = vsel %vm926, %v1467, %v1469
      %v1574 = vsel %vm926, %v1471, %v1473
      %v1575 = vsel %vm926, %v1473, %v1475
      %v1576 = vsel %vm926, %v1475, %v1477
      %v1577 = vsel %vm926, %v1479, %v1481
      %v1578 = vsel %vm926, %v1481, %v1483
      %v1579 = vsel %vm926, %v1483, %v1485
      %v1580 = vsel %vm926, %v1487, %v1489
      %v1581 = vsel %vm926, %v1489, %v1491
      %v1582 = vsel %vm926, %v1491, %v1493
      %v1583 = vsel %vm926, %v1495, %v1497
      %v1584 = vsel %vm926, %v1497, %v1499
      %v1585 = vsel %vm926, %v1499, %v1501
      %v1586 = vsel %vm926, %v1503, %v1505
      %v1587 = vsel %vm926, %v1505, %v1507
      %v1588 = vsel %vm926, %v1507, %v1509
      %v1589 = vsel %vm926, %v1511, %v1513
      %v1590 = vsel %vm926, %v1513, %v1515
      %v1591 = vsel %vm926, %v1515, %v1517
      %v1592 = vsel %vm926, %v1519, %v1521
      %v1593 = vsel %vm926, %v1521, %v1523
      %v1594 = vsel %vm926, %v1523, %v1525
      %v1595 = vsel %vm926, %v1527, %v1529
      %v1596 = vsel %vm926, %v1529, %v1531
      %v1597 = vsel %vm926, %v1531, %v1533
      %v1598 = vsel %vm926, %v1535, %v1537
      %v1599 = vsel %vm926, %v1537, %v1539
      %v1600 = vsel %vm926, %v1539, %v1541
      %v1601 = vsel %vm926, %v1543, %v1545
      %v1602 = vsel %vm926, %v1545, %v1547
      %v1603 = vsel %vm926, %v1547, %v1549
      %v1659 = vsel %vm1035, %v1223, 0
      %v1662 = vsel %vm1035, %v1225, 0
      %1664 = vmatprep.subr.mxu0 %v1596
      %1665 = vmatpush1.msra.mxu0 %v1595
      %1666 = vmatprep.subr.mxu0 %v1593
      %1667 = vmatpush1.msra.mxu0 %v1592
      %1668 = vmatprep.subr.mxu0 %v1590
      %1669 = vmatpush1.msra.mxu0 %v1589
      %1670 = vmatprep.subr.mxu0 %v1587
      %1671 = vmatpush1.msra.mxu0 %v1586
      %1672 = vmatprep.subr.mxu0 %v1584
      %1673 = vmatpush1.msra.mxu0 %v1583
      %1674 = vmatprep.subr.mxu0 %v1581
      %1675 = vmatpush1.msra.mxu0 %v1580
      %1676 = vmatprep.subr.mxu0 %v1578
      %1677 = vmatpush1.msra.mxu0 %v1577
      %1678 = vmatprep.subr.mxu0 %v1575
      %1679 = vmatpush1.msra.mxu0 %v1574
      %1680 = vmatprep.subr.mxu0 %v1572
      %1681 = vmatpush1.msra.mxu0 %v1571
      %1682 = vmatprep.subr.mxu0 %v1569
      %1683 = vmatpush1.msra.mxu0 %v1568
      %1684 = vmatprep.subr.mxu0 %v1566
      %1685 = vmatpush1.msra.mxu0 %v1565
      %1686 = vmatprep.subr.mxu0 %v1563
      %1687 = vmatpush1.msra.mxu0 %v1562
      %1688 = vmatprep.subr.mxu0 %v1560
      %1689 = vmatpush1.msra.mxu0 %v1559
      %1690 = vmatprep.subr.mxu0 %v1557
      %1691 = vmatpush1.msra.mxu0 %v1556
      %1692 = vmatprep.subr.mxu0 %v1554
      %1693 = vmatpush1.msra.mxu0 %v1553
      %1694 = vmatprep.subr.mxu0 %v1551
      %1695 = vmatpush1.msra.mxu0 %v1550
      %1696 = vmatprep.subr.mxu0 0.0
      %1697 = vmatpush2.msra.mxu0 0.0
      %1698 = vmatprep.subr.mxu0 0.0
      %1699 = vmatpush2.msra.mxu0 0.0
      %1700 = vmatprep.subr.mxu0 0.0
      %1701 = vmatpush2.msra.mxu0 0.0
      %1702 = vmatprep.subr.mxu0 0.0
      %1703 = vmatpush2.msra.mxu0 0.0
      %1704 = vmatprep.subr.mxu0 0.0
      %1705 = vmatpush2.msra.mxu0 0.0
      %1706 = vmatprep.subr.mxu0 0.0
      %1707 = vmatpush2.msra.mxu0 0.0
      %1708 = vmatprep.subr.mxu0 0.0
      %1709 = vmatpush2.msra.mxu0 0.0
      %1710 = vmatprep.subr.mxu0 0.0
      %1711 = vmatpush2.msra.mxu0 0.0
      %1712 = vmatprep.subr.mxu0 0.0
      %1713 = vmatpush2.msra.mxu0 0.0
      %1714 = vmatprep.subr.mxu0 0.0
      %1715 = vmatpush2.msra.mxu0 0.0
      %1716 = vmatprep.subr.mxu0 0.0
      %1717 = vmatpush2.msra.mxu0 0.0
      %1718 = vmatprep.subr.mxu0 0.0
      %1719 = vmatpush2.msra.mxu0 0.0
      %1720 = vmatprep.subr.mxu0 0.0
      %1721 = vmatpush2.msra.mxu0 0.0
      %1722 = vmatprep.subr.mxu0 0.0
      %1723 = vmatpush2.msra.mxu0 0.0
      %1724 = vmatprep.subr.mxu0 %v1602
      %1725 = vmatpush2.msra.mxu0 %v1601
      %1726 = vmatprep.subr.mxu0 %v1599
      %1727 = vmatpush2.msra.mxu0 %v1598
      %1728 = vmatprep.mubr.f32.mxu0 %v1659
      %1729 = vmatmul.mubr.f32.gmra.mxu0 %v1222
      %v1730 = vpop.f32.mrf.mxu0
      %v1731 = vadd.f32 %v1399, %v1730
      %v1732 = vpop.f32.mrf.mxu0
      %v1733 = vadd.f32 %v1399, %v1732
      %1734 = vmatprep.mubr.f32.mxu0 %v1662
      %1735 = vmatmul.mubr.f32.gmra.mxu0 %v1224
      %v1736 = vpop.f32.mrf.mxu0
      %v1737 = vadd.f32 %v1404, %v1736
      %v1738 = vpop.f32.mrf.mxu0
      %v1739 = vadd.f32 %v1404, %v1738
      %1740 = vdwg.mxu0
      %1741 = vmatprep.subr.mxu0 0.0
      %1742 = vmatpush1.msra.mxu0 %v1597
      %1743 = vmatprep.subr.mxu0 0.0
      %1744 = vmatpush1.msra.mxu0 %v1594
      %1745 = vmatprep.subr.mxu0 0.0
      %1746 = vmatpush1.msra.mxu0 %v1591
      %1747 = vmatprep.subr.mxu0 0.0
      %1748 = vmatpush1.msra.mxu0 %v1588
      %1749 = vmatprep.subr.mxu0 0.0
      %1750 = vmatpush1.msra.mxu0 %v1585
      %1751 = vmatprep.subr.mxu0 0.0
      %1752 = vmatpush1.msra.mxu0 %v1582
      %1753 = vmatprep.subr.mxu0 0.0
      %1754 = vmatpush1.msra.mxu0 %v1579
      %1755 = vmatprep.subr.mxu0 0.0
      %1756 = vmatpush1.msra.mxu0 %v1576
      %1757 = vmatprep.subr.mxu0 0.0
      %1758 = vmatpush1.msra.mxu0 %v1573
      %1759 = vmatprep.subr.mxu0 0.0
      %1760 = vmatpush1.msra.mxu0 %v1570
      %1761 = vmatprep.subr.mxu0 0.0
      %1762 = vmatpush1.msra.mxu0 %v1567
      %1763 = vmatprep.subr.mxu0 0.0
      %1764 = vmatpush1.msra.mxu0 %v1564
      %1765 = vmatprep.subr.mxu0 0.0
      %1766 = vmatpush1.msra.mxu0 %v1561
      %1767 = vmatprep.subr.mxu0 0.0
      %1768 = vmatpush1.msra.mxu0 %v1558
      %1769 = vmatprep.subr.mxu0 0.0
      %1770 = vmatpush1.msra.mxu0 %v1555
      %1771 = vmatprep.subr.mxu0 0.0
      %1772 = vmatpush1.msra.mxu0 %v1552
      %1773 = vmatprep.subr.mxu0 0.0
      %1774 = vmatpush2.msra.mxu0 0.0
      %1775 = vmatprep.subr.mxu0 0.0
      %1776 = vmatpush2.msra.mxu0 0.0
      %1777 = vmatprep.subr.mxu0 0.0
      %1778 = vmatpush2.msra.mxu0 0.0
      %1779 = vmatprep.subr.mxu0 0.0
      %1780 = vmatpush2.msra.mxu0 0.0
      %1781 = vmatprep.subr.mxu0 0.0
      %1782 = vmatpush2.msra.mxu0 0.0
      %1783 = vmatprep.subr.mxu0 0.0
      %1784 = vmatpush2.msra.mxu0 0.0
      %1785 = vmatprep.subr.mxu0 0.0
      %1786 = vmatpush2.msra.mxu0 0.0
      %1787 = vmatprep.subr.mxu0 0.0
      %1788 = vmatpush2.msra.mxu0 0.0
      %1789 = vmatprep.subr.mxu0 0.0
      %1790 = vmatpush2.msra.mxu0 0.0
      %1791 = vmatprep.subr.mxu0 0.0
      %1792 = vmatpush2.msra.mxu0 0.0
      %1793 = vmatprep.subr.mxu0 0.0
      %1794 = vmatpush2.msra.mxu0 0.0
      %1795 = vmatprep.subr.mxu0 0.0
      %1796 = vmatpush2.msra.mxu0 0.0
      %1797 = vmatprep.subr.mxu0 0.0
      %1798 = vmatpush2.msra.mxu0 0.0
      %1799 = vmatprep.subr.mxu0 0.0
      %1800 = vmatpush2.msra.mxu0 0.0
      %1801 = vmatprep.subr.mxu0 0.0
      %1802 = vmatpush2.msra.mxu0 %v1603
      %1803 = vmatprep.subr.mxu0 0.0
      %1804 = vmatpush2.msra.mxu0 %v1600
      %1805 = vmatprep.mubr.f32.mxu0 %v1659
      %1806 = vmatmul.mubr.f32.gmra.mxu0 %v1222
      %v1807 = vpop.f32.mrf.mxu0
      %v1808 = vadd.f32 %v1399, %v1807
      %v1809 = vpop.f32.mrf.mxu0
      %1810 = vmatprep.mubr.f32.mxu0 %v1662
      %1811 = vmatmul.mubr.f32.gmra.mxu0 %v1224
      %v1812 = vpop.f32.mrf.mxu0
      %v1813 = vadd.f32 %v1404, %v1812
      %v1814 = vpop.f32.mrf.mxu0
      %1815 = vdwg.mxu0
      %v1816 = vmul.f32 %v1731, %v1198
      %v1817 = vmul.f32 %v1733, %v1202
      %v1818 = vmul.f32 %v1808, %v1206
      %v1819 = vmul.f32 %v1737, %v1198
      %v1820 = vmul.f32 %v1739, %v1202
      %v1821 = vmul.f32 %v1813, %v1206
      %v1822 = vadd.f32 %v1816, %v1817
      %v1823 = vsel %vm419, %v1818, 0.0
      %v1824 = vadd.f32 %v1822, %v1823
      %1825 = vadd.xlane.f32.xlu0 %v1824
      %v1826 = vpop.xlane.xlu0 %1825
      %v1827 = vadd.f32 %v1819, %v1820
      %v1828 = vsel %vm419, %v1821, 0.0
      %v1829 = vadd.f32 %v1827, %v1828
      %1830 = vadd.xlane.f32.xlu0 %v1829
      %v1831 = vpop.xlane.xlu0 %1830
      %v1832 = vmul.f32 %v1826, 0.00390625
      %v1833 = vmul.f32 %v1831, 0.00390625
      %v1834 = vld [vmem:[%s6] sm:$0xf]
      %v1835 = vld [vmem:[%s7] sm:$0xf]
      %v1837 = vsel %vm1035, %v1834, 0
      %1839 = vmatprep.subr.mxu0 0.0
      %1840 = vmatpush1.msra.mxu0 0.0
      %1841 = vmatprep.subr.mxu0 0.0
      %1842 = vmatpush1.msra.mxu0 0.0
      %1843 = vmatprep.subr.mxu0 0.0
      %1844 = vmatpush1.msra.mxu0 0.0
      %1845 = vmatprep.subr.mxu0 0.0
      %1846 = vmatpush1.msra.mxu0 0.0
      %1847 = vmatprep.subr.mxu0 0.0
      %1848 = vmatpush1.msra.mxu0 0.0
      %1849 = vmatprep.subr.mxu0 0.0
      %1850 = vmatpush1.msra.mxu0 0.0
      %1851 = vmatprep.subr.mxu0 0.0
      %1852 = vmatpush1.msra.mxu0 0.0
      %1853 = vmatprep.subr.mxu0 0.0
      %1854 = vmatpush1.msra.mxu0 0.0
      %1855 = vmatprep.subr.mxu0 0.0
      %1856 = vmatpush1.msra.mxu0 0.0
      %1857 = vmatprep.subr.mxu0 0.0
      %1858 = vmatpush1.msra.mxu0 0.0
      %1859 = vmatprep.subr.mxu0 0.0
      %1860 = vmatpush1.msra.mxu0 0.0
      %1861 = vmatprep.subr.mxu0 0.0
      %1862 = vmatpush1.msra.mxu0 0.0
      %1863 = vmatprep.subr.mxu0 0.0
      %1864 = vmatpush1.msra.mxu0 0.0
      %1865 = vmatprep.subr.mxu0 0.0
      %1866 = vmatpush1.msra.mxu0 0.0
      %1867 = vmatprep.subr.mxu0 0.0
      %1868 = vmatpush1.msra.mxu0 %v1833
      %1869 = vmatprep.subr.mxu0 0.0
      %1870 = vmatpush1.msra.mxu0 %v1832
      %1871 = vmatprep.subr.mxu0 0.0
      %1872 = vmatpush2.msra.mxu0 0.0
      %1873 = vmatprep.subr.mxu0 0.0
      %1874 = vmatpush2.msra.mxu0 0.0
      %1875 = vmatprep.subr.mxu0 0.0
      %1876 = vmatpush2.msra.mxu0 0.0
      %1877 = vmatprep.subr.mxu0 0.0
      %1878 = vmatpush2.msra.mxu0 0.0
      %1879 = vmatprep.subr.mxu0 0.0
      %1880 = vmatpush2.msra.mxu0 0.0
      %1881 = vmatprep.subr.mxu0 0.0
      %1882 = vmatpush2.msra.mxu0 0.0
      %1883 = vmatprep.subr.mxu0 0.0
      %1884 = vmatpush2.msra.mxu0 0.0
      %1885 = vmatprep.subr.mxu0 0.0
      %1886 = vmatpush2.msra.mxu0 0.0
      %1887 = vmatprep.subr.mxu0 0.0
      %1888 = vmatpush2.msra.mxu0 0.0
      %1889 = vmatprep.subr.mxu0 0.0
      %1890 = vmatpush2.msra.mxu0 0.0
      %1891 = vmatprep.subr.mxu0 0.0
      %1892 = vmatpush2.msra.mxu0 0.0
      %1893 = vmatprep.subr.mxu0 0.0
      %1894 = vmatpush2.msra.mxu0 0.0
      %1895 = vmatprep.subr.mxu0 0.0
      %1896 = vmatpush2.msra.mxu0 0.0
      %1897 = vmatprep.subr.mxu0 0.0
      %1898 = vmatpush2.msra.mxu0 0.0
      %1899 = vmatprep.subr.mxu0 0.0
      %1900 = vmatpush2.msra.mxu0 0.0
      %1901 = vmatprep.subr.mxu0 0.0
      %1902 = vmatpush2.msra.mxu0 0.0
      %1903 = vmatprep.mubr.f32.mxu0 0.0
      %1904 = vmatmul.mubr.f32.gmra.mxu0 %v1837
      %v1905 = vpop.f32.mrf.mxu0
      %v1906 = vadd.f32 %v1835, %v1905
      %v1907 = vpop.f32.mrf.mxu0
      %1908 = vdwg.mxu0
      %v1909 = vmax.f32 %v1906, 0.0
      %v1910 = vld [vmem:[%s8] sm:$0xff]
      %v1911 = vld [vmem:[%s8 + $0x8] sm:$0xff]
      %v1912 = vld [vmem:[%s9] sm:$0xff]
      %v1913 = vld [vmem:[%s9 + $0x8] sm:$0xff]
      %vm1914 = vcmask 31744
      %v1916 = vsel %vm1914, %v1910, 0
      %v1919 = vsel %vm1914, %v1911, 0
      %vm1921 = vcmask 1043456
      %v1923 = vsel %vm1921, %v1909, 0
      %1925 = vmatprep.subr.mxu0 0.0
      %1926 = vmatpush1.msra.mxu0 0.0
      %1927 = vmatprep.subr.mxu0 0.0
      %1928 = vmatpush1.msra.mxu0 0.0
      %1929 = vmatprep.subr.mxu0 0.0
      %1930 = vmatpush1.msra.mxu0 0.0
      %1931 = vmatprep.subr.mxu0 0.0
      %1932 = vmatpush1.msra.mxu0 0.0
      %1933 = vmatprep.subr.mxu0 0.0
      %1934 = vmatpush1.msra.mxu0 0.0
      %1935 = vmatprep.subr.mxu0 0.0
      %1936 = vmatpush1.msra.mxu0 0.0
      %1937 = vmatprep.subr.mxu0 0.0
      %1938 = vmatpush1.msra.mxu0 0.0
      %1939 = vmatprep.subr.mxu0 0.0
      %1940 = vmatpush1.msra.mxu0 0.0
      %1941 = vmatprep.subr.mxu0 0.0
      %1942 = vmatpush1.msra.mxu0 0.0
      %1943 = vmatprep.subr.mxu0 0.0
      %1944 = vmatpush1.msra.mxu0 0.0
      %1945 = vmatprep.subr.mxu0 0.0
      %1946 = vmatpush1.msra.mxu0 0.0
      %1947 = vmatprep.subr.mxu0 0.0
      %1948 = vmatpush1.msra.mxu0 0.0
      %1949 = vmatprep.subr.mxu0 0.0
      %1950 = vmatpush1.msra.mxu0 0.0
      %1951 = vmatprep.subr.mxu0 0.0
      %1952 = vmatpush1.msra.mxu0 0.0
      %1953 = vmatprep.subr.mxu0 0.0
      %1954 = vmatpush1.msra.mxu0 0.0
      %1955 = vmatprep.subr.mxu0 0.0
      %1956 = vmatpush1.msra.mxu0 %v1923
      %1957 = vmatprep.subr.mxu0 0.0
      %1958 = vmatpush2.msra.mxu0 0.0
      %1959 = vmatprep.subr.mxu0 0.0
      %1960 = vmatpush2.msra.mxu0 0.0
      %1961 = vmatprep.subr.mxu0 0.0
      %1962 = vmatpush2.msra.mxu0 0.0
      %1963 = vmatprep.subr.mxu0 0.0
      %1964 = vmatpush2.msra.mxu0 0.0
      %1965 = vmatprep.subr.mxu0 0.0
      %1966 = vmatpush2.msra.mxu0 0.0
      %1967 = vmatprep.subr.mxu0 0.0
      %1968 = vmatpush2.msra.mxu0 0.0
      %1969 = vmatprep.subr.mxu0 0.0
      %1970 = vmatpush2.msra.mxu0 0.0
      %1971 = vmatprep.subr.mxu0 0.0
      %1972 = vmatpush2.msra.mxu0 0.0
      %1973 = vmatprep.subr.mxu0 0.0
      %1974 = vmatpush2.msra.mxu0 0.0
      %1975 = vmatprep.subr.mxu0 0.0
      %1976 = vmatpush2.msra.mxu0 0.0
      %1977 = vmatprep.subr.mxu0 0.0
      %1978 = vmatpush2.msra.mxu0 0.0
      %1979 = vmatprep.subr.mxu0 0.0
      %1980 = vmatpush2.msra.mxu0 0.0
      %1981 = vmatprep.subr.mxu0 0.0
      %1982 = vmatpush2.msra.mxu0 0.0
      %1983 = vmatprep.subr.mxu0 0.0
      %1984 = vmatpush2.msra.mxu0 0.0
      %1985 = vmatprep.subr.mxu0 0.0
      %1986 = vmatpush2.msra.mxu0 0.0
      %1987 = vmatprep.subr.mxu0 0.0
      %1988 = vmatpush2.msra.mxu0 0.0
      %1989 = vmatprep.mubr.f32.mxu0 0.0
      %1990 = vmatmul.mubr.f32.gmra.mxu0 %v1916
      %v1991 = vpop.f32.mrf.mxu0
      %v1992 = vadd.f32 %v1912, %v1991
      %v1993 = vpop.f32.mrf.mxu0
      %1994 = vmatprep.mubr.f32.mxu0 0.0
      %1995 = vmatmul.mubr.f32.gmra.mxu0 %v1919
      %v1996 = vpop.f32.mrf.mxu0
      %v1997 = vadd.f32 %v1913, %v1996
      %v1998 = vpop.f32.mrf.mxu0
      %1999 = vdwg.mxu0
      %v2000 = vxor.u32 %v1992, 2147483648
      %v2001 = vxor.u32 %v1997, 2147483648
      %v2002 = vmul.f32 %v2000, 1.442695
      %v2003 = vpow.pop %v2002
      %v2004 = vmul.f32 %v2001, 1.442695
      %v2005 = vpow.pop %v2004
      %v2006 = vadd.f32 %v2003, 1.0
      %v2007 = vadd.f32 %v2005, 1.0
      %v2008 = vrcp.pop %v2006
      %v2009 = vmul.f32 1.0, %v2008
      %v2010 = vrcp.pop %v2007
      %v2011 = vmul.f32 1.0, %v2010
      %2013 = vset.pattern.permute.xlu0 0
      %2014 = vperm.xlu0 %2013, %v2009
      %v2015 = vpop.permute.xlu0 %2014
      %2018 = vset.pattern.permute.xlu0 0
      %2019 = vperm.xlu0 %2018, %v2011
      %v2020 = vpop.permute.xlu0 %2019
      %v2022 = vmul.f32 %v1816, %v2015
      %v2023 = vmul.f32 %v1817, %v2015
      %v2024 = vmul.f32 %v1818, %v2015
      %v2025 = vmul.f32 %v1819, %v2020
      %v2026 = vmul.f32 %v1820, %v2020
      %v2027 = vmul.f32 %v1821, %v2020
      %v2028 = vadd.f32 %v584, %v2022
      %v2029 = vadd.f32 %v585, %v2023
      %v2030 = vadd.f32 %v586, %v2024
      %v2031 = vadd.f32 %v587, %v2025
      %v2032 = vadd.f32 %v588, %v2026
      %v2033 = vadd.f32 %v589, %v2027
      %s2034 = scalar_lea.vmem %s2, 32
      %v2035 = vld [vmem:[%s2034] sm:$0xff]
      %v2036 = vld [vmem:[%s2034 + $0x8] sm:$0xff]
      %v2037 = vld [vmem:[%s2034 + $0x10] sm:$0xff]
      %v2038 = vld [vmem:[%s2034 + $0x18] sm:$0xff]
      %s2039 = scalar_lea.vmem %s3, 16
      %v2040 = vld [vmem:[%s2039] sm:$0xff]
      %v2041 = vld [vmem:[%s2039 + $0x8] sm:$0xff]
      %2042 = vst [vmem:[#allocation2 + $0x8] sm:$0xff] %v2028
      %2043 = vst [vmem:[#allocation2 + $0x10] sm:$0xff] %v2029
      %2044 = vst.msk [vmem:[#allocation2 + $0x18] sm:$0xff] %vm419, %v2030
      %2045 = vst [vmem:[#allocation2 + $0x30] sm:$0xff] %v2031
      %2046 = vst [vmem:[#allocation2 + $0x38] sm:$0xff] %v2032
      %2047 = vst.msk [vmem:[#allocation2 + $0x40] sm:$0xff] %vm419, %v2033
      %v2048 = vld [vmem:[#allocation2] sm:$0xff]
      %v2049 = vld [vmem:[#allocation2 + $0x8] sm:$0xff]
      %v2050 = vld [vmem:[#allocation2 + $0x10] sm:$0xff]
      %v2051 = vld [vmem:[#allocation2 + $0x18] sm:$0xff]
      %v2052 = vld [vmem:[#allocation2 + $0x28] sm:$0xff]
      %v2053 = vld [vmem:[#allocation2 + $0x30] sm:$0xff]
      %v2054 = vld [vmem:[#allocation2 + $0x38] sm:$0xff]
      %v2055 = vld [vmem:[#allocation2 + $0x40] sm:$0xff]
      %2064 = vrot.lane.b32.xlu0 %v2048, 127
      %v2065 = vpop.permute.xlu0 %2064
      %2066 = vrot.lane.b32.xlu0 %v2049, 127
      %v2067 = vpop.permute.xlu0 %2066
      %2068 = vrot.lane.b32.xlu0 %v2050, 127
      %v2069 = vpop.permute.xlu0 %2068
      %2070 = vrot.lane.b32.xlu0 %v2051, 127
      %v2071 = vpop.permute.xlu0 %2070
      %2072 = vrot.lane.b32.xlu0 %v2052, 127
      %v2073 = vpop.permute.xlu0 %2072
      %2074 = vrot.lane.b32.xlu0 %v2053, 127
      %v2075 = vpop.permute.xlu0 %2074
      %2076 = vrot.lane.b32.xlu0 %v2054, 127
      %v2077 = vpop.permute.xlu0 %2076
      %2078 = vrot.lane.b32.xlu0 %v2055, 127
      %v2079 = vpop.permute.xlu0 %2078
      %v2080 = vsel %vm634, %v2065, %v2067
      %v2081 = vsel %vm634, %v2067, %v2069
      %v2082 = vsel %vm634, %v2069, %v2071
      %v2083 = vsel %vm634, %v2073, %v2075
      %v2084 = vsel %vm634, %v2075, %v2077
      %v2085 = vsel %vm634, %v2077, %v2079
      %2086 = vrot.lane.b32.xlu0 %v2048, 126
      %v2087 = vpop.permute.xlu0 %2086
      %2088 = vrot.lane.b32.xlu0 %v2049, 126
      %v2089 = vpop.permute.xlu0 %2088
      %2090 = vrot.lane.b32.xlu0 %v2050, 126
      %v2091 = vpop.permute.xlu0 %2090
      %2092 = vrot.lane.b32.xlu0 %v2051, 126
      %v2093 = vpop.permute.xlu0 %2092
      %2094 = vrot.lane.b32.xlu0 %v2052, 126
      %v2095 = vpop.permute.xlu0 %2094
      %2096 = vrot.lane.b32.xlu0 %v2053, 126
      %v2097 = vpop.permute.xlu0 %2096
      %2098 = vrot.lane.b32.xlu0 %v2054, 126
      %v2099 = vpop.permute.xlu0 %2098
      %2100 = vrot.lane.b32.xlu0 %v2055, 126
      %v2101 = vpop.permute.xlu0 %2100
      %v2102 = vsel %vm657, %v2087, %v2089
      %v2103 = vsel %vm657, %v2089, %v2091
      %v2104 = vsel %vm657, %v2091, %v2093
      %v2105 = vsel %vm657, %v2095, %v2097
      %v2106 = vsel %vm657, %v2097, %v2099
      %v2107 = vsel %vm657, %v2099, %v2101
      %2108 = vrot.lane.b32.xlu0 %v2048, 110
      %v2109 = vpop.permute.xlu0 %2108
      %2110 = vrot.lane.b32.xlu0 %v2049, 110
      %v2111 = vpop.permute.xlu0 %2110
      %2112 = vrot.lane.b32.xlu0 %v2050, 110
      %v2113 = vpop.permute.xlu0 %2112
      %2114 = vrot.lane.b32.xlu0 %v2051, 110
      %v2115 = vpop.permute.xlu0 %2114
      %2116 = vrot.lane.b32.xlu0 %v2052, 110
      %v2117 = vpop.permute.xlu0 %2116
      %2118 = vrot.lane.b32.xlu0 %v2053, 110
      %v2119 = vpop.permute.xlu0 %2118
      %2120 = vrot.lane.b32.xlu0 %v2054, 110
      %v2121 = vpop.permute.xlu0 %2120
      %2122 = vrot.lane.b32.xlu0 %v2055, 110
      %v2123 = vpop.permute.xlu0 %2122
      %v2124 = vsel %vm680, %v2109, %v2111
      %v2125 = vsel %vm680, %v2111, %v2113
      %v2126 = vsel %vm680, %v2113, %v2115
      %v2127 = vsel %vm680, %v2117, %v2119
      %v2128 = vsel %vm680, %v2119, %v2121
      %v2129 = vsel %vm680, %v2121, %v2123
      %2130 = vrot.lane.b32.xlu0 %v2049, 109
      %v2131 = vpop.permute.xlu0 %2130
      %2132 = vrot.lane.b32.xlu0 %v2050, 109
      %v2133 = vpop.permute.xlu0 %2132
      %2134 = vrot.lane.b32.xlu0 %v2051, 109
      %v2135 = vpop.permute.xlu0 %2134
      %2136 = vrot.lane.b32.xlu0 %v2053, 109
      %v2137 = vpop.permute.xlu0 %2136
      %2138 = vrot.lane.b32.xlu0 %v2054, 109
      %v2139 = vpop.permute.xlu0 %2138
      %2140 = vrot.lane.b32.xlu0 %v2055, 109
      %v2141 = vpop.permute.xlu0 %2140
      %v2142 = vsel %vm699, %v2131, %v2133
      %v2143 = vsel %vm699, %v2133, %v2135
      %v2144 = vsel %vm699, %v2137, %v2139
      %v2145 = vsel %vm699, %v2139, %v2141
      %2146 = vrot.lane.b32.xlu0 %v2049, 108
      %v2147 = vpop.permute.xlu0 %2146
      %2148 = vrot.lane.b32.xlu0 %v2050, 108
      %v2149 = vpop.permute.xlu0 %2148
      %2150 = vrot.lane.b32.xlu0 %v2051, 108
      %v2151 = vpop.permute.xlu0 %2150
      %2152 = vrot.lane.b32.xlu0 %v2053, 108
      %v2153 = vpop.permute.xlu0 %2152
      %2154 = vrot.lane.b32.xlu0 %v2054, 108
      %v2155 = vpop.permute.xlu0 %2154
      %2156 = vrot.lane.b32.xlu0 %v2055, 108
      %v2157 = vpop.permute.xlu0 %2156
      %v2158 = vsel %vm716, %v2147, %v2149
      %v2159 = vsel %vm716, %v2149, %v2151
      %v2160 = vsel %vm716, %v2153, %v2155
      %v2161 = vsel %vm716, %v2155, %v2157
      %2162 = vrot.lane.b32.xlu0 %v2049, 92
      %v2163 = vpop.permute.xlu0 %2162
      %2164 = vrot.lane.b32.xlu0 %v2050, 92
      %v2165 = vpop.permute.xlu0 %2164
      %2166 = vrot.lane.b32.xlu0 %v2051, 92
      %v2167 = vpop.permute.xlu0 %2166
      %2168 = vrot.lane.b32.xlu0 %v2053, 92
      %v2169 = vpop.permute.xlu0 %2168
      %2170 = vrot.lane.b32.xlu0 %v2054, 92
      %v2171 = vpop.permute.xlu0 %2170
      %2172 = vrot.lane.b32.xlu0 %v2055, 92
      %v2173 = vpop.permute.xlu0 %2172
      %v2174 = vsel %vm733, %v2163, %v2165
      %v2175 = vsel %vm733, %v2165, %v2167
      %v2176 = vsel %vm733, %v2169, %v2171
      %v2177 = vsel %vm733, %v2171, %v2173
      %2178 = vrot.lane.b32.xlu0 %v2049, 91
      %v2179 = vpop.permute.xlu0 %2178
      %2180 = vrot.lane.b32.xlu0 %v2050, 91
      %v2181 = vpop.permute.xlu0 %2180
      %2182 = vrot.lane.b32.xlu0 %v2051, 91
      %v2183 = vpop.permute.xlu0 %2182
      %2184 = vrot.lane.b32.xlu0 %v2053, 91
      %v2185 = vpop.permute.xlu0 %2184
      %2186 = vrot.lane.b32.xlu0 %v2054, 91
      %v2187 = vpop.permute.xlu0 %2186
      %2188 = vrot.lane.b32.xlu0 %v2055, 91
      %v2189 = vpop.permute.xlu0 %2188
      %v2190 = vsel %vm750, %v2179, %v2181
      %v2191 = vsel %vm750, %v2181, %v2183
      %v2192 = vsel %vm750, %v2185, %v2187
      %v2193 = vsel %vm750, %v2187, %v2189
      %2194 = vrot.lane.b32.xlu0 %v2049, 90
      %v2195 = vpop.permute.xlu0 %2194
      %2196 = vrot.lane.b32.xlu0 %v2050, 90
      %v2197 = vpop.permute.xlu0 %2196
      %2198 = vrot.lane.b32.xlu0 %v2051, 90
      %v2199 = vpop.permute.xlu0 %2198
      %2200 = vrot.lane.b32.xlu0 %v2053, 90
      %v2201 = vpop.permute.xlu0 %2200
      %2202 = vrot.lane.b32.xlu0 %v2054, 90
      %v2203 = vpop.permute.xlu0 %2202
      %2204 = vrot.lane.b32.xlu0 %v2055, 90
      %v2205 = vpop.permute.xlu0 %2204
      %v2206 = vsel %vm767, %v2195, %v2197
      %v2207 = vsel %vm767, %v2197, %v2199
      %v2208 = vsel %vm767, %v2201, %v2203
      %v2209 = vsel %vm767, %v2203, %v2205
      %2211 = vset.pattern.permute.xlu0 0
      %2212 = vperm.xlu0 %2211, %v2040
      %v2213 = vpop.permute.xlu0 %2212
      %2216 = vset.pattern.permute.xlu0 0
      %2217 = vperm.xlu0 %2216, %v2041
      %v2218 = vpop.permute.xlu0 %2217
      %2220 = vrot.lane.b32.xlu0 %v2048, 19
      %v2221 = vpop.permute.xlu0 %2220
      %2222 = vrot.lane.b32.xlu0 %v2049, 19
      %v2223 = vpop.permute.xlu0 %2222
      %2224 = vrot.lane.b32.xlu0 %v2050, 19
      %v2225 = vpop.permute.xlu0 %2224
      %2226 = vrot.lane.b32.xlu0 %v2051, 19
      %v2227 = vpop.permute.xlu0 %2226
      %2228 = vrot.lane.b32.xlu0 %v2052, 19
      %v2229 = vpop.permute.xlu0 %2228
      %2230 = vrot.lane.b32.xlu0 %v2053, 19
      %v2231 = vpop.permute.xlu0 %2230
      %2232 = vrot.lane.b32.xlu0 %v2054, 19
      %v2233 = vpop.permute.xlu0 %2232
      %2234 = vrot.lane.b32.xlu0 %v2055, 19
      %v2235 = vpop.permute.xlu0 %2234
      %2236 = vrot.lane.b32.xlu0 %v2080, 19
      %v2237 = vpop.permute.xlu0 %2236
      %2238 = vrot.lane.b32.xlu0 %v2081, 19
      %v2239 = vpop.permute.xlu0 %2238
      %2240 = vrot.lane.b32.xlu0 %v2082, 19
      %v2241 = vpop.permute.xlu0 %2240
      %2242 = vrot.lane.b32.xlu0 %v2071, 19
      %v2243 = vpop.permute.xlu0 %2242
      %2244 = vrot.lane.b32.xlu0 %v2083, 19
      %v2245 = vpop.permute.xlu0 %2244
      %2246 = vrot.lane.b32.xlu0 %v2084, 19
      %v2247 = vpop.permute.xlu0 %2246
      %2248 = vrot.lane.b32.xlu0 %v2085, 19
      %v2249 = vpop.permute.xlu0 %2248
      %2250 = vrot.lane.b32.xlu0 %v2079, 19
      %v2251 = vpop.permute.xlu0 %2250
      %2252 = vrot.lane.b32.xlu0 %v2102, 19
      %v2253 = vpop.permute.xlu0 %2252
      %2254 = vrot.lane.b32.xlu0 %v2103, 19
      %v2255 = vpop.permute.xlu0 %2254
      %2256 = vrot.lane.b32.xlu0 %v2104, 19
      %v2257 = vpop.permute.xlu0 %2256
      %2258 = vrot.lane.b32.xlu0 %v2093, 19
      %v2259 = vpop.permute.xlu0 %2258
      %2260 = vrot.lane.b32.xlu0 %v2105, 19
      %v2261 = vpop.permute.xlu0 %2260
      %2262 = vrot.lane.b32.xlu0 %v2106, 19
      %v2263 = vpop.permute.xlu0 %2262
      %2264 = vrot.lane.b32.xlu0 %v2107, 19
      %v2265 = vpop.permute.xlu0 %2264
      %2266 = vrot.lane.b32.xlu0 %v2101, 19
      %v2267 = vpop.permute.xlu0 %2266
      %2268 = vrot.lane.b32.xlu0 %v2124, 19
      %v2269 = vpop.permute.xlu0 %2268
      %2270 = vrot.lane.b32.xlu0 %v2125, 19
      %v2271 = vpop.permute.xlu0 %2270
      %2272 = vrot.lane.b32.xlu0 %v2126, 19
      %v2273 = vpop.permute.xlu0 %2272
      %2274 = vrot.lane.b32.xlu0 %v2115, 19
      %v2275 = vpop.permute.xlu0 %2274
      %2276 = vrot.lane.b32.xlu0 %v2127, 19
      %v2277 = vpop.permute.xlu0 %2276
      %2278 = vrot.lane.b32.xlu0 %v2128, 19
      %v2279 = vpop.permute.xlu0 %2278
      %2280 = vrot.lane.b32.xlu0 %v2129, 19
      %v2281 = vpop.permute.xlu0 %2280
      %2282 = vrot.lane.b32.xlu0 %v2123, 19
      %v2283 = vpop.permute.xlu0 %2282
      %2284 = vrot.lane.b32.xlu0 %v2131, 19
      %v2285 = vpop.permute.xlu0 %2284
      %2286 = vrot.lane.b32.xlu0 %v2142, 19
      %v2287 = vpop.permute.xlu0 %2286
      %2288 = vrot.lane.b32.xlu0 %v2143, 19
      %v2289 = vpop.permute.xlu0 %2288
      %2290 = vrot.lane.b32.xlu0 %v2135, 19
      %v2291 = vpop.permute.xlu0 %2290
      %2292 = vrot.lane.b32.xlu0 %v2137, 19
      %v2293 = vpop.permute.xlu0 %2292
      %2294 = vrot.lane.b32.xlu0 %v2144, 19
      %v2295 = vpop.permute.xlu0 %2294
      %2296 = vrot.lane.b32.xlu0 %v2145, 19
      %v2297 = vpop.permute.xlu0 %2296
      %2298 = vrot.lane.b32.xlu0 %v2141, 19
      %v2299 = vpop.permute.xlu0 %2298
      %2300 = vrot.lane.b32.xlu0 %v2147, 19
      %v2301 = vpop.permute.xlu0 %2300
      %2302 = vrot.lane.b32.xlu0 %v2158, 19
      %v2303 = vpop.permute.xlu0 %2302
      %2304 = vrot.lane.b32.xlu0 %v2159, 19
      %v2305 = vpop.permute.xlu0 %2304
      %2306 = vrot.lane.b32.xlu0 %v2151, 19
      %v2307 = vpop.permute.xlu0 %2306
      %2308 = vrot.lane.b32.xlu0 %v2153, 19
      %v2309 = vpop.permute.xlu0 %2308
      %2310 = vrot.lane.b32.xlu0 %v2160, 19
      %v2311 = vpop.permute.xlu0 %2310
      %2312 = vrot.lane.b32.xlu0 %v2161, 19
      %v2313 = vpop.permute.xlu0 %2312
      %2314 = vrot.lane.b32.xlu0 %v2157, 19
      %v2315 = vpop.permute.xlu0 %2314
      %2316 = vrot.lane.b32.xlu0 %v2163, 19
      %v2317 = vpop.permute.xlu0 %2316
      %2318 = vrot.lane.b32.xlu0 %v2174, 19
      %v2319 = vpop.permute.xlu0 %2318
      %2320 = vrot.lane.b32.xlu0 %v2175, 19
      %v2321 = vpop.permute.xlu0 %2320
      %2322 = vrot.lane.b32.xlu0 %v2167, 19
      %v2323 = vpop.permute.xlu0 %2322
      %2324 = vrot.lane.b32.xlu0 %v2169, 19
      %v2325 = vpop.permute.xlu0 %2324
      %2326 = vrot.lane.b32.xlu0 %v2176, 19
      %v2327 = vpop.permute.xlu0 %2326
      %2328 = vrot.lane.b32.xlu0 %v2177, 19
      %v2329 = vpop.permute.xlu0 %2328
      %2330 = vrot.lane.b32.xlu0 %v2173, 19
      %v2331 = vpop.permute.xlu0 %2330
      %2332 = vrot.lane.b32.xlu0 %v2179, 19
      %v2333 = vpop.permute.xlu0 %2332
      %2334 = vrot.lane.b32.xlu0 %v2190, 19
      %v2335 = vpop.permute.xlu0 %2334
      %2336 = vrot.lane.b32.xlu0 %v2191, 19
      %v2337 = vpop.permute.xlu0 %2336
      %2338 = vrot.lane.b32.xlu0 %v2183, 19
      %v2339 = vpop.permute.xlu0 %2338
      %2340 = vrot.lane.b32.xlu0 %v2185, 19
      %v2341 = vpop.permute.xlu0 %2340
      %2342 = vrot.lane.b32.xlu0 %v2192, 19
      %v2343 = vpop.permute.xlu0 %2342
      %2344 = vrot.lane.b32.xlu0 %v2193, 19
      %v2345 = vpop.permute.xlu0 %2344
      %2346 = vrot.lane.b32.xlu0 %v2189, 19
      %v2347 = vpop.permute.xlu0 %2346
      %2348 = vrot.lane.b32.xlu0 %v2195, 19
      %v2349 = vpop.permute.xlu0 %2348
      %2350 = vrot.lane.b32.xlu0 %v2206, 19
      %v2351 = vpop.permute.xlu0 %2350
      %2352 = vrot.lane.b32.xlu0 %v2207, 19
      %v2353 = vpop.permute.xlu0 %2352
      %2354 = vrot.lane.b32.xlu0 %v2199, 19
      %v2355 = vpop.permute.xlu0 %2354
      %2356 = vrot.lane.b32.xlu0 %v2201, 19
      %v2357 = vpop.permute.xlu0 %2356
      %2358 = vrot.lane.b32.xlu0 %v2208, 19
      %v2359 = vpop.permute.xlu0 %2358
      %2360 = vrot.lane.b32.xlu0 %v2209, 19
      %v2361 = vpop.permute.xlu0 %2360
      %2362 = vrot.lane.b32.xlu0 %v2205, 19
      %v2363 = vpop.permute.xlu0 %2362
      %v2364 = vsel %vm926, %v2221, %v2223
      %v2365 = vsel %vm926, %v2223, %v2225
      %v2366 = vsel %vm926, %v2225, %v2227
      %v2367 = vsel %vm926, %v2229, %v2231
      %v2368 = vsel %vm926, %v2231, %v2233
      %v2369 = vsel %vm926, %v2233, %v2235
      %v2370 = vsel %vm926, %v2237, %v2239
      %v2371 = vsel %vm926, %v2239, %v2241
      %v2372 = vsel %vm926, %v2241, %v2243
      %v2373 = vsel %vm926, %v2245, %v2247
      %v2374 = vsel %vm926, %v2247, %v2249
      %v2375 = vsel %vm926, %v2249, %v2251
      %v2376 = vsel %vm926, %v2253, %v2255
      %v2377 = vsel %vm926, %v2255, %v2257
      %v2378 = vsel %vm926, %v2257, %v2259
      %v2379 = vsel %vm926, %v2261, %v2263
      %v2380 = vsel %vm926, %v2263, %v2265
      %v2381 = vsel %vm926, %v2265, %v2267
      %v2382 = vsel %vm926, %v2269, %v2271
      %v2383 = vsel %vm926, %v2271, %v2273
      %v2384 = vsel %vm926, %v2273, %v2275
      %v2385 = vsel %vm926, %v2277, %v2279
      %v2386 = vsel %vm926, %v2279, %v2281
      %v2387 = vsel %vm926, %v2281, %v2283
      %v2388 = vsel %vm926, %v2285, %v2287
      %v2389 = vsel %vm926, %v2287, %v2289
      %v2390 = vsel %vm926, %v2289, %v2291
      %v2391 = vsel %vm926, %v2293, %v2295
      %v2392 = vsel %vm926, %v2295, %v2297
      %v2393 = vsel %vm926, %v2297, %v2299
      %v2394 = vsel %vm926, %v2301, %v2303
      %v2395 = vsel %vm926, %v2303, %v2305
      %v2396 = vsel %vm926, %v2305, %v2307
      %v2397 = vsel %vm926, %v2309, %v2311
      %v2398 = vsel %vm926, %v2311, %v2313
      %v2399 = vsel %vm926, %v2313, %v2315
      %v2400 = vsel %vm926, %v2317, %v2319
      %v2401 = vsel %vm926, %v2319, %v2321
      %v2402 = vsel %vm926, %v2321, %v2323
      %v2403 = vsel %vm926, %v2325, %v2327
      %v2404 = vsel %vm926, %v2327, %v2329
      %v2405 = vsel %vm926, %v2329, %v2331
      %v2406 = vsel %vm926, %v2333, %v2335
      %v2407 = vsel %vm926, %v2335, %v2337
      %v2408 = vsel %vm926, %v2337, %v2339
      %v2409 = vsel %vm926, %v2341, %v2343
      %v2410 = vsel %vm926, %v2343, %v2345
      %v2411 = vsel %vm926, %v2345, %v2347
      %v2412 = vsel %vm926, %v2349, %v2351
      %v2413 = vsel %vm926, %v2351, %v2353
      %v2414 = vsel %vm926, %v2353, %v2355
      %v2415 = vsel %vm926, %v2357, %v2359
      %v2416 = vsel %vm926, %v2359, %v2361
      %v2417 = vsel %vm926, %v2361, %v2363
      %v2473 = vsel %vm1035, %v2036, 0
      %v2476 = vsel %vm1035, %v2038, 0
      %2478 = vmatprep.subr.mxu0 %v2410
      %2479 = vmatpush1.msra.mxu0 %v2409
      %2480 = vmatprep.subr.mxu0 %v2407
      %2481 = vmatpush1.msra.mxu0 %v2406
      %2482 = vmatprep.subr.mxu0 %v2404
      %2483 = vmatpush1.msra.mxu0 %v2403
      %2484 = vmatprep.subr.mxu0 %v2401
      %2485 = vmatpush1.msra.mxu0 %v2400
      %2486 = vmatprep.subr.mxu0 %v2398
      %2487 = vmatpush1.msra.mxu0 %v2397
      %2488 = vmatprep.subr.mxu0 %v2395
      %2489 = vmatpush1.msra.mxu0 %v2394
      %2490 = vmatprep.subr.mxu0 %v2392
      %2491 = vmatpush1.msra.mxu0 %v2391
      %2492 = vmatprep.subr.mxu0 %v2389
      %2493 = vmatpush1.msra.mxu0 %v2388
      %2494 = vmatprep.subr.mxu0 %v2386
      %2495 = vmatpush1.msra.mxu0 %v2385
      %2496 = vmatprep.subr.mxu0 %v2383
      %2497 = vmatpush1.msra.mxu0 %v2382
      %2498 = vmatprep.subr.mxu0 %v2380
      %2499 = vmatpush1.msra.mxu0 %v2379
      %2500 = vmatprep.subr.mxu0 %v2377
      %2501 = vmatpush1.msra.mxu0 %v2376
      %2502 = vmatprep.subr.mxu0 %v2374
      %2503 = vmatpush1.msra.mxu0 %v2373
      %2504 = vmatprep.subr.mxu0 %v2371
      %2505 = vmatpush1.msra.mxu0 %v2370
      %2506 = vmatprep.subr.mxu0 %v2368
      %2507 = vmatpush1.msra.mxu0 %v2367
      %2508 = vmatprep.subr.mxu0 %v2365
      %2509 = vmatpush1.msra.mxu0 %v2364
      %2510 = vmatprep.subr.mxu0 0.0
      %2511 = vmatpush2.msra.mxu0 0.0
      %2512 = vmatprep.subr.mxu0 0.0
      %2513 = vmatpush2.msra.mxu0 0.0
      %2514 = vmatprep.subr.mxu0 0.0
      %2515 = vmatpush2.msra.mxu0 0.0
      %2516 = vmatprep.subr.mxu0 0.0
      %2517 = vmatpush2.msra.mxu0 0.0
      %2518 = vmatprep.subr.mxu0 0.0
      %2519 = vmatpush2.msra.mxu0 0.0
      %2520 = vmatprep.subr.mxu0 0.0
      %2521 = vmatpush2.msra.mxu0 0.0
      %2522 = vmatprep.subr.mxu0 0.0
      %2523 = vmatpush2.msra.mxu0 0.0
      %2524 = vmatprep.subr.mxu0 0.0
      %2525 = vmatpush2.msra.mxu0 0.0
      %2526 = vmatprep.subr.mxu0 0.0
      %2527 = vmatpush2.msra.mxu0 0.0
      %2528 = vmatprep.subr.mxu0 0.0
      %2529 = vmatpush2.msra.mxu0 0.0
      %2530 = vmatprep.subr.mxu0 0.0
      %2531 = vmatpush2.msra.mxu0 0.0
      %2532 = vmatprep.subr.mxu0 0.0
      %2533 = vmatpush2.msra.mxu0 0.0
      %2534 = vmatprep.subr.mxu0 0.0
      %2535 = vmatpush2.msra.mxu0 0.0
      %2536 = vmatprep.subr.mxu0 0.0
      %2537 = vmatpush2.msra.mxu0 0.0
      %2538 = vmatprep.subr.mxu0 %v2416
      %2539 = vmatpush2.msra.mxu0 %v2415
      %2540 = vmatprep.subr.mxu0 %v2413
      %2541 = vmatpush2.msra.mxu0 %v2412
      %2542 = vmatprep.mubr.f32.mxu0 %v2473
      %2543 = vmatmul.mubr.f32.gmra.mxu0 %v2035
      %v2544 = vpop.f32.mrf.mxu0
      %v2545 = vadd.f32 %v2213, %v2544
      %v2546 = vpop.f32.mrf.mxu0
      %v2547 = vadd.f32 %v2213, %v2546
      %2548 = vmatprep.mubr.f32.mxu0 %v2476
      %2549 = vmatmul.mubr.f32.gmra.mxu0 %v2037
      %v2550 = vpop.f32.mrf.mxu0
      %v2551 = vadd.f32 %v2218, %v2550
      %v2552 = vpop.f32.mrf.mxu0
      %v2553 = vadd.f32 %v2218, %v2552
      %2554 = vdwg.mxu0
      %2555 = vmatprep.subr.mxu0 0.0
      %2556 = vmatpush1.msra.mxu0 %v2411
      %2557 = vmatprep.subr.mxu0 0.0
      %2558 = vmatpush1.msra.mxu0 %v2408
      %2559 = vmatprep.subr.mxu0 0.0
      %2560 = vmatpush1.msra.mxu0 %v2405
      %2561 = vmatprep.subr.mxu0 0.0
      %2562 = vmatpush1.msra.mxu0 %v2402
      %2563 = vmatprep.subr.mxu0 0.0
      %2564 = vmatpush1.msra.mxu0 %v2399
      %2565 = vmatprep.subr.mxu0 0.0
      %2566 = vmatpush1.msra.mxu0 %v2396
      %2567 = vmatprep.subr.mxu0 0.0
      %2568 = vmatpush1.msra.mxu0 %v2393
      %2569 = vmatprep.subr.mxu0 0.0
      %2570 = vmatpush1.msra.mxu0 %v2390
      %2571 = vmatprep.subr.mxu0 0.0
      %2572 = vmatpush1.msra.mxu0 %v2387
      %2573 = vmatprep.subr.mxu0 0.0
      %2574 = vmatpush1.msra.mxu0 %v2384
      %2575 = vmatprep.subr.mxu0 0.0
      %2576 = vmatpush1.msra.mxu0 %v2381
      %2577 = vmatprep.subr.mxu0 0.0
      %2578 = vmatpush1.msra.mxu0 %v2378
      %2579 = vmatprep.subr.mxu0 0.0
      %2580 = vmatpush1.msra.mxu0 %v2375
      %2581 = vmatprep.subr.mxu0 0.0
      %2582 = vmatpush1.msra.mxu0 %v2372
      %2583 = vmatprep.subr.mxu0 0.0
      %2584 = vmatpush1.msra.mxu0 %v2369
      %2585 = vmatprep.subr.mxu0 0.0
      %2586 = vmatpush1.msra.mxu0 %v2366
      %2587 = vmatprep.subr.mxu0 0.0
      %2588 = vmatpush2.msra.mxu0 0.0
      %2589 = vmatprep.subr.mxu0 0.0
      %2590 = vmatpush2.msra.mxu0 0.0
      %2591 = vmatprep.subr.mxu0 0.0
      %2592 = vmatpush2.msra.mxu0 0.0
      %2593 = vmatprep.subr.mxu0 0.0
      %2594 = vmatpush2.msra.mxu0 0.0
      %2595 = vmatprep.subr.mxu0 0.0
      %2596 = vmatpush2.msra.mxu0 0.0
      %2597 = vmatprep.subr.mxu0 0.0
      %2598 = vmatpush2.msra.mxu0 0.0
      %2599 = vmatprep.subr.mxu0 0.0
      %2600 = vmatpush2.msra.mxu0 0.0
      %2601 = vmatprep.subr.mxu0 0.0
      %2602 = vmatpush2.msra.mxu0 0.0
      %2603 = vmatprep.subr.mxu0 0.0
      %2604 = vmatpush2.msra.mxu0 0.0
      %2605 = vmatprep.subr.mxu0 0.0
      %2606 = vmatpush2.msra.mxu0 0.0
      %2607 = vmatprep.subr.mxu0 0.0
      %2608 = vmatpush2.msra.mxu0 0.0
      %2609 = vmatprep.subr.mxu0 0.0
      %2610 = vmatpush2.msra.mxu0 0.0
      %2611 = vmatprep.subr.mxu0 0.0
      %2612 = vmatpush2.msra.mxu0 0.0
      %2613 = vmatprep.subr.mxu0 0.0
      %2614 = vmatpush2.msra.mxu0 0.0
      %2615 = vmatprep.subr.mxu0 0.0
      %2616 = vmatpush2.msra.mxu0 %v2417
      %2617 = vmatprep.subr.mxu0 0.0
      %2618 = vmatpush2.msra.mxu0 %v2414
      %2619 = vmatprep.mubr.f32.mxu0 %v2473
      %2620 = vmatmul.mubr.f32.gmra.mxu0 %v2035
      %v2621 = vpop.f32.mrf.mxu0
      %v2622 = vadd.f32 %v2213, %v2621
      %v2623 = vpop.f32.mrf.mxu0
      %2624 = vmatprep.mubr.f32.mxu0 %v2476
      %2625 = vmatmul.mubr.f32.gmra.mxu0 %v2037
      %v2626 = vpop.f32.mrf.mxu0
      %v2627 = vadd.f32 %v2218, %v2626
      %v2628 = vpop.f32.mrf.mxu0
      %2629 = vdwg.mxu0
      %v2630 = vmul.f32 %v2545, %v1198
      %v2631 = vmul.f32 %v2547, %v1202
      %v2632 = vmul.f32 %v2622, %v1206
      %v2633 = vmul.f32 %v2551, %v1198
      %v2634 = vmul.f32 %v2553, %v1202
      %v2635 = vmul.f32 %v2627, %v1206
      %v2636 = vmax.f32 %v2630, 0.0
      %v2637 = vmax.f32 %v2631, 0.0
      %v2638 = vmax.f32 %v2632, 0.0
      %v2639 = vmax.f32 %v2633, 0.0
      %v2640 = vmax.f32 %v2634, 0.0
      %v2641 = vmax.f32 %v2635, 0.0
      %s2642 = scalar_lea.vmem %s4, 32
      %v2643 = vld [vmem:[%s2642] sm:$0xff]
      %v2644 = vld [vmem:[%s2642 + $0x8] sm:$0xff]
      %v2645 = vld [vmem:[%s2642 + $0x10] sm:$0xff]
      %v2646 = vld [vmem:[%s2642 + $0x18] sm:$0xff]
      %s2647 = scalar_lea.vmem %s5, 16
      %v2648 = vld [vmem:[%s2647] sm:$0xff]
      %v2649 = vld [vmem:[%s2647 + $0x8] sm:$0xff]
      %2650 = vst [vmem:[#allocation2 + $0x8] sm:$0xff] %v2636
      %2651 = vst [vmem:[#allocation2 + $0x10] sm:$0xff] %v2637
      %2652 = vst.msk [vmem:[#allocation2 + $0x18] sm:$0xff] %vm419, %v2638
      %2653 = vst [vmem:[#allocation2 + $0x30] sm:$0xff] %v2639
      %2654 = vst [vmem:[#allocation2 + $0x38] sm:$0xff] %v2640
      %2655 = vst.msk [vmem:[#allocation2 + $0x40] sm:$0xff] %vm419, %v2641
      %v2656 = vld [vmem:[#allocation2] sm:$0xff]
      %v2657 = vld [vmem:[#allocation2 + $0x8] sm:$0xff]
      %v2658 = vld [vmem:[#allocation2 + $0x10] sm:$0xff]
      %v2659 = vld [vmem:[#allocation2 + $0x18] sm:$0xff]
      %v2660 = vld [vmem:[#allocation2 + $0x28] sm:$0xff]
      %v2661 = vld [vmem:[#allocation2 + $0x30] sm:$0xff]
      %v2662 = vld [vmem:[#allocation2 + $0x38] sm:$0xff]
      %v2663 = vld [vmem:[#allocation2 + $0x40] sm:$0xff]
      %2672 = vrot.lane.b32.xlu0 %v2656, 127
      %v2673 = vpop.permute.xlu0 %2672
      %2674 = vrot.lane.b32.xlu0 %v2657, 127
      %v2675 = vpop.permute.xlu0 %2674
      %2676 = vrot.lane.b32.xlu0 %v2658, 127
      %v2677 = vpop.permute.xlu0 %2676
      %2678 = vrot.lane.b32.xlu0 %v2659, 127
      %v2679 = vpop.permute.xlu0 %2678
      %2680 = vrot.lane.b32.xlu0 %v2660, 127
      %v2681 = vpop.permute.xlu0 %2680
      %2682 = vrot.lane.b32.xlu0 %v2661, 127
      %v2683 = vpop.permute.xlu0 %2682
      %2684 = vrot.lane.b32.xlu0 %v2662, 127
      %v2685 = vpop.permute.xlu0 %2684
      %2686 = vrot.lane.b32.xlu0 %v2663, 127
      %v2687 = vpop.permute.xlu0 %2686
      %v2688 = vsel %vm634, %v2673, %v2675
      %v2689 = vsel %vm634, %v2675, %v2677
      %v2690 = vsel %vm634, %v2677, %v2679
      %v2691 = vsel %vm634, %v2681, %v2683
      %v2692 = vsel %vm634, %v2683, %v2685
      %v2693 = vsel %vm634, %v2685, %v2687
      %2694 = vrot.lane.b32.xlu0 %v2656, 126
      %v2695 = vpop.permute.xlu0 %2694
      %2696 = vrot.lane.b32.xlu0 %v2657, 126
      %v2697 = vpop.permute.xlu0 %2696
      %2698 = vrot.lane.b32.xlu0 %v2658, 126
      %v2699 = vpop.permute.xlu0 %2698
      %2700 = vrot.lane.b32.xlu0 %v2659, 126
      %v2701 = vpop.permute.xlu0 %2700
      %2702 = vrot.lane.b32.xlu0 %v2660, 126
      %v2703 = vpop.permute.xlu0 %2702
      %2704 = vrot.lane.b32.xlu0 %v2661, 126
      %v2705 = vpop.permute.xlu0 %2704
      %2706 = vrot.lane.b32.xlu0 %v2662, 126
      %v2707 = vpop.permute.xlu0 %2706
      %2708 = vrot.lane.b32.xlu0 %v2663, 126
      %v2709 = vpop.permute.xlu0 %2708
      %v2710 = vsel %vm657, %v2695, %v2697
      %v2711 = vsel %vm657, %v2697, %v2699
      %v2712 = vsel %vm657, %v2699, %v2701
      %v2713 = vsel %vm657, %v2703, %v2705
      %v2714 = vsel %vm657, %v2705, %v2707
      %v2715 = vsel %vm657, %v2707, %v2709
      %2716 = vrot.lane.b32.xlu0 %v2656, 110
      %v2717 = vpop.permute.xlu0 %2716
      %2718 = vrot.lane.b32.xlu0 %v2657, 110
      %v2719 = vpop.permute.xlu0 %2718
      %2720 = vrot.lane.b32.xlu0 %v2658, 110
      %v2721 = vpop.permute.xlu0 %2720
      %2722 = vrot.lane.b32.xlu0 %v2659, 110
      %v2723 = vpop.permute.xlu0 %2722
      %2724 = vrot.lane.b32.xlu0 %v2660, 110
      %v2725 = vpop.permute.xlu0 %2724
      %2726 = vrot.lane.b32.xlu0 %v2661, 110
      %v2727 = vpop.permute.xlu0 %2726
      %2728 = vrot.lane.b32.xlu0 %v2662, 110
      %v2729 = vpop.permute.xlu0 %2728
      %2730 = vrot.lane.b32.xlu0 %v2663, 110
      %v2731 = vpop.permute.xlu0 %2730
      %v2732 = vsel %vm680, %v2717, %v2719
      %v2733 = vsel %vm680, %v2719, %v2721
      %v2734 = vsel %vm680, %v2721, %v2723
      %v2735 = vsel %vm680, %v2725, %v2727
      %v2736 = vsel %vm680, %v2727, %v2729
      %v2737 = vsel %vm680, %v2729, %v2731
      %2738 = vrot.lane.b32.xlu0 %v2657, 109
      %v2739 = vpop.permute.xlu0 %2738
      %2740 = vrot.lane.b32.xlu0 %v2658, 109
      %v2741 = vpop.permute.xlu0 %2740
      %2742 = vrot.lane.b32.xlu0 %v2659, 109
      %v2743 = vpop.permute.xlu0 %2742
      %2744 = vrot.lane.b32.xlu0 %v2661, 109
      %v2745 = vpop.permute.xlu0 %2744
      %2746 = vrot.lane.b32.xlu0 %v2662, 109
      %v2747 = vpop.permute.xlu0 %2746
      %2748 = vrot.lane.b32.xlu0 %v2663, 109
      %v2749 = vpop.permute.xlu0 %2748
      %v2750 = vsel %vm699, %v2739, %v2741
      %v2751 = vsel %vm699, %v2741, %v2743
      %v2752 = vsel %vm699, %v2745, %v2747
      %v2753 = vsel %vm699, %v2747, %v2749
      %2754 = vrot.lane.b32.xlu0 %v2657, 108
      %v2755 = vpop.permute.xlu0 %2754
      %2756 = vrot.lane.b32.xlu0 %v2658, 108
      %v2757 = vpop.permute.xlu0 %2756
      %2758 = vrot.lane.b32.xlu0 %v2659, 108
      %v2759 = vpop.permute.xlu0 %2758
      %2760 = vrot.lane.b32.xlu0 %v2661, 108
      %v2761 = vpop.permute.xlu0 %2760
      %2762 = vrot.lane.b32.xlu0 %v2662, 108
      %v2763 = vpop.permute.xlu0 %2762
      %2764 = vrot.lane.b32.xlu0 %v2663, 108
      %v2765 = vpop.permute.xlu0 %2764
      %v2766 = vsel %vm716, %v2755, %v2757
      %v2767 = vsel %vm716, %v2757, %v2759
      %v2768 = vsel %vm716, %v2761, %v2763
      %v2769 = vsel %vm716, %v2763, %v2765
      %2770 = vrot.lane.b32.xlu0 %v2657, 92
      %v2771 = vpop.permute.xlu0 %2770
      %2772 = vrot.lane.b32.xlu0 %v2658, 92
      %v2773 = vpop.permute.xlu0 %2772
      %2774 = vrot.lane.b32.xlu0 %v2659, 92
      %v2775 = vpop.permute.xlu0 %2774
      %2776 = vrot.lane.b32.xlu0 %v2661, 92
      %v2777 = vpop.permute.xlu0 %2776
      %2778 = vrot.lane.b32.xlu0 %v2662, 92
      %v2779 = vpop.permute.xlu0 %2778
      %2780 = vrot.lane.b32.xlu0 %v2663, 92
      %v2781 = vpop.permute.xlu0 %2780
      %v2782 = vsel %vm733, %v2771, %v2773
      %v2783 = vsel %vm733, %v2773, %v2775
      %v2784 = vsel %vm733, %v2777, %v2779
      %v2785 = vsel %vm733, %v2779, %v2781
      %2786 = vrot.lane.b32.xlu0 %v2657, 91
      %v2787 = vpop.permute.xlu0 %2786
      %2788 = vrot.lane.b32.xlu0 %v2658, 91
      %v2789 = vpop.permute.xlu0 %2788
      %2790 = vrot.lane.b32.xlu0 %v2659, 91
      %v2791 = vpop.permute.xlu0 %2790
      %2792 = vrot.lane.b32.xlu0 %v2661, 91
      %v2793 = vpop.permute.xlu0 %2792
      %2794 = vrot.lane.b32.xlu0 %v2662, 91
      %v2795 = vpop.permute.xlu0 %2794
      %2796 = vrot.lane.b32.xlu0 %v2663, 91
      %v2797 = vpop.permute.xlu0 %2796
      %v2798 = vsel %vm750, %v2787, %v2789
      %v2799 = vsel %vm750, %v2789, %v2791
      %v2800 = vsel %vm750, %v2793, %v2795
      %v2801 = vsel %vm750, %v2795, %v2797
      %2802 = vrot.lane.b32.xlu0 %v2657, 90
      %v2803 = vpop.permute.xlu0 %2802
      %2804 = vrot.lane.b32.xlu0 %v2658, 90
      %v2805 = vpop.permute.xlu0 %2804
      %2806 = vrot.lane.b32.xlu0 %v2659, 90
      %v2807 = vpop.permute.xlu0 %2806
      %2808 = vrot.lane.b32.xlu0 %v2661, 90
      %v2809 = vpop.permute.xlu0 %2808
      %2810 = vrot.lane.b32.xlu0 %v2662, 90
      %v2811 = vpop.permute.xlu0 %2810
      %2812 = vrot.lane.b32.xlu0 %v2663, 90
      %v2813 = vpop.permute.xlu0 %2812
      %v2814 = vsel %vm767, %v2803, %v2805
      %v2815 = vsel %vm767, %v2805, %v2807
      %v2816 = vsel %vm767, %v2809, %v2811
      %v2817 = vsel %vm767, %v2811, %v2813
      %2819 = vset.pattern.permute.xlu0 0
      %2820 = vperm.xlu0 %2819, %v2648
      %v2821 = vpop.permute.xlu0 %2820
      %2824 = vset.pattern.permute.xlu0 0
      %2825 = vperm.xlu0 %2824, %v2649
      %v2826 = vpop.permute.xlu0 %2825
      %2828 = vrot.lane.b32.xlu0 %v2656, 19
      %v2829 = vpop.permute.xlu0 %2828
      %2830 = vrot.lane.b32.xlu0 %v2657, 19
      %v2831 = vpop.permute.xlu0 %2830
      %2832 = vrot.lane.b32.xlu0 %v2658, 19
      %v2833 = vpop.permute.xlu0 %2832
      %2834 = vrot.lane.b32.xlu0 %v2659, 19
      %v2835 = vpop.permute.xlu0 %2834
      %2836 = vrot.lane.b32.xlu0 %v2660, 19
      %v2837 = vpop.permute.xlu0 %2836
      %2838 = vrot.lane.b32.xlu0 %v2661, 19
      %v2839 = vpop.permute.xlu0 %2838
      %2840 = vrot.lane.b32.xlu0 %v2662, 19
      %v2841 = vpop.permute.xlu0 %2840
      %2842 = vrot.lane.b32.xlu0 %v2663, 19
      %v2843 = vpop.permute.xlu0 %2842
      %2844 = vrot.lane.b32.xlu0 %v2688, 19
      %v2845 = vpop.permute.xlu0 %2844
      %2846 = vrot.lane.b32.xlu0 %v2689, 19
      %v2847 = vpop.permute.xlu0 %2846
      %2848 = vrot.lane.b32.xlu0 %v2690, 19
      %v2849 = vpop.permute.xlu0 %2848
      %2850 = vrot.lane.b32.xlu0 %v2679, 19
      %v2851 = vpop.permute.xlu0 %2850
      %2852 = vrot.lane.b32.xlu0 %v2691, 19
      %v2853 = vpop.permute.xlu0 %2852
      %2854 = vrot.lane.b32.xlu0 %v2692, 19
      %v2855 = vpop.permute.xlu0 %2854
      %2856 = vrot.lane.b32.xlu0 %v2693, 19
      %v2857 = vpop.permute.xlu0 %2856
      %2858 = vrot.lane.b32.xlu0 %v2687, 19
      %v2859 = vpop.permute.xlu0 %2858
      %2860 = vrot.lane.b32.xlu0 %v2710, 19
      %v2861 = vpop.permute.xlu0 %2860
      %2862 = vrot.lane.b32.xlu0 %v2711, 19
      %v2863 = vpop.permute.xlu0 %2862
      %2864 = vrot.lane.b32.xlu0 %v2712, 19
      %v2865 = vpop.permute.xlu0 %2864
      %2866 = vrot.lane.b32.xlu0 %v2701, 19
      %v2867 = vpop.permute.xlu0 %2866
      %2868 = vrot.lane.b32.xlu0 %v2713, 19
      %v2869 = vpop.permute.xlu0 %2868
      %2870 = vrot.lane.b32.xlu0 %v2714, 19
      %v2871 = vpop.permute.xlu0 %2870
      %2872 = vrot.lane.b32.xlu0 %v2715, 19
      %v2873 = vpop.permute.xlu0 %2872
      %2874 = vrot.lane.b32.xlu0 %v2709, 19
      %v2875 = vpop.permute.xlu0 %2874
      %2876 = vrot.lane.b32.xlu0 %v2732, 19
      %v2877 = vpop.permute.xlu0 %2876
      %2878 = vrot.lane.b32.xlu0 %v2733, 19
      %v2879 = vpop.permute.xlu0 %2878
      %2880 = vrot.lane.b32.xlu0 %v2734, 19
      %v2881 = vpop.permute.xlu0 %2880
      %2882 = vrot.lane.b32.xlu0 %v2723, 19
      %v2883 = vpop.permute.xlu0 %2882
      %2884 = vrot.lane.b32.xlu0 %v2735, 19
      %v2885 = vpop.permute.xlu0 %2884
      %2886 = vrot.lane.b32.xlu0 %v2736, 19
      %v2887 = vpop.permute.xlu0 %2886
      %2888 = vrot.lane.b32.xlu0 %v2737, 19
      %v2889 = vpop.permute.xlu0 %2888
      %2890 = vrot.lane.b32.xlu0 %v2731, 19
      %v2891 = vpop.permute.xlu0 %2890
      %2892 = vrot.lane.b32.xlu0 %v2739, 19
      %v2893 = vpop.permute.xlu0 %2892
      %2894 = vrot.lane.b32.xlu0 %v2750, 19
      %v2895 = vpop.permute.xlu0 %2894
      %2896 = vrot.lane.b32.xlu0 %v2751, 19
      %v2897 = vpop.permute.xlu0 %2896
      %2898 = vrot.lane.b32.xlu0 %v2743, 19
      %v2899 = vpop.permute.xlu0 %2898
      %2900 = vrot.lane.b32.xlu0 %v2745, 19
      %v2901 = vpop.permute.xlu0 %2900
      %2902 = vrot.lane.b32.xlu0 %v2752, 19
      %v2903 = vpop.permute.xlu0 %2902
      %2904 = vrot.lane.b32.xlu0 %v2753, 19
      %v2905 = vpop.permute.xlu0 %2904
      %2906 = vrot.lane.b32.xlu0 %v2749, 19
      %v2907 = vpop.permute.xlu0 %2906
      %2908 = vrot.lane.b32.xlu0 %v2755, 19
      %v2909 = vpop.permute.xlu0 %2908
      %2910 = vrot.lane.b32.xlu0 %v2766, 19
      %v2911 = vpop.permute.xlu0 %2910
      %2912 = vrot.lane.b32.xlu0 %v2767, 19
      %v2913 = vpop.permute.xlu0 %2912
      %2914 = vrot.lane.b32.xlu0 %v2759, 19
      %v2915 = vpop.permute.xlu0 %2914
      %2916 = vrot.lane.b32.xlu0 %v2761, 19
      %v2917 = vpop.permute.xlu0 %2916
      %2918 = vrot.lane.b32.xlu0 %v2768, 19
      %v2919 = vpop.permute.xlu0 %2918
      %2920 = vrot.lane.b32.xlu0 %v2769, 19
      %v2921 = vpop.permute.xlu0 %2920
      %2922 = vrot.lane.b32.xlu0 %v2765, 19
      %v2923 = vpop.permute.xlu0 %2922
      %2924 = vrot.lane.b32.xlu0 %v2771, 19
      %v2925 = vpop.permute.xlu0 %2924
      %2926 = vrot.lane.b32.xlu0 %v2782, 19
      %v2927 = vpop.permute.xlu0 %2926
      %2928 = vrot.lane.b32.xlu0 %v2783, 19
      %v2929 = vpop.permute.xlu0 %2928
      %2930 = vrot.lane.b32.xlu0 %v2775, 19
      %v2931 = vpop.permute.xlu0 %2930
      %2932 = vrot.lane.b32.xlu0 %v2777, 19
      %v2933 = vpop.permute.xlu0 %2932
      %2934 = vrot.lane.b32.xlu0 %v2784, 19
      %v2935 = vpop.permute.xlu0 %2934
      %2936 = vrot.lane.b32.xlu0 %v2785, 19
      %v2937 = vpop.permute.xlu0 %2936
      %2938 = vrot.lane.b32.xlu0 %v2781, 19
      %v2939 = vpop.permute.xlu0 %2938
      %2940 = vrot.lane.b32.xlu0 %v2787, 19
      %v2941 = vpop.permute.xlu0 %2940
      %2942 = vrot.lane.b32.xlu0 %v2798, 19
      %v2943 = vpop.permute.xlu0 %2942
      %2944 = vrot.lane.b32.xlu0 %v2799, 19
      %v2945 = vpop.permute.xlu0 %2944
      %2946 = vrot.lane.b32.xlu0 %v2791, 19
      %v2947 = vpop.permute.xlu0 %2946
      %2948 = vrot.lane.b32.xlu0 %v2793, 19
      %v2949 = vpop.permute.xlu0 %2948
      %2950 = vrot.lane.b32.xlu0 %v2800, 19
      %v2951 = vpop.permute.xlu0 %2950
      %2952 = vrot.lane.b32.xlu0 %v2801, 19
      %v2953 = vpop.permute.xlu0 %2952
      %2954 = vrot.lane.b32.xlu0 %v2797, 19
      %v2955 = vpop.permute.xlu0 %2954
      %2956 = vrot.lane.b32.xlu0 %v2803, 19
      %v2957 = vpop.permute.xlu0 %2956
      %2958 = vrot.lane.b32.xlu0 %v2814, 19
      %v2959 = vpop.permute.xlu0 %2958
      %2960 = vrot.lane.b32.xlu0 %v2815, 19
      %v2961 = vpop.permute.xlu0 %2960
      %2962 = vrot.lane.b32.xlu0 %v2807, 19
      %v2963 = vpop.permute.xlu0 %2962
      %2964 = vrot.lane.b32.xlu0 %v2809, 19
      %v2965 = vpop.permute.xlu0 %2964
      %2966 = vrot.lane.b32.xlu0 %v2816, 19
      %v2967 = vpop.permute.xlu0 %2966
      %2968 = vrot.lane.b32.xlu0 %v2817, 19
      %v2969 = vpop.permute.xlu0 %2968
      %2970 = vrot.lane.b32.xlu0 %v2813, 19
      %v2971 = vpop.permute.xlu0 %2970
      %v2972 = vsel %vm926, %v2829, %v2831
      %v2973 = vsel %vm926, %v2831, %v2833
      %v2974 = vsel %vm926, %v2833, %v2835
      %v2975 = vsel %vm926, %v2837, %v2839
      %v2976 = vsel %vm926, %v2839, %v2841
      %v2977 = vsel %vm926, %v2841, %v2843
      %v2978 = vsel %vm926, %v2845, %v2847
      %v2979 = vsel %vm926, %v2847, %v2849
      %v2980 = vsel %vm926, %v2849, %v2851
      %v2981 = vsel %vm926, %v2853, %v2855
      %v2982 = vsel %vm926, %v2855, %v2857
      %v2983 = vsel %vm926, %v2857, %v2859
      %v2984 = vsel %vm926, %v2861, %v2863
      %v2985 = vsel %vm926, %v2863, %v2865
      %v2986 = vsel %vm926, %v2865, %v2867
      %v2987 = vsel %vm926, %v2869, %v2871
      %v2988 = vsel %vm926, %v2871, %v2873
      %v2989 = vsel %vm926, %v2873, %v2875
      %v2990 = vsel %vm926, %v2877, %v2879
      %v2991 = vsel %vm926, %v2879, %v2881
      %v2992 = vsel %vm926, %v2881, %v2883
      %v2993 = vsel %vm926, %v2885, %v2887
      %v2994 = vsel %vm926, %v2887, %v2889
      %v2995 = vsel %vm926, %v2889, %v2891
      %v2996 = vsel %vm926, %v2893, %v2895
      %v2997 = vsel %vm926, %v2895, %v2897
      %v2998 = vsel %vm926, %v2897, %v2899
      %v2999 = vsel %vm926, %v2901, %v2903
      %v3000 = vsel %vm926, %v2903, %v2905
      %v3001 = vsel %vm926, %v2905, %v2907
      %v3002 = vsel %vm926, %v2909, %v2911
      %v3003 = vsel %vm926, %v2911, %v2913
      %v3004 = vsel %vm926, %v2913, %v2915
      %v3005 = vsel %vm926, %v2917, %v2919
      %v3006 = vsel %vm926, %v2919, %v2921
      %v3007 = vsel %vm926, %v2921, %v2923
      %v3008 = vsel %vm926, %v2925, %v2927
      %v3009 = vsel %vm926, %v2927, %v2929
      %v3010 = vsel %vm926, %v2929, %v2931
      %v3011 = vsel %vm926, %v2933, %v2935
      %v3012 = vsel %vm926, %v2935, %v2937
      %v3013 = vsel %vm926, %v2937, %v2939
      %v3014 = vsel %vm926, %v2941, %v2943
      %v3015 = vsel %vm926, %v2943, %v2945
      %v3016 = vsel %vm926, %v2945, %v2947
      %v3017 = vsel %vm926, %v2949, %v2951
      %v3018 = vsel %vm926, %v2951, %v2953
      %v3019 = vsel %vm926, %v2953, %v2955
      %v3020 = vsel %vm926, %v2957, %v2959
      %v3021 = vsel %vm926, %v2959, %v2961
      %v3022 = vsel %vm926, %v2961, %v2963
      %v3023 = vsel %vm926, %v2965, %v2967
      %v3024 = vsel %vm926, %v2967, %v2969
      %v3025 = vsel %vm926, %v2969, %v2971
      %v3081 = vsel %vm1035, %v2644, 0
      %v3084 = vsel %vm1035, %v2646, 0
      %3086 = vmatprep.subr.mxu0 %v3018
      %3087 = vmatpush1.msra.mxu0 %v3017
      %3088 = vmatprep.subr.mxu0 %v3015
      %3089 = vmatpush1.msra.mxu0 %v3014
      %3090 = vmatprep.subr.mxu0 %v3012
      %3091 = vmatpush1.msra.mxu0 %v3011
      %3092 = vmatprep.subr.mxu0 %v3009
      %3093 = vmatpush1.msra.mxu0 %v3008
      %3094 = vmatprep.subr.mxu0 %v3006
      %3095 = vmatpush1.msra.mxu0 %v3005
      %3096 = vmatprep.subr.mxu0 %v3003
      %3097 = vmatpush1.msra.mxu0 %v3002
      %3098 = vmatprep.subr.mxu0 %v3000
      %3099 = vmatpush1.msra.mxu0 %v2999
      %3100 = vmatprep.subr.mxu0 %v2997
      %3101 = vmatpush1.msra.mxu0 %v2996
      %3102 = vmatprep.subr.mxu0 %v2994
      %3103 = vmatpush1.msra.mxu0 %v2993
      %3104 = vmatprep.subr.mxu0 %v2991
      %3105 = vmatpush1.msra.mxu0 %v2990
      %3106 = vmatprep.subr.mxu0 %v2988
      %3107 = vmatpush1.msra.mxu0 %v2987
      %3108 = vmatprep.subr.mxu0 %v2985
      %3109 = vmatpush1.msra.mxu0 %v2984
      %3110 = vmatprep.subr.mxu0 %v2982
      %3111 = vmatpush1.msra.mxu0 %v2981
      %3112 = vmatprep.subr.mxu0 %v2979
      %3113 = vmatpush1.msra.mxu0 %v2978
      %3114 = vmatprep.subr.mxu0 %v2976
      %3115 = vmatpush1.msra.mxu0 %v2975
      %3116 = vmatprep.subr.mxu0 %v2973
      %3117 = vmatpush1.msra.mxu0 %v2972
      %3118 = vmatprep.subr.mxu0 0.0
      %3119 = vmatpush2.msra.mxu0 0.0
      %3120 = vmatprep.subr.mxu0 0.0
      %3121 = vmatpush2.msra.mxu0 0.0
      %3122 = vmatprep.subr.mxu0 0.0
      %3123 = vmatpush2.msra.mxu0 0.0
      %3124 = vmatprep.subr.mxu0 0.0
      %3125 = vmatpush2.msra.mxu0 0.0
      %3126 = vmatprep.subr.mxu0 0.0
      %3127 = vmatpush2.msra.mxu0 0.0
      %3128 = vmatprep.subr.mxu0 0.0
      %3129 = vmatpush2.msra.mxu0 0.0
      %3130 = vmatprep.subr.mxu0 0.0
      %3131 = vmatpush2.msra.mxu0 0.0
      %3132 = vmatprep.subr.mxu0 0.0
      %3133 = vmatpush2.msra.mxu0 0.0
      %3134 = vmatprep.subr.mxu0 0.0
      %3135 = vmatpush2.msra.mxu0 0.0
      %3136 = vmatprep.subr.mxu0 0.0
      %3137 = vmatpush2.msra.mxu0 0.0
      %3138 = vmatprep.subr.mxu0 0.0
      %3139 = vmatpush2.msra.mxu0 0.0
      %3140 = vmatprep.subr.mxu0 0.0
      %3141 = vmatpush2.msra.mxu0 0.0
      %3142 = vmatprep.subr.mxu0 0.0
      %3143 = vmatpush2.msra.mxu0 0.0
      %3144 = vmatprep.subr.mxu0 0.0
      %3145 = vmatpush2.msra.mxu0 0.0
      %3146 = vmatprep.subr.mxu0 %v3024
      %3147 = vmatpush2.msra.mxu0 %v3023
      %3148 = vmatprep.subr.mxu0 %v3021
      %3149 = vmatpush2.msra.mxu0 %v3020
      %3150 = vmatprep.mubr.f32.mxu0 %v3081
      %3151 = vmatmul.mubr.f32.gmra.mxu0 %v2643
      %v3152 = vpop.f32.mrf.mxu0
      %v3153 = vadd.f32 %v2821, %v3152
      %v3154 = vpop.f32.mrf.mxu0
      %v3155 = vadd.f32 %v2821, %v3154
      %3156 = vmatprep.mubr.f32.mxu0 %v3084
      %3157 = vmatmul.mubr.f32.gmra.mxu0 %v2645
      %v3158 = vpop.f32.mrf.mxu0
      %v3159 = vadd.f32 %v2826, %v3158
      %v3160 = vpop.f32.mrf.mxu0
      %v3161 = vadd.f32 %v2826, %v3160
      %3162 = vdwg.mxu0
      %3163 = vmatprep.subr.mxu0 0.0
      %3164 = vmatpush1.msra.mxu0 %v3019
      %3165 = vmatprep.subr.mxu0 0.0
      %3166 = vmatpush1.msra.mxu0 %v3016
      %3167 = vmatprep.subr.mxu0 0.0
      %3168 = vmatpush1.msra.mxu0 %v3013
      %3169 = vmatprep.subr.mxu0 0.0
      %3170 = vmatpush1.msra.mxu0 %v3010
      %3171 = vmatprep.subr.mxu0 0.0
      %3172 = vmatpush1.msra.mxu0 %v3007
      %3173 = vmatprep.subr.mxu0 0.0
      %3174 = vmatpush1.msra.mxu0 %v3004
      %3175 = vmatprep.subr.mxu0 0.0
      %3176 = vmatpush1.msra.mxu0 %v3001
      %3177 = vmatprep.subr.mxu0 0.0
      %3178 = vmatpush1.msra.mxu0 %v2998
      %3179 = vmatprep.subr.mxu0 0.0
      %3180 = vmatpush1.msra.mxu0 %v2995
      %3181 = vmatprep.subr.mxu0 0.0
      %3182 = vmatpush1.msra.mxu0 %v2992
      %3183 = vmatprep.subr.mxu0 0.0
      %3184 = vmatpush1.msra.mxu0 %v2989
      %3185 = vmatprep.subr.mxu0 0.0
      %3186 = vmatpush1.msra.mxu0 %v2986
      %3187 = vmatprep.subr.mxu0 0.0
      %3188 = vmatpush1.msra.mxu0 %v2983
      %3189 = vmatprep.subr.mxu0 0.0
      %3190 = vmatpush1.msra.mxu0 %v2980
      %3191 = vmatprep.subr.mxu0 0.0
      %3192 = vmatpush1.msra.mxu0 %v2977
      %3193 = vmatprep.subr.mxu0 0.0
      %3194 = vmatpush1.msra.mxu0 %v2974
      %3195 = vmatprep.subr.mxu0 0.0
      %3196 = vmatpush2.msra.mxu0 0.0
      %3197 = vmatprep.subr.mxu0 0.0
      %3198 = vmatpush2.msra.mxu0 0.0
      %3199 = vmatprep.subr.mxu0 0.0
      %3200 = vmatpush2.msra.mxu0 0.0
      %3201 = vmatprep.subr.mxu0 0.0
      %3202 = vmatpush2.msra.mxu0 0.0
      %3203 = vmatprep.subr.mxu0 0.0
      %3204 = vmatpush2.msra.mxu0 0.0
      %3205 = vmatprep.subr.mxu0 0.0
      %3206 = vmatpush2.msra.mxu0 0.0
      %3207 = vmatprep.subr.mxu0 0.0
      %3208 = vmatpush2.msra.mxu0 0.0
      %3209 = vmatprep.subr.mxu0 0.0
      %3210 = vmatpush2.msra.mxu0 0.0
      %3211 = vmatprep.subr.mxu0 0.0
      %3212 = vmatpush2.msra.mxu0 0.0
      %3213 = vmatprep.subr.mxu0 0.0
      %3214 = vmatpush2.msra.mxu0 0.0
      %3215 = vmatprep.subr.mxu0 0.0
      %3216 = vmatpush2.msra.mxu0 0.0
      %3217 = vmatprep.subr.mxu0 0.0
      %3218 = vmatpush2.msra.mxu0 0.0
      %3219 = vmatprep.subr.mxu0 0.0
      %3220 = vmatpush2.msra.mxu0 0.0
      %3221 = vmatprep.subr.mxu0 0.0
      %3222 = vmatpush2.msra.mxu0 0.0
      %3223 = vmatprep.subr.mxu0 0.0
      %3224 = vmatpush2.msra.mxu0 %v3025
      %3225 = vmatprep.subr.mxu0 0.0
      %3226 = vmatpush2.msra.mxu0 %v3022
      %3227 = vmatprep.mubr.f32.mxu0 %v3081
      %3228 = vmatmul.mubr.f32.gmra.mxu0 %v2643
      %v3229 = vpop.f32.mrf.mxu0
      %v3230 = vadd.f32 %v2821, %v3229
      %v3231 = vpop.f32.mrf.mxu0
      %3232 = vmatprep.mubr.f32.mxu0 %v3084
      %3233 = vmatmul.mubr.f32.gmra.mxu0 %v2645
      %v3234 = vpop.f32.mrf.mxu0
      %v3235 = vadd.f32 %v2826, %v3234
      %v3236 = vpop.f32.mrf.mxu0
      %3237 = vdwg.mxu0
      %v3238 = vmul.f32 %v3153, %v1198
      %v3239 = vmul.f32 %v3155, %v1202
      %v3240 = vmul.f32 %v3230, %v1206
      %v3241 = vmul.f32 %v3159, %v1198
      %v3242 = vmul.f32 %v3161, %v1202
      %v3243 = vmul.f32 %v3235, %v1206
      %v3244 = vadd.f32 %v3238, %v3239
      %v3245 = vsel %vm419, %v3240, 0.0
      %v3246 = vadd.f32 %v3244, %v3245
      %3247 = vadd.xlane.f32.xlu0 %v3246
      %v3248 = vpop.xlane.xlu0 %3247
      %v3249 = vadd.f32 %v3241, %v3242
      %v3250 = vsel %vm419, %v3243, 0.0
      %v3251 = vadd.f32 %v3249, %v3250
      %3252 = vadd.xlane.f32.xlu0 %v3251
      %v3253 = vpop.xlane.xlu0 %3252
      %v3254 = vmul.f32 %v3248, 0.00390625
      %v3255 = vmul.f32 %v3253, 0.00390625
      %s3256 = scalar_lea.vmem %s6, 4
      %v3257 = vld [vmem:[%s3256] sm:$0xf]
      %s3258 = scalar_lea.vmem %s7, 4
      %v3259 = vld [vmem:[%s3258] sm:$0xf]
      %v3261 = vsel %vm1035, %v3257, 0
      %3263 = vmatprep.subr.mxu0 0.0
      %3264 = vmatpush1.msra.mxu0 0.0
      %3265 = vmatprep.subr.mxu0 0.0
      %3266 = vmatpush1.msra.mxu0 0.0
      %3267 = vmatprep.subr.mxu0 0.0
      %3268 = vmatpush1.msra.mxu0 0.0
      %3269 = vmatprep.subr.mxu0 0.0
      %3270 = vmatpush1.msra.mxu0 0.0
      %3271 = vmatprep.subr.mxu0 0.0
      %3272 = vmatpush1.msra.mxu0 0.0
      %3273 = vmatprep.subr.mxu0 0.0
      %3274 = vmatpush1.msra.mxu0 0.0
      %3275 = vmatprep.subr.mxu0 0.0
      %3276 = vmatpush1.msra.mxu0 0.0
      %3277 = vmatprep.subr.mxu0 0.0
      %3278 = vmatpush1.msra.mxu0 0.0
      %3279 = vmatprep.subr.mxu0 0.0
      %3280 = vmatpush1.msra.mxu0 0.0
      %3281 = vmatprep.subr.mxu0 0.0
      %3282 = vmatpush1.msra.mxu0 0.0
      %3283 = vmatprep.subr.mxu0 0.0
      %3284 = vmatpush1.msra.mxu0 0.0
      %3285 = vmatprep.subr.mxu0 0.0
      %3286 = vmatpush1.msra.mxu0 0.0
      %3287 = vmatprep.subr.mxu0 0.0
      %3288 = vmatpush1.msra.mxu0 0.0
      %3289 = vmatprep.subr.mxu0 0.0
      %3290 = vmatpush1.msra.mxu0 0.0
      %3291 = vmatprep.subr.mxu0 0.0
      %3292 = vmatpush1.msra.mxu0 %v3255
      %3293 = vmatprep.subr.mxu0 0.0
      %3294 = vmatpush1.msra.mxu0 %v3254
      %3295 = vmatprep.subr.mxu0 0.0
      %3296 = vmatpush2.msra.mxu0 0.0
      %3297 = vmatprep.subr.mxu0 0.0
      %3298 = vmatpush2.msra.mxu0 0.0
      %3299 = vmatprep.subr.mxu0 0.0
      %3300 = vmatpush2.msra.mxu0 0.0
      %3301 = vmatprep.subr.mxu0 0.0
      %3302 = vmatpush2.msra.mxu0 0.0
      %3303 = vmatprep.subr.mxu0 0.0
      %3304 = vmatpush2.msra.mxu0 0.0
      %3305 = vmatprep.subr.mxu0 0.0
      %3306 = vmatpush2.msra.mxu0 0.0
      %3307 = vmatprep.subr.mxu0 0.0
      %3308 = vmatpush2.msra.mxu0 0.0
      %3309 = vmatprep.subr.mxu0 0.0
      %3310 = vmatpush2.msra.mxu0 0.0
      %3311 = vmatprep.subr.mxu0 0.0
      %3312 = vmatpush2.msra.mxu0 0.0
      %3313 = vmatprep.subr.mxu0 0.0
      %3314 = vmatpush2.msra.mxu0 0.0
      %3315 = vmatprep.subr.mxu0 0.0
      %3316 = vmatpush2.msra.mxu0 0.0
      %3317 = vmatprep.subr.mxu0 0.0
      %3318 = vmatpush2.msra.mxu0 0.0
      %3319 = vmatprep.subr.mxu0 0.0
      %3320 = vmatpush2.msra.mxu0 0.0
      %3321 = vmatprep.subr.mxu0 0.0
      %3322 = vmatpush2.msra.mxu0 0.0
      %3323 = vmatprep.subr.mxu0 0.0
      %3324 = vmatpush2.msra.mxu0 0.0
      %3325 = vmatprep.subr.mxu0 0.0
      %3326 = vmatpush2.msra.mxu0 0.0
      %3327 = vmatprep.mubr.f32.mxu0 0.0
      %3328 = vmatmul.mubr.f32.gmra.mxu0 %v3261
      %v3329 = vpop.f32.mrf.mxu0
      %v3330 = vadd.f32 %v3259, %v3329
      %v3331 = vpop.f32.mrf.mxu0
      %3332 = vdwg.mxu0
      %v3333 = vmax.f32 %v3330, 0.0
      %s3334 = scalar_lea.vmem %s8, 16
      %v3335 = vld [vmem:[%s3334] sm:$0xff]
      %v3336 = vld [vmem:[%s3334 + $0x8] sm:$0xff]
      %s3337 = scalar_lea.vmem %s9, 16
      %v3338 = vld [vmem:[%s3337] sm:$0xff]
      %v3339 = vld [vmem:[%s3337 + $0x8] sm:$0xff]
      %v3341 = vsel %vm1914, %v3335, 0
      %v3344 = vsel %vm1914, %v3336, 0
      %v3347 = vsel %vm1921, %v3333, 0
      %3349 = vmatprep.subr.mxu0 0.0
      %3350 = vmatpush1.msra.mxu0 0.0
      %3351 = vmatprep.subr.mxu0 0.0
      %3352 = vmatpush1.msra.mxu0 0.0
      %3353 = vmatprep.subr.mxu0 0.0
      %3354 = vmatpush1.msra.mxu0 0.0
      %3355 = vmatprep.subr.mxu0 0.0
      %3356 = vmatpush1.msra.mxu0 0.0
      %3357 = vmatprep.subr.mxu0 0.0
      %3358 = vmatpush1.msra.mxu0 0.0
      %3359 = vmatprep.subr.mxu0 0.0
      %3360 = vmatpush1.msra.mxu0 0.0
      %3361 = vmatprep.subr.mxu0 0.0
      %3362 = vmatpush1.msra.mxu0 0.0
      %3363 = vmatprep.subr.mxu0 0.0
      %3364 = vmatpush1.msra.mxu0 0.0
      %3365 = vmatprep.subr.mxu0 0.0
      %3366 = vmatpush1.msra.mxu0 0.0
      %3367 = vmatprep.subr.mxu0 0.0
      %3368 = vmatpush1.msra.mxu0 0.0
      %3369 = vmatprep.subr.mxu0 0.0
      %3370 = vmatpush1.msra.mxu0 0.0
      %3371 = vmatprep.subr.mxu0 0.0
      %3372 = vmatpush1.msra.mxu0 0.0
      %3373 = vmatprep.subr.mxu0 0.0
      %3374 = vmatpush1.msra.mxu0 0.0
      %3375 = vmatprep.subr.mxu0 0.0
      %3376 = vmatpush1.msra.mxu0 0.0
      %3377 = vmatprep.subr.mxu0 0.0
      %3378 = vmatpush1.msra.mxu0 0.0
      %3379 = vmatprep.subr.mxu0 0.0
      %3380 = vmatpush1.msra.mxu0 %v3347
      %3381 = vmatprep.subr.mxu0 0.0
      %3382 = vmatpush2.msra.mxu0 0.0
      %3383 = vmatprep.subr.mxu0 0.0
      %3384 = vmatpush2.msra.mxu0 0.0
      %3385 = vmatprep.subr.mxu0 0.0
      %3386 = vmatpush2.msra.mxu0 0.0
      %3387 = vmatprep.subr.mxu0 0.0
      %3388 = vmatpush2.msra.mxu0 0.0
      %3389 = vmatprep.subr.mxu0 0.0
      %3390 = vmatpush2.msra.mxu0 0.0
      %3391 = vmatprep.subr.mxu0 0.0
      %3392 = vmatpush2.msra.mxu0 0.0
      %3393 = vmatprep.subr.mxu0 0.0
      %3394 = vmatpush2.msra.mxu0 0.0
      %3395 = vmatprep.subr.mxu0 0.0
      %3396 = vmatpush2.msra.mxu0 0.0
      %3397 = vmatprep.subr.mxu0 0.0
      %3398 = vmatpush2.msra.mxu0 0.0
      %3399 = vmatprep.subr.mxu0 0.0
      %3400 = vmatpush2.msra.mxu0 0.0
      %3401 = vmatprep.subr.mxu0 0.0
      %3402 = vmatpush2.msra.mxu0 0.0
      %3403 = vmatprep.subr.mxu0 0.0
      %3404 = vmatpush2.msra.mxu0 0.0
      %3405 = vmatprep.subr.mxu0 0.0
      %3406 = vmatpush2.msra.mxu0 0.0
      %3407 = vmatprep.subr.mxu0 0.0
      %3408 = vmatpush2.msra.mxu0 0.0
      %3409 = vmatprep.subr.mxu0 0.0
      %3410 = vmatpush2.msra.mxu0 0.0
      %3411 = vmatprep.subr.mxu0 0.0
      %3412 = vmatpush2.msra.mxu0 0.0
      %3413 = vmatprep.mubr.f32.mxu0 0.0
      %3414 = vmatmul.mubr.f32.gmra.mxu0 %v3341
      %v3415 = vpop.f32.mrf.mxu0
      %v3416 = vadd.f32 %v3338, %v3415
      %v3417 = vpop.f32.mrf.mxu0
      %3418 = vmatprep.mubr.f32.mxu0 0.0
      %3419 = vmatmul.mubr.f32.gmra.mxu0 %v3344
      %v3420 = vpop.f32.mrf.mxu0
      %v3421 = vadd.f32 %v3339, %v3420
      %v3422 = vpop.f32.mrf.mxu0
      %3423 = vdwg.mxu0
      %v3424 = vxor.u32 %v3416, 2147483648
      %v3425 = vxor.u32 %v3421, 2147483648
      %v3426 = vmul.f32 %v3424, 1.442695
      %v3427 = vpow.pop %v3426
      %v3428 = vmul.f32 %v3425, 1.442695
      %v3429 = vpow.pop %v3428
      %v3430 = vadd.f32 %v3427, 1.0
      %v3431 = vadd.f32 %v3429, 1.0
      %v3432 = vrcp.pop %v3430
      %v3433 = vmul.f32 1.0, %v3432
      %v3434 = vrcp.pop %v3431
      %v3435 = vmul.f32 1.0, %v3434
      %3437 = vset.pattern.permute.xlu0 0
      %3438 = vperm.xlu0 %3437, %v3433
      %v3439 = vpop.permute.xlu0 %3438
      %3442 = vset.pattern.permute.xlu0 0
      %3443 = vperm.xlu0 %3442, %v3435
      %v3444 = vpop.permute.xlu0 %3443
      %v3446 = vmul.f32 %v3238, %v3439
      %v3447 = vmul.f32 %v3239, %v3439
      %v3448 = vmul.f32 %v3240, %v3439
      %v3449 = vmul.f32 %v3241, %v3444
      %v3450 = vmul.f32 %v3242, %v3444
      %v3451 = vmul.f32 %v3243, %v3444
      %v3452 = vadd.f32 %v2028, %v3446
      %v3453 = vadd.f32 %v2029, %v3447
      %v3454 = vadd.f32 %v2030, %v3448
      %v3455 = vadd.f32 %v2031, %v3449
      %v3456 = vadd.f32 %v2032, %v3450
      %v3457 = vadd.f32 %v2033, %v3451
      %v3458 = vld [vmem:[%s10] sm:$0xff]
      %v3459 = vld [vmem:[%s10 + $0x8] sm:$0xff]
      %v3460 = vld [vmem:[%s10 + $0x10] sm:$0xff]
      %v3461 = vld [vmem:[%s10 + $0x18] sm:$0xff]
      %v3462 = vld [vmem:[%s11] sm:$0xff]
      %v3463 = vld [vmem:[%s11 + $0x8] sm:$0xff]
      %3464 = vst [vmem:[#allocation2 + $0x8] sm:$0xff] %v3452
      %3465 = vst [vmem:[#allocation2 + $0x10] sm:$0xff] %v3453
      %3466 = vst.msk [vmem:[#allocation2 + $0x18] sm:$0xff] %vm419, %v3454
      %3467 = vst [vmem:[#allocation2 + $0x30] sm:$0xff] %v3455
      %3468 = vst [vmem:[#allocation2 + $0x38] sm:$0xff] %v3456
      %3469 = vst.msk [vmem:[#allocation2 + $0x40] sm:$0xff] %vm419, %v3457
      %v3470 = vld [vmem:[#allocation2] sm:$0xff]
      %v3471 = vld [vmem:[#allocation2 + $0x8] sm:$0xff]
      %v3472 = vld [vmem:[#allocation2 + $0x10] sm:$0xff]
      %v3473 = vld [vmem:[#allocation2 + $0x18] sm:$0xff]
      %v3474 = vld [vmem:[#allocation2 + $0x28] sm:$0xff]
      %v3475 = vld [vmem:[#allocation2 + $0x30] sm:$0xff]
      %v3476 = vld [vmem:[#allocation2 + $0x38] sm:$0xff]
      %v3477 = vld [vmem:[#allocation2 + $0x40] sm:$0xff]
      %3486 = vrot.lane.b32.xlu0 %v3470, 127
      %v3487 = vpop.permute.xlu0 %3486
      %3488 = vrot.lane.b32.xlu0 %v3471, 127
      %v3489 = vpop.permute.xlu0 %3488
      %3490 = vrot.lane.b32.xlu0 %v3472, 127
      %v3491 = vpop.permute.xlu0 %3490
      %3492 = vrot.lane.b32.xlu0 %v3473, 127
      %v3493 = vpop.permute.xlu0 %3492
      %3494 = vrot.lane.b32.xlu0 %v3474, 127
      %v3495 = vpop.permute.xlu0 %3494
      %3496 = vrot.lane.b32.xlu0 %v3475, 127
      %v3497 = vpop.permute.xlu0 %3496
      %3498 = vrot.lane.b32.xlu0 %v3476, 127
      %v3499 = vpop.permute.xlu0 %3498
      %3500 = vrot.lane.b32.xlu0 %v3477, 127
      %v3501 = vpop.permute.xlu0 %3500
      %v3502 = vsel %vm634, %v3487, %v3489
      %v3503 = vsel %vm634, %v3489, %v3491
      %v3504 = vsel %vm634, %v3491, %v3493
      %v3505 = vsel %vm634, %v3495, %v3497
      %v3506 = vsel %vm634, %v3497, %v3499
      %v3507 = vsel %vm634, %v3499, %v3501
      %3508 = vrot.lane.b32.xlu0 %v3470, 126
      %v3509 = vpop.permute.xlu0 %3508
      %3510 = vrot.lane.b32.xlu0 %v3471, 126
      %v3511 = vpop.permute.xlu0 %3510
      %3512 = vrot.lane.b32.xlu0 %v3472, 126
      %v3513 = vpop.permute.xlu0 %3512
      %3514 = vrot.lane.b32.xlu0 %v3473, 126
      %v3515 = vpop.permute.xlu0 %3514
      %3516 = vrot.lane.b32.xlu0 %v3474, 126
      %v3517 = vpop.permute.xlu0 %3516
      %3518 = vrot.lane.b32.xlu0 %v3475, 126
      %v3519 = vpop.permute.xlu0 %3518
      %3520 = vrot.lane.b32.xlu0 %v3476, 126
      %v3521 = vpop.permute.xlu0 %3520
      %3522 = vrot.lane.b32.xlu0 %v3477, 126
      %v3523 = vpop.permute.xlu0 %3522
      %v3524 = vsel %vm657, %v3509, %v3511
      %v3525 = vsel %vm657, %v3511, %v3513
      %v3526 = vsel %vm657, %v3513, %v3515
      %v3527 = vsel %vm657, %v3517, %v3519
      %v3528 = vsel %vm657, %v3519, %v3521
      %v3529 = vsel %vm657, %v3521, %v3523
      %3530 = vrot.lane.b32.xlu0 %v3470, 110
      %v3531 = vpop.permute.xlu0 %3530
      %3532 = vrot.lane.b32.xlu0 %v3471, 110
      %v3533 = vpop.permute.xlu0 %3532
      %3534 = vrot.lane.b32.xlu0 %v3472, 110
      %v3535 = vpop.permute.xlu0 %3534
      %3536 = vrot.lane.b32.xlu0 %v3473, 110
      %v3537 = vpop.permute.xlu0 %3536
      %3538 = vrot.lane.b32.xlu0 %v3474, 110
      %v3539 = vpop.permute.xlu0 %3538
      %3540 = vrot.lane.b32.xlu0 %v3475, 110
      %v3541 = vpop.permute.xlu0 %3540
      %3542 = vrot.lane.b32.xlu0 %v3476, 110
      %v3543 = vpop.permute.xlu0 %3542
      %3544 = vrot.lane.b32.xlu0 %v3477, 110
      %v3545 = vpop.permute.xlu0 %3544
      %v3546 = vsel %vm680, %v3531, %v3533
      %v3547 = vsel %vm680, %v3533, %v3535
      %v3548 = vsel %vm680, %v3535, %v3537
      %v3549 = vsel %vm680, %v3539, %v3541
      %v3550 = vsel %vm680, %v3541, %v3543
      %v3551 = vsel %vm680, %v3543, %v3545
      %3552 = vrot.lane.b32.xlu0 %v3471, 109
      %v3553 = vpop.permute.xlu0 %3552
      %3554 = vrot.lane.b32.xlu0 %v3472, 109
      %v3555 = vpop.permute.xlu0 %3554
      %3556 = vrot.lane.b32.xlu0 %v3473, 109
      %v3557 = vpop.permute.xlu0 %3556
      %3558 = vrot.lane.b32.xlu0 %v3475, 109
      %v3559 = vpop.permute.xlu0 %3558
      %3560 = vrot.lane.b32.xlu0 %v3476, 109
      %v3561 = vpop.permute.xlu0 %3560
      %3562 = vrot.lane.b32.xlu0 %v3477, 109
      %v3563 = vpop.permute.xlu0 %3562
      %v3564 = vsel %vm699, %v3553, %v3555
      %v3565 = vsel %vm699, %v3555, %v3557
      %v3566 = vsel %vm699, %v3559, %v3561
      %v3567 = vsel %vm699, %v3561, %v3563
      %3568 = vrot.lane.b32.xlu0 %v3471, 108
      %v3569 = vpop.permute.xlu0 %3568
      %3570 = vrot.lane.b32.xlu0 %v3472, 108
      %v3571 = vpop.permute.xlu0 %3570
      %3572 = vrot.lane.b32.xlu0 %v3473, 108
      %v3573 = vpop.permute.xlu0 %3572
      %3574 = vrot.lane.b32.xlu0 %v3475, 108
      %v3575 = vpop.permute.xlu0 %3574
      %3576 = vrot.lane.b32.xlu0 %v3476, 108
      %v3577 = vpop.permute.xlu0 %3576
      %3578 = vrot.lane.b32.xlu0 %v3477, 108
      %v3579 = vpop.permute.xlu0 %3578
      %v3580 = vsel %vm716, %v3569, %v3571
      %v3581 = vsel %vm716, %v3571, %v3573
      %v3582 = vsel %vm716, %v3575, %v3577
      %v3583 = vsel %vm716, %v3577, %v3579
      %3584 = vrot.lane.b32.xlu0 %v3471, 92
      %v3585 = vpop.permute.xlu0 %3584
      %3586 = vrot.lane.b32.xlu0 %v3472, 92
      %v3587 = vpop.permute.xlu0 %3586
      %3588 = vrot.lane.b32.xlu0 %v3473, 92
      %v3589 = vpop.permute.xlu0 %3588
      %3590 = vrot.lane.b32.xlu0 %v3475, 92
      %v3591 = vpop.permute.xlu0 %3590
      %3592 = vrot.lane.b32.xlu0 %v3476, 92
      %v3593 = vpop.permute.xlu0 %3592
      %3594 = vrot.lane.b32.xlu0 %v3477, 92
      %v3595 = vpop.permute.xlu0 %3594
      %v3596 = vsel %vm733, %v3585, %v3587
      %v3597 = vsel %vm733, %v3587, %v3589
      %v3598 = vsel %vm733, %v3591, %v3593
      %v3599 = vsel %vm733, %v3593, %v3595
      %3600 = vrot.lane.b32.xlu0 %v3471, 91
      %v3601 = vpop.permute.xlu0 %3600
      %3602 = vrot.lane.b32.xlu0 %v3472, 91
      %v3603 = vpop.permute.xlu0 %3602
      %3604 = vrot.lane.b32.xlu0 %v3473, 91
      %v3605 = vpop.permute.xlu0 %3604
      %3606 = vrot.lane.b32.xlu0 %v3475, 91
      %v3607 = vpop.permute.xlu0 %3606
      %3608 = vrot.lane.b32.xlu0 %v3476, 91
      %v3609 = vpop.permute.xlu0 %3608
      %3610 = vrot.lane.b32.xlu0 %v3477, 91
      %v3611 = vpop.permute.xlu0 %3610
      %v3612 = vsel %vm750, %v3601, %v3603
      %v3613 = vsel %vm750, %v3603, %v3605
      %v3614 = vsel %vm750, %v3607, %v3609
      %v3615 = vsel %vm750, %v3609, %v3611
      %3616 = vrot.lane.b32.xlu0 %v3471, 90
      %v3617 = vpop.permute.xlu0 %3616
      %3618 = vrot.lane.b32.xlu0 %v3472, 90
      %v3619 = vpop.permute.xlu0 %3618
      %3620 = vrot.lane.b32.xlu0 %v3473, 90
      %v3621 = vpop.permute.xlu0 %3620
      %3622 = vrot.lane.b32.xlu0 %v3475, 90
      %v3623 = vpop.permute.xlu0 %3622
      %3624 = vrot.lane.b32.xlu0 %v3476, 90
      %v3625 = vpop.permute.xlu0 %3624
      %3626 = vrot.lane.b32.xlu0 %v3477, 90
      %v3627 = vpop.permute.xlu0 %3626
      %v3628 = vsel %vm767, %v3617, %v3619
      %v3629 = vsel %vm767, %v3619, %v3621
      %v3630 = vsel %vm767, %v3623, %v3625
      %v3631 = vsel %vm767, %v3625, %v3627
      %3633 = vset.pattern.permute.xlu0 0
      %3634 = vperm.xlu0 %3633, %v3462
      %v3635 = vpop.permute.xlu0 %3634
      %3638 = vset.pattern.permute.xlu0 0
      %3639 = vperm.xlu0 %3638, %v3463
      %v3640 = vpop.permute.xlu0 %3639
      %3642 = vrot.lane.b32.xlu0 %v3470, 19
      %v3643 = vpop.permute.xlu0 %3642
      %3644 = vrot.lane.b32.xlu0 %v3471, 19
      %v3645 = vpop.permute.xlu0 %3644
      %3646 = vrot.lane.b32.xlu0 %v3472, 19
      %v3647 = vpop.permute.xlu0 %3646
      %3648 = vrot.lane.b32.xlu0 %v3473, 19
      %v3649 = vpop.permute.xlu0 %3648
      %3650 = vrot.lane.b32.xlu0 %v3474, 19
      %v3651 = vpop.permute.xlu0 %3650
      %3652 = vrot.lane.b32.xlu0 %v3475, 19
      %v3653 = vpop.permute.xlu0 %3652
      %3654 = vrot.lane.b32.xlu0 %v3476, 19
      %v3655 = vpop.permute.xlu0 %3654
      %3656 = vrot.lane.b32.xlu0 %v3477, 19
      %v3657 = vpop.permute.xlu0 %3656
      %3658 = vrot.lane.b32.xlu0 %v3502, 19
      %v3659 = vpop.permute.xlu0 %3658
      %3660 = vrot.lane.b32.xlu0 %v3503, 19
      %v3661 = vpop.permute.xlu0 %3660
      %3662 = vrot.lane.b32.xlu0 %v3504, 19
      %v3663 = vpop.permute.xlu0 %3662
      %3664 = vrot.lane.b32.xlu0 %v3493, 19
      %v3665 = vpop.permute.xlu0 %3664
      %3666 = vrot.lane.b32.xlu0 %v3505, 19
      %v3667 = vpop.permute.xlu0 %3666
      %3668 = vrot.lane.b32.xlu0 %v3506, 19
      %v3669 = vpop.permute.xlu0 %3668
      %3670 = vrot.lane.b32.xlu0 %v3507, 19
      %v3671 = vpop.permute.xlu0 %3670
      %3672 = vrot.lane.b32.xlu0 %v3501, 19
      %v3673 = vpop.permute.xlu0 %3672
      %3674 = vrot.lane.b32.xlu0 %v3524, 19
      %v3675 = vpop.permute.xlu0 %3674
      %3676 = vrot.lane.b32.xlu0 %v3525, 19
      %v3677 = vpop.permute.xlu0 %3676
      %3678 = vrot.lane.b32.xlu0 %v3526, 19
      %v3679 = vpop.permute.xlu0 %3678
      %3680 = vrot.lane.b32.xlu0 %v3515, 19
      %v3681 = vpop.permute.xlu0 %3680
      %3682 = vrot.lane.b32.xlu0 %v3527, 19
      %v3683 = vpop.permute.xlu0 %3682
      %3684 = vrot.lane.b32.xlu0 %v3528, 19
      %v3685 = vpop.permute.xlu0 %3684
      %3686 = vrot.lane.b32.xlu0 %v3529, 19
      %v3687 = vpop.permute.xlu0 %3686
      %3688 = vrot.lane.b32.xlu0 %v3523, 19
      %v3689 = vpop.permute.xlu0 %3688
      %3690 = vrot.lane.b32.xlu0 %v3546, 19
      %v3691 = vpop.permute.xlu0 %3690
      %3692 = vrot.lane.b32.xlu0 %v3547, 19
      %v3693 = vpop.permute.xlu0 %3692
      %3694 = vrot.lane.b32.xlu0 %v3548, 19
      %v3695 = vpop.permute.xlu0 %3694
      %3696 = vrot.lane.b32.xlu0 %v3537, 19
      %v3697 = vpop.permute.xlu0 %3696
      %3698 = vrot.lane.b32.xlu0 %v3549, 19
      %v3699 = vpop.permute.xlu0 %3698
      %3700 = vrot.lane.b32.xlu0 %v3550, 19
      %v3701 = vpop.permute.xlu0 %3700
      %3702 = vrot.lane.b32.xlu0 %v3551, 19
      %v3703 = vpop.permute.xlu0 %3702
      %3704 = vrot.lane.b32.xlu0 %v3545, 19
      %v3705 = vpop.permute.xlu0 %3704
      %3706 = vrot.lane.b32.xlu0 %v3553, 19
      %v3707 = vpop.permute.xlu0 %3706
      %3708 = vrot.lane.b32.xlu0 %v3564, 19
      %v3709 = vpop.permute.xlu0 %3708
      %3710 = vrot.lane.b32.xlu0 %v3565, 19
      %v3711 = vpop.permute.xlu0 %3710
      %3712 = vrot.lane.b32.xlu0 %v3557, 19
      %v3713 = vpop.permute.xlu0 %3712
      %3714 = vrot.lane.b32.xlu0 %v3559, 19
      %v3715 = vpop.permute.xlu0 %3714
      %3716 = vrot.lane.b32.xlu0 %v3566, 19
      %v3717 = vpop.permute.xlu0 %3716
      %3718 = vrot.lane.b32.xlu0 %v3567, 19
      %v3719 = vpop.permute.xlu0 %3718
      %3720 = vrot.lane.b32.xlu0 %v3563, 19
      %v3721 = vpop.permute.xlu0 %3720
      %3722 = vrot.lane.b32.xlu0 %v3569, 19
      %v3723 = vpop.permute.xlu0 %3722
      %3724 = vrot.lane.b32.xlu0 %v3580, 19
      %v3725 = vpop.permute.xlu0 %3724
      %3726 = vrot.lane.b32.xlu0 %v3581, 19
      %v3727 = vpop.permute.xlu0 %3726
      %3728 = vrot.lane.b32.xlu0 %v3573, 19
      %v3729 = vpop.permute.xlu0 %3728
      %3730 = vrot.lane.b32.xlu0 %v3575, 19
      %v3731 = vpop.permute.xlu0 %3730
      %3732 = vrot.lane.b32.xlu0 %v3582, 19
      %v3733 = vpop.permute.xlu0 %3732
      %3734 = vrot.lane.b32.xlu0 %v3583, 19
      %v3735 = vpop.permute.xlu0 %3734
      %3736 = vrot.lane.b32.xlu0 %v3579, 19
      %v3737 = vpop.permute.xlu0 %3736
      %3738 = vrot.lane.b32.xlu0 %v3585, 19
      %v3739 = vpop.permute.xlu0 %3738
      %3740 = vrot.lane.b32.xlu0 %v3596, 19
      %v3741 = vpop.permute.xlu0 %3740
      %3742 = vrot.lane.b32.xlu0 %v3597, 19
      %v3743 = vpop.permute.xlu0 %3742
      %3744 = vrot.lane.b32.xlu0 %v3589, 19
      %v3745 = vpop.permute.xlu0 %3744
      %3746 = vrot.lane.b32.xlu0 %v3591, 19
      %v3747 = vpop.permute.xlu0 %3746
      %3748 = vrot.lane.b32.xlu0 %v3598, 19
      %v3749 = vpop.permute.xlu0 %3748
      %3750 = vrot.lane.b32.xlu0 %v3599, 19
      %v3751 = vpop.permute.xlu0 %3750
      %3752 = vrot.lane.b32.xlu0 %v3595, 19
      %v3753 = vpop.permute.xlu0 %3752
      %3754 = vrot.lane.b32.xlu0 %v3601, 19
      %v3755 = vpop.permute.xlu0 %3754
      %3756 = vrot.lane.b32.xlu0 %v3612, 19
      %v3757 = vpop.permute.xlu0 %3756
      %3758 = vrot.lane.b32.xlu0 %v3613, 19
      %v3759 = vpop.permute.xlu0 %3758
      %3760 = vrot.lane.b32.xlu0 %v3605, 19
      %v3761 = vpop.permute.xlu0 %3760
      %3762 = vrot.lane.b32.xlu0 %v3607, 19
      %v3763 = vpop.permute.xlu0 %3762
      %3764 = vrot.lane.b32.xlu0 %v3614, 19
      %v3765 = vpop.permute.xlu0 %3764
      %3766 = vrot.lane.b32.xlu0 %v3615, 19
      %v3767 = vpop.permute.xlu0 %3766
      %3768 = vrot.lane.b32.xlu0 %v3611, 19
      %v3769 = vpop.permute.xlu0 %3768
      %3770 = vrot.lane.b32.xlu0 %v3617, 19
      %v3771 = vpop.permute.xlu0 %3770
      %3772 = vrot.lane.b32.xlu0 %v3628, 19
      %v3773 = vpop.permute.xlu0 %3772
      %3774 = vrot.lane.b32.xlu0 %v3629, 19
      %v3775 = vpop.permute.xlu0 %3774
      %3776 = vrot.lane.b32.xlu0 %v3621, 19
      %v3777 = vpop.permute.xlu0 %3776
      %3778 = vrot.lane.b32.xlu0 %v3623, 19
      %v3779 = vpop.permute.xlu0 %3778
      %3780 = vrot.lane.b32.xlu0 %v3630, 19
      %v3781 = vpop.permute.xlu0 %3780
      %3782 = vrot.lane.b32.xlu0 %v3631, 19
      %v3783 = vpop.permute.xlu0 %3782
      %3784 = vrot.lane.b32.xlu0 %v3627, 19
      %v3785 = vpop.permute.xlu0 %3784
      %v3786 = vsel %vm926, %v3643, %v3645
      %v3787 = vsel %vm926, %v3645, %v3647
      %v3788 = vsel %vm926, %v3647, %v3649
      %v3789 = vsel %vm926, %v3651, %v3653
      %v3790 = vsel %vm926, %v3653, %v3655
      %v3791 = vsel %vm926, %v3655, %v3657
      %v3792 = vsel %vm926, %v3659, %v3661
      %v3793 = vsel %vm926, %v3661, %v3663
      %v3794 = vsel %vm926, %v3663, %v3665
      %v3795 = vsel %vm926, %v3667, %v3669
      %v3796 = vsel %vm926, %v3669, %v3671
      %v3797 = vsel %vm926, %v3671, %v3673
      %v3798 = vsel %vm926, %v3675, %v3677
      %v3799 = vsel %vm926, %v3677, %v3679
      %v3800 = vsel %vm926, %v3679, %v3681
      %v3801 = vsel %vm926, %v3683, %v3685
      %v3802 = vsel %vm926, %v3685, %v3687
      %v3803 = vsel %vm926, %v3687, %v3689
      %v3804 = vsel %vm926, %v3691, %v3693
      %v3805 = vsel %vm926, %v3693, %v3695
      %v3806 = vsel %vm926, %v3695, %v3697
      %v3807 = vsel %vm926, %v3699, %v3701
      %v3808 = vsel %vm926, %v3701, %v3703
      %v3809 = vsel %vm926, %v3703, %v3705
      %v3810 = vsel %vm926, %v3707, %v3709
      %v3811 = vsel %vm926, %v3709, %v3711
      %v3812 = vsel %vm926, %v3711, %v3713
      %v3813 = vsel %vm926, %v3715, %v3717
      %v3814 = vsel %vm926, %v3717, %v3719
      %v3815 = vsel %vm926, %v3719, %v3721
      %v3816 = vsel %vm926, %v3723, %v3725
      %v3817 = vsel %vm926, %v3725, %v3727
      %v3818 = vsel %vm926, %v3727, %v3729
      %v3819 = vsel %vm926, %v3731, %v3733
      %v3820 = vsel %vm926, %v3733, %v3735
      %v3821 = vsel %vm926, %v3735, %v3737
      %v3822 = vsel %vm926, %v3739, %v3741
      %v3823 = vsel %vm926, %v3741, %v3743
      %v3824 = vsel %vm926, %v3743, %v3745
      %v3825 = vsel %vm926, %v3747, %v3749
      %v3826 = vsel %vm926, %v3749, %v3751
      %v3827 = vsel %vm926, %v3751, %v3753
      %v3828 = vsel %vm926, %v3755, %v3757
      %v3829 = vsel %vm926, %v3757, %v3759
      %v3830 = vsel %vm926, %v3759, %v3761
      %v3831 = vsel %vm926, %v3763, %v3765
      %v3832 = vsel %vm926, %v3765, %v3767
      %v3833 = vsel %vm926, %v3767, %v3769
      %v3834 = vsel %vm926, %v3771, %v3773
      %v3835 = vsel %vm926, %v3773, %v3775
      %v3836 = vsel %vm926, %v3775, %v3777
      %v3837 = vsel %vm926, %v3779, %v3781
      %v3838 = vsel %vm926, %v3781, %v3783
      %v3839 = vsel %vm926, %v3783, %v3785
      %v3895 = vsel %vm1035, %v3459, 0
      %v3898 = vsel %vm1035, %v3461, 0
      %3900 = vmatprep.subr.mxu0 %v3832
      %3901 = vmatpush1.msra.mxu0 %v3831
      %3902 = vmatprep.subr.mxu0 %v3829
      %3903 = vmatpush1.msra.mxu0 %v3828
      %3904 = vmatprep.subr.mxu0 %v3826
      %3905 = vmatpush1.msra.mxu0 %v3825
      %3906 = vmatprep.subr.mxu0 %v3823
      %3907 = vmatpush1.msra.mxu0 %v3822
      %3908 = vmatprep.subr.mxu0 %v3820
      %3909 = vmatpush1.msra.mxu0 %v3819
      %3910 = vmatprep.subr.mxu0 %v3817
      %3911 = vmatpush1.msra.mxu0 %v3816
      %3912 = vmatprep.subr.mxu0 %v3814
      %3913 = vmatpush1.msra.mxu0 %v3813
      %3914 = vmatprep.subr.mxu0 %v3811
      %3915 = vmatpush1.msra.mxu0 %v3810
      %3916 = vmatprep.subr.mxu0 %v3808
      %3917 = vmatpush1.msra.mxu0 %v3807
      %3918 = vmatprep.subr.mxu0 %v3805
      %3919 = vmatpush1.msra.mxu0 %v3804
      %3920 = vmatprep.subr.mxu0 %v3802
      %3921 = vmatpush1.msra.mxu0 %v3801
      %3922 = vmatprep.subr.mxu0 %v3799
      %3923 = vmatpush1.msra.mxu0 %v3798
      %3924 = vmatprep.subr.mxu0 %v3796
      %3925 = vmatpush1.msra.mxu0 %v3795
      %3926 = vmatprep.subr.mxu0 %v3793
      %3927 = vmatpush1.msra.mxu0 %v3792
      %3928 = vmatprep.subr.mxu0 %v3790
      %3929 = vmatpush1.msra.mxu0 %v3789
      %3930 = vmatprep.subr.mxu0 %v3787
      %3931 = vmatpush1.msra.mxu0 %v3786
      %3932 = vmatprep.subr.mxu0 0.0
      %3933 = vmatpush2.msra.mxu0 0.0
      %3934 = vmatprep.subr.mxu0 0.0
      %3935 = vmatpush2.msra.mxu0 0.0
      %3936 = vmatprep.subr.mxu0 0.0
      %3937 = vmatpush2.msra.mxu0 0.0
      %3938 = vmatprep.subr.mxu0 0.0
      %3939 = vmatpush2.msra.mxu0 0.0
      %3940 = vmatprep.subr.mxu0 0.0
      %3941 = vmatpush2.msra.mxu0 0.0
      %3942 = vmatprep.subr.mxu0 0.0
      %3943 = vmatpush2.msra.mxu0 0.0
      %3944 = vmatprep.subr.mxu0 0.0
      %3945 = vmatpush2.msra.mxu0 0.0
      %3946 = vmatprep.subr.mxu0 0.0
      %3947 = vmatpush2.msra.mxu0 0.0
      %3948 = vmatprep.subr.mxu0 0.0
      %3949 = vmatpush2.msra.mxu0 0.0
      %3950 = vmatprep.subr.mxu0 0.0
      %3951 = vmatpush2.msra.mxu0 0.0
      %3952 = vmatprep.subr.mxu0 0.0
      %3953 = vmatpush2.msra.mxu0 0.0
      %3954 = vmatprep.subr.mxu0 0.0
      %3955 = vmatpush2.msra.mxu0 0.0
      %3956 = vmatprep.subr.mxu0 0.0
      %3957 = vmatpush2.msra.mxu0 0.0
      %3958 = vmatprep.subr.mxu0 0.0
      %3959 = vmatpush2.msra.mxu0 0.0
      %3960 = vmatprep.subr.mxu0 %v3838
      %3961 = vmatpush2.msra.mxu0 %v3837
      %3962 = vmatprep.subr.mxu0 %v3835
      %3963 = vmatpush2.msra.mxu0 %v3834
      %3964 = vmatprep.mubr.f32.mxu0 %v3895
      %3965 = vmatmul.mubr.f32.gmra.mxu0 %v3458
      %v3966 = vpop.f32.mrf.mxu0
      %v3967 = vadd.f32 %v3635, %v3966
      %v3968 = vpop.f32.mrf.mxu0
      %v3969 = vadd.f32 %v3635, %v3968
      %3970 = vmatprep.mubr.f32.mxu0 %v3898
      %3971 = vmatmul.mubr.f32.gmra.mxu0 %v3460
      %v3972 = vpop.f32.mrf.mxu0
      %v3973 = vadd.f32 %v3640, %v3972
      %v3974 = vpop.f32.mrf.mxu0
      %v3975 = vadd.f32 %v3640, %v3974
      %3976 = vdwg.mxu0
      %3977 = vmatprep.subr.mxu0 0.0
      %3978 = vmatpush1.msra.mxu0 %v3833
      %3979 = vmatprep.subr.mxu0 0.0
      %3980 = vmatpush1.msra.mxu0 %v3830
      %3981 = vmatprep.subr.mxu0 0.0
      %3982 = vmatpush1.msra.mxu0 %v3827
      %3983 = vmatprep.subr.mxu0 0.0
      %3984 = vmatpush1.msra.mxu0 %v3824
      %3985 = vmatprep.subr.mxu0 0.0
      %3986 = vmatpush1.msra.mxu0 %v3821
      %3987 = vmatprep.subr.mxu0 0.0
      %3988 = vmatpush1.msra.mxu0 %v3818
      %3989 = vmatprep.subr.mxu0 0.0
      %3990 = vmatpush1.msra.mxu0 %v3815
      %3991 = vmatprep.subr.mxu0 0.0
      %3992 = vmatpush1.msra.mxu0 %v3812
      %3993 = vmatprep.subr.mxu0 0.0
      %3994 = vmatpush1.msra.mxu0 %v3809
      %3995 = vmatprep.subr.mxu0 0.0
      %3996 = vmatpush1.msra.mxu0 %v3806
      %3997 = vmatprep.subr.mxu0 0.0
      %3998 = vmatpush1.msra.mxu0 %v3803
      %3999 = vmatprep.subr.mxu0 0.0
      %4000 = vmatpush1.msra.mxu0 %v3800
      %4001 = vmatprep.subr.mxu0 0.0
      %4002 = vmatpush1.msra.mxu0 %v3797
      %4003 = vmatprep.subr.mxu0 0.0
      %4004 = vmatpush1.msra.mxu0 %v3794
      %4005 = vmatprep.subr.mxu0 0.0
      %4006 = vmatpush1.msra.mxu0 %v3791
      %4007 = vmatprep.subr.mxu0 0.0
      %4008 = vmatpush1.msra.mxu0 %v3788
      %4009 = vmatprep.subr.mxu0 0.0
      %4010 = vmatpush2.msra.mxu0 0.0
      %4011 = vmatprep.subr.mxu0 0.0
      %4012 = vmatpush2.msra.mxu0 0.0
      %4013 = vmatprep.subr.mxu0 0.0
      %4014 = vmatpush2.msra.mxu0 0.0
      %4015 = vmatprep.subr.mxu0 0.0
      %4016 = vmatpush2.msra.mxu0 0.0
      %4017 = vmatprep.subr.mxu0 0.0
      %4018 = vmatpush2.msra.mxu0 0.0
      %4019 = vmatprep.subr.mxu0 0.0
      %4020 = vmatpush2.msra.mxu0 0.0
      %4021 = vmatprep.subr.mxu0 0.0
      %4022 = vmatpush2.msra.mxu0 0.0
      %4023 = vmatprep.subr.mxu0 0.0
      %4024 = vmatpush2.msra.mxu0 0.0
      %4025 = vmatprep.subr.mxu0 0.0
      %4026 = vmatpush2.msra.mxu0 0.0
      %4027 = vmatprep.subr.mxu0 0.0
      %4028 = vmatpush2.msra.mxu0 0.0
      %4029 = vmatprep.subr.mxu0 0.0
      %4030 = vmatpush2.msra.mxu0 0.0
      %4031 = vmatprep.subr.mxu0 0.0
      %4032 = vmatpush2.msra.mxu0 0.0
      %4033 = vmatprep.subr.mxu0 0.0
      %4034 = vmatpush2.msra.mxu0 0.0
      %4035 = vmatprep.subr.mxu0 0.0
      %4036 = vmatpush2.msra.mxu0 0.0
      %4037 = vmatprep.subr.mxu0 0.0
      %4038 = vmatpush2.msra.mxu0 %v3839
      %4039 = vmatprep.subr.mxu0 0.0
      %4040 = vmatpush2.msra.mxu0 %v3836
      %4041 = vmatprep.mubr.f32.mxu0 %v3895
      %4042 = vmatmul.mubr.f32.gmra.mxu0 %v3458
      %v4043 = vpop.f32.mrf.mxu0
      %v4044 = vadd.f32 %v3635, %v4043
      %v4045 = vpop.f32.mrf.mxu0
      %4046 = vmatprep.mubr.f32.mxu0 %v3898
      %4047 = vmatmul.mubr.f32.gmra.mxu0 %v3460
      %v4048 = vpop.f32.mrf.mxu0
      %v4049 = vadd.f32 %v3640, %v4048
      %v4050 = vpop.f32.mrf.mxu0
      %4051 = vdwg.mxu0
      %v4052 = vmul.f32 %v3967, %v1198
      %v4053 = vmul.f32 %v3969, %v1202
      %v4054 = vmul.f32 %v4044, %v1206
      %v4055 = vmul.f32 %v3973, %v1198
      %v4056 = vmul.f32 %v3975, %v1202
      %v4057 = vmul.f32 %v4049, %v1206
      %v4058 = vadd.f32 %v584, %v4052
      %v4059 = vadd.f32 %v585, %v4053
      %v4060 = vadd.f32 %v586, %v4054
      %v4061 = vadd.f32 %v587, %v4055
      %v4062 = vadd.f32 %v588, %v4056
      %v4063 = vadd.f32 %v589, %v4057
      %4066 = vrot.lane.b32.xlu0 %v4058, 109
      %v4067 = vpop.permute.xlu0 %4066
      %4068 = vrot.lane.b32.xlu0 %v4061, 109
      %v4069 = vpop.permute.xlu0 %4068
      %4072 = vst.msk [vmem:[%s413] sm:$0xff] %vm1035, %v4067
      %4073 = vst.msk [vmem:[%s413 + $0x10] sm:$0xff] %vm1035, %v4069
      %4074 = vrot.lane.b32.xlu0 %v4058, 107
      %v4075 = vpop.permute.xlu0 %4074
      %4076 = vrot.lane.b32.xlu0 %v4061, 107
      %v4077 = vpop.permute.xlu0 %4076
      %vm4080 = vcmask 261248
      %4081 = vst.msk [vmem:[%s413] sm:$0xff] %vm4080, %v4075
      %4082 = vst.msk [vmem:[%s413 + $0x10] sm:$0xff] %vm4080, %v4077
      %4083 = vrot.lane.b32.xlu0 %v4058, 105
      %v4084 = vpop.permute.xlu0 %4083
      %4085 = vrot.lane.b32.xlu0 %v4061, 105
      %v4086 = vpop.permute.xlu0 %4085
      %vm4089 = vcmask 392448
      %4090 = vst.msk [vmem:[%s413] sm:$0xff] %vm4089, %v4084
      %4091 = vst.msk [vmem:[%s413 + $0x10] sm:$0xff] %vm4089, %v4086
      %4092 = vrot.lane.b32.xlu0 %v4058, 103
      %v4093 = vpop.permute.xlu0 %4092
      %4094 = vrot.lane.b32.xlu0 %v4061, 103
      %v4095 = vpop.permute.xlu0 %4094
      %vm4098 = vcmask 523648
      %4099 = vst.msk [vmem:[%s413] sm:$0xff] %vm4098, %v4093
      %4100 = vst.msk [vmem:[%s413 + $0x10] sm:$0xff] %vm4098, %v4095
      %4101 = vrot.lane.b32.xlu0 %v4058, 101
      %v4102 = vpop.permute.xlu0 %4101
      %4103 = vrot.lane.b32.xlu0 %v4061, 101
      %v4104 = vpop.permute.xlu0 %4103
      %vm4107 = vcmask 654848
      %4108 = vst.msk [vmem:[%s413] sm:$0xff] %vm4107, %v4102
      %4109 = vst.msk [vmem:[%s413 + $0x10] sm:$0xff] %vm4107, %v4104
      %4110 = vrot.lane.b32.xlu0 %v4058, 99
      %v4111 = vpop.permute.xlu0 %4110
      %4112 = vrot.lane.b32.xlu0 %v4061, 99
      %v4113 = vpop.permute.xlu0 %4112
      %vm4116 = vcmask 786048
      %4117 = vst.msk [vmem:[%s413] sm:$0xff] %vm4116, %v4111
      %4118 = vst.msk [vmem:[%s413 + $0x10] sm:$0xff] %vm4116, %v4113
      %4121 = vrot.lane.b32.xlu0 %v4058, 97
      %v4122 = vpop.permute.xlu0 %4121
      %4123 = vrot.lane.b32.xlu0 %v4059, 97
      %v4124 = vpop.permute.xlu0 %4123
      %4125 = vrot.lane.b32.xlu0 %v4061, 97
      %v4126 = vpop.permute.xlu0 %4125
      %4127 = vrot.lane.b32.xlu0 %v4062, 97
      %v4128 = vpop.permute.xlu0 %4127
      %vm4129 = vcmask 793600
      %v4130 = vsel %vm4129, %v4122, %v4124
      %v4131 = vsel %vm4129, %v4126, %v4128
      %vm4134 = vcmask 917248
      %4135 = vst.msk [vmem:[%s413] sm:$0xff] %vm4134, %v4130
      %4136 = vst.msk [vmem:[%s413 + $0x10] sm:$0xff] %vm4134, %v4131
      %4137 = vrot.lane.b32.xlu0 %v4059, 95
      %v4138 = vpop.permute.xlu0 %4137
      %4139 = vrot.lane.b32.xlu0 %v4062, 95
      %v4140 = vpop.permute.xlu0 %4139
      %vm4143 = vcmask 1048448
      %4144 = vst.msk [vmem:[%s413] sm:$0xff] %vm4143, %v4138
      %4145 = vst.msk [vmem:[%s413 + $0x10] sm:$0xff] %vm4143, %v4140
      %4146 = vrot.lane.b32.xlu0 %v4059, 93
      %v4147 = vpop.permute.xlu0 %4146
      %4148 = vrot.lane.b32.xlu0 %v4062, 93
      %v4149 = vpop.permute.xlu0 %4148
      %4152 = vst.msk [vmem:[%s413 + $0x8] sm:$0xff] %vm1035, %v4147
      %4153 = vst.msk [vmem:[%s413 + $0x18] sm:$0xff] %vm1035, %v4149
      %4154 = vrot.lane.b32.xlu0 %v4059, 91
      %v4155 = vpop.permute.xlu0 %4154
      %4156 = vrot.lane.b32.xlu0 %v4062, 91
      %v4157 = vpop.permute.xlu0 %4156
      %4160 = vst.msk [vmem:[%s413 + $0x8] sm:$0xff] %vm4080, %v4155
      %4161 = vst.msk [vmem:[%s413 + $0x18] sm:$0xff] %vm4080, %v4157
      %4162 = vrot.lane.b32.xlu0 %v4059, 89
      %v4163 = vpop.permute.xlu0 %4162
      %4164 = vrot.lane.b32.xlu0 %v4062, 89
      %v4165 = vpop.permute.xlu0 %4164
      %4168 = vst.msk [vmem:[%s413 + $0x8] sm:$0xff] %vm4089, %v4163
      %4169 = vst.msk [vmem:[%s413 + $0x18] sm:$0xff] %vm4089, %v4165
      %4170 = vrot.lane.b32.xlu0 %v4059, 87
      %v4171 = vpop.permute.xlu0 %4170
      %4172 = vrot.lane.b32.xlu0 %v4062, 87
      %v4173 = vpop.permute.xlu0 %4172
      %4176 = vst.msk [vmem:[%s413 + $0x8] sm:$0xff] %vm4098, %v4171
      %4177 = vst.msk [vmem:[%s413 + $0x18] sm:$0xff] %vm4098, %v4173
      %4178 = vrot.lane.b32.xlu0 %v4059, 85
      %v4179 = vpop.permute.xlu0 %4178
      %4180 = vrot.lane.b32.xlu0 %v4062, 85
      %v4181 = vpop.permute.xlu0 %4180
      %4184 = vst.msk [vmem:[%s413 + $0x8] sm:$0xff] %vm4107, %v4179
      %4185 = vst.msk [vmem:[%s413 + $0x18] sm:$0xff] %vm4107, %v4181
      %4188 = vrot.lane.b32.xlu0 %v4059, 83
      %v4189 = vpop.permute.xlu0 %4188
      %4190 = vrot.lane.b32.xlu0 %v4060, 83
      %v4191 = vpop.permute.xlu0 %4190
      %4192 = vrot.lane.b32.xlu0 %v4062, 83
      %v4193 = vpop.permute.xlu0 %4192
      %4194 = vrot.lane.b32.xlu0 %v4063, 83
      %v4195 = vpop.permute.xlu0 %4194
      %vm4196 = vcmask 678912
      %v4197 = vsel %vm4196, %v4189, %v4191
      %v4198 = vsel %vm4196, %v4193, %v4195
      %4201 = vst.msk [vmem:[%s413 + $0x8] sm:$0xff] %vm4116, %v4197
      %4202 = vst.msk [vmem:[%s413 + $0x18] sm:$0xff] %vm4116, %v4198
      %4203 = vrot.lane.b32.xlu0 %v4060, 81
      %v4204 = vpop.permute.xlu0 %4203
      %4205 = vrot.lane.b32.xlu0 %v4063, 81
      %v4206 = vpop.permute.xlu0 %4205
      %4209 = vst.msk [vmem:[%s413 + $0x8] sm:$0xff] %vm4134, %v4204
      %4210 = vst.msk [vmem:[%s413 + $0x18] sm:$0xff] %vm4134, %v4206
      %4211 = vrot.lane.b32.xlu0 %v4060, 79
      %v4212 = vpop.permute.xlu0 %4211
      %4213 = vrot.lane.b32.xlu0 %v4063, 79
      %v4214 = vpop.permute.xlu0 %4213
      %4217 = vst.msk [vmem:[%s413 + $0x8] sm:$0xff] %vm4143, %v4212
      %4218 = vst.msk [vmem:[%s413 + $0x18] sm:$0xff] %vm4143, %v4214
      %p4219 = scmp.lt.s32.totalorder %s23, 1
      %s4220 = scalar_select %p4219, %s23, 1
      %s4221 = smul.addr %s4220, 4
      %s4222 = smul.addr %s4221, 8
      %s4223 = scalar_lea.vmem %s12, %s4222
      // Predicated region
      $region69: #{rg_forward.1} parent=67 // pred_check
        %p4224 = pneg %p298
      $region70: #{rg_forward.1} parent=67 // pred_check_branch
        %4226 = sbr.rel (%p4224) target = $region72
      $region71: #{rg_forward.1} parent=67 // pred_region
        _
      $region72: #{rg_forward.1} parent=67 // pred_fallthru
        _
    $region68: #{rg_forward.1} parent=5 // pred_fallthru
      _
    %p4227 = scmp.le.s32.totalorder 2, %s18
    // Predicated region
    $region73: #{rg_forward.1} parent=5 // pred_check
      %p4228 = pneg %p4227
    $region74: #{rg_forward.1} parent=5 // pred_check_branch
      %4230 = sbr.rel (%p4228) target = $region76
    $region75: #{rg_forward.1} parent=5 // pred_region
      %s4231 = ssub.s32 %s18, 2
      // Predicated region
      $region77: #{rg_forward.1} parent=75 // pred_check
        %p4232 = pneg %p304
      $region78: #{rg_forward.1} parent=75 // pred_check_branch
        %4234 = sbr.rel (%p4232) target = $region80
      $region79: #{rg_forward.1} parent=75 // pred_region
        %p4235 = scmp.lt.s32.totalorder %s24, 1
        %s4236 = scalar_select %p4235, %s24, 1
        %s4237 = smul.addr %s4236, 4
        %s4238 = smul.addr %s4237, 8
        %s4239 = scalar_lea.vmem %s12, %s4238
      $region80: #{rg_forward.1} parent=75 // pred_fallthru
        _
    $region76: #{rg_forward.1} parent=5 // pred_fallthru
      _
  $region6: #{rg_forward.1} parent=0 // loop_footer
    %s22 = sadd.s32 1, %s18
  $region7: #{rg_forward.1} parent=0 // loop_footer_branch
    %17 = sbr.rel target = $region3
  $region8: #{rg_forward.1} parent=0 // loop_exit
    _

</llo_original>
